<compile_context>
chip_gen: v7x
topology: tpu7x:2x2x1
jax: 0.10.0
libtpu: 0.0.40
codegen_flags: <defaults>
</compile_context>

<pallas_src>
import math

import jax
import jax.numpy as jnp
from jax.experimental import pallas as pl
from jax.experimental.pallas import tpu as pltpu

# Full-f32 matmuls everywhere (kernel dots already request f32 accumulation;
# this makes the pure-JAX reference match bit-closely too).
jax.config.update("jax_default_matmul_precision", "highest")

# ---------------- model config (matches the PyTorch module) -----------------
B = 2           # batch
S = 8           # sequence length (tokens)
D = 32          # hidden_d
N_HEADS = 2
D_HEAD = D // N_HEADS
MLP_RATIO = 4
D_MLP = MLP_RATIO * D          # 128
EPS = 1e-5                     # nn.LayerNorm default

# Sublane-row offsets inside the single packed parameter blob (104, 128).
_R_WQKV = 0            # rows [0, 32):  [Wq | Wk | Wv | 0] padded to 128 lanes
_R_W1 = D              # rows [32, 64): W1 (D, D_MLP) = (32, 128)
_R_W2T = 2 * D         # rows [64, 96): W2^T (D, D_MLP) = (32, 128)
_R_SP = 3 * D          # rows [96, 104): packed small vectors
_N_ROWS = 3 * D + 8    # 104

# Row indices inside the packed small-vector block.
_ROW_G1, _ROW_B1, _ROW_G2, _ROW_B2, _ROW_BQKV, _ROW_BM2, _ROW_BM1 = range(7)


def _layernorm(v, gamma, beta):
    # PyTorch LayerNorm: biased variance, eps inside sqrt.
    mu = jnp.mean(v, axis=-1, keepdims=True)
    var = jnp.mean((v - mu) ** 2, axis=-1, keepdims=True)
    return (v - mu) * jax.lax.rsqrt(var + EPS) * gamma + beta


def _gelu_exact(v):
    # nn.GELU() default: exact erf formulation.
    return 0.5 * v * (1.0 + jax.lax.erf(v * (1.0 / math.sqrt(2.0))))


def vit_block_kernel(x_ref, blob_ref, o_ref):
    x = x_ref[...]                                   # (B*S, D) = (16, 32)

    # Static sublane-row slices of the single packed parameter blob.
    wqkv = blob_ref[_R_WQKV:_R_WQKV + D, :]          # (32, 128): [Wq|Wk|Wv|0]
    w1 = blob_ref[_R_W1:_R_W1 + D, :]                # (32, 128)
    w2t = blob_ref[_R_W2T:_R_W2T + D, :]             # (32, 128) = W2^T
    sp = blob_ref[_R_SP:_R_SP + 8, :]                # (8, 128) packed vectors

    g1 = sp[_ROW_G1:_ROW_G1 + 1, :D]
    b1 = sp[_ROW_B1:_ROW_B1 + 1, :D]
    g2 = sp[_ROW_G2:_ROW_G2 + 1, :D]
    b2 = sp[_ROW_B2:_ROW_B2 + 1, :D]
    bqkv = sp[_ROW_BQKV:_ROW_BQKV + 1, :]            # (1, 128), zeros past 3D
    bm2 = sp[_ROW_BM2:_ROW_BM2 + 1, :D]
    bm1 = sp[_ROW_BM1:_ROW_BM1 + 1, :]               # (1, 128)

    # --- out1 = x + MSA(LN1(x)) ----------------------------------------------
    xn = _layernorm(x, g1, b1)                                       # (16, 32)
    qkv = jnp.dot(xn, wqkv, preferred_element_type=jnp.float32) + bqkv  # (16,128)
    # Leading-dim-only reshapes (last dim unchanged): safe.
    q = qkv[:, 0:D].reshape(B, S, D)
    k = qkv[:, D:2 * D].reshape(B, S, D)
    v = qkv[:, 2 * D:3 * D].reshape(B, S, D)

    def split_heads(m):
        # (B, S, D) -> (N_HEADS*B, S, D_HEAD), head-major on the leading axis.
        return jnp.concatenate(
            [m[:, :, h * D_HEAD:(h + 1) * D_HEAD] for h in range(N_HEADS)],
            axis=0)

    qh, kh, vh = split_heads(q), split_heads(k), split_heads(v)      # (4, 8, 16)

    inv_sqrt_dh = 1.0 / math.sqrt(D_HEAD)
    s = jnp.einsum('nqd,nkd->nqk', qh, kh,
                   preferred_element_type=jnp.float32) * inv_sqrt_dh  # (4, 8, 8)
    s = s - jnp.max(s, axis=-1, keepdims=True)
    p = jnp.exp(s)
    p = p / jnp.sum(p, axis=-1, keepdims=True)        # exact softmax denominator
    oh = jnp.einsum('nqk,nkd->nqd', p, vh,
                    preferred_element_type=jnp.float32)              # (4, 8, 16)

    # Recombine heads: single lane concat (no VMEM scratch round-trip).
    msa = jnp.concatenate(
        [oh[h * B:(h + 1) * B] for h in range(N_HEADS)], axis=-1)    # (B, S, D)
    out1 = x + msa.reshape(B * S, D)                                 # (16, 32)

    # --- out = out1 + MLP(LN2(out1)) ------------------------------------------
    xn2 = _layernorm(out1, g2, b2)
    hmid = jnp.dot(xn2, w1, preferred_element_type=jnp.float32) + bm1  # (16,128)
    hmid = _gelu_exact(hmid)
    # Second MLP matmul against transposed weight: contract last dims.
    y = jax.lax.dot_general(hmid, w2t,
                            dimension_numbers=(((1,), (1,)), ((), ())),
                            preferred_element_type=jnp.float32) + bm2  # (16, 32)

    o_ref[...] = out1 + y


def vit_block(x, blob):
    """x: (B, S, D). blob: (104, 128) packed parameters."""
    x2 = x.reshape(B * S, D)   # fold batch*seq outside the kernel (row-major, free)

    def vmem_spec():
        return pl.BlockSpec(memory_space=pltpu.MemorySpace.VMEM)

    out2 = pl.pallas_call(
        vit_block_kernel,
        out_shape=jax.ShapeDtypeStruct((B * S, D), jnp.float32),
        in_specs=[vmem_spec(), vmem_spec()],
        out_specs=vmem_spec(),
        cost_estimate=pl.CostEstimate(flops=400_000, transcendentals=2_500,
                                      bytes_accessed=60_000),
    )(x2, blob)
    return out2.reshape(B, S, D)


def init_params(key):
    """Deterministic synthetic parameters matching the PyTorch module's shapes."""
    ks = jax.random.split(key, 16)
    it = iter(range(16))

    def lin(k, fan_in, fan_out):
        # PyTorch Linear stores W as (out, in); we build (in, out) for y = x @ W + b.
        bound = 1.0 / math.sqrt(fan_in)
        w = jax.random.uniform(k, (fan_in, fan_out), jnp.float32, -bound, bound)
        b = jax.random.uniform(jax.random.fold_in(k, 1), (1, fan_out),
                               jnp.float32, -bound, bound)
        return w, b

    g1 = jnp.ones((1, D), jnp.float32) + 0.01 * jax.random.normal(ks[next(it)], (1, D))
    b1 = 0.01 * jax.random.normal(ks[next(it)], (1, D))

    # Per-head q/k/v Linear(d_head, d_head) -> block-diagonal (D, D) matrices.
    def block_diag_qkv():
        w_full = jnp.zeros((D, D), jnp.float32)
        b_full = jnp.zeros((1, D), jnp.float32)
        for h in range(N_HEADS):
            w_h, b_h = lin(ks[next(it)], D_HEAD, D_HEAD)
            sl = slice(h * D_HEAD, (h + 1) * D_HEAD)
            w_full = w_full.at[sl, sl].set(w_h)
            b_full = b_full.at[:, sl].set(b_h)
        return w_full, b_full

    wq, bq = block_diag_qkv()
    wk, bk = block_diag_qkv()
    wv, bv = block_diag_qkv()

    g2 = jnp.ones((1, D), jnp.float32) + 0.01 * jax.random.normal(ks[next(it)], (1, D))
    b2 = 0.01 * jax.random.normal(ks[next(it)], (1, D))

    w1, bm1 = lin(ks[next(it)], D, D_MLP)
    w2, bm2 = lin(ks[next(it)], D_MLP, D)

    return (g1, b1, wq, bq, wk, bk, wv, bv, g2, b2, w1, bm1, w2, bm2)


def pack_params(params):
    """Pack EVERYTHING into one lane-dense (104, 128) f32 blob (single DMA)."""
    (g1, b1, wq, bq, wk, bk, wv, bv, g2, b2, w1, bm1, w2, bm2) = params
    wqkv = jnp.concatenate([wq, wk, wv], axis=1)                    # (32, 96)
    wqkv = jnp.pad(wqkv, ((0, 0), (0, 128 - 3 * D)))                # (32, 128)
    bqkv = jnp.concatenate([bq, bk, bv], axis=1)                    # (1, 96)
    w2t = w2.T                                                      # (32, 128)

    def row(vec):
        return jnp.pad(vec, ((0, 0), (0, 128 - vec.shape[1])))

    sp = jnp.concatenate(
        [row(g1), row(b1), row(g2), row(b2), row(bqkv), row(bm2), row(bm1),
         jnp.zeros((1, 128), jnp.float32)],
        axis=0)                                                     # (8, 128)

    blob = jnp.concatenate([wqkv, w1, w2t, sp], axis=0)             # (104, 128)
    assert blob.shape == (_N_ROWS, 128)
    return blob


def vit_block_ref(x, params):
    """Pure-JAX reference mirroring the PyTorch forward, for correctness check."""
    (g1, b1, wq, bq, wk, bk, wv, bv, g2, b2, w1, bm1, w2, bm2) = params
    xn = _layernorm(x, g1[0], b1[0])
    q = xn @ wq + bq[0]
    k = xn @ wk + bk[0]
    v = xn @ wv + bv[0]
    outs = []
    for h in range(N_HEADS):
        sl = slice(h * D_HEAD, (h + 1) * D_HEAD)
        qh, kh, vh = q[..., sl], k[..., sl], v[..., sl]
        s = jnp.einsum("bqd,bkd->bqk", qh, kh) / math.sqrt(D_HEAD)
        p = jax.nn.softmax(s, axis=-1)
        outs.append(jnp.einsum("bqk,bkd->bqd", p, vh))
    out1 = x + jnp.concatenate(outs, axis=-1)
    xn2 = _layernorm(out1, g2[0], b2[0])
    y = _gelu_exact(xn2 @ w1 + bm1[0]) @ w2 + bm2[0]
    return out1 + y


if __name__ == "__main__":
    key = jax.random.PRNGKey(0)
    kx, kp = jax.random.split(key)
    x = jax.random.normal(kx, (B, S, D), jnp.float32)
    params = init_params(kp)
    blob = pack_params(params)

    out = vit_block(x, blob)
    out = jax.block_until_ready(out)

    ref = vit_block_ref(x, params)
    assert out.shape == (B, S, D)
    # Exact softmax reciprocal + full-f32 matmuls -> tight tolerance again.
    assert jnp.allclose(out, ref, atol=5e-4, rtol=5e-4), \
        f"max abs err {jnp.max(jnp.abs(out - ref))}"

    print("KERNEL_OK")
</pallas_src>

<mosaic_0001>
module attributes {stable_mosaic.version = 11 : i64} {
  func.func @vit_block_kernel(%arg0: memref<16x32xf32, #tpu.memory_space<vmem>>, %arg1: memref<104x128xf32, #tpu.memory_space<vmem>>, %arg2: memref<16x32xf32, #tpu.memory_space<vmem>>) attributes {dimension_semantics = [], scalar_prefetch = 0 : i64, scratch_operands = 0 : i64, tpu.core_type = #tpu.core_type<tc>} {
    %c0 = arith.constant 0 : index
    %c0_0 = arith.constant 0 : index
    %0 = vector.load %arg0[%c0, %c0_0] : memref<16x32xf32, #tpu.memory_space<vmem>>, vector<16x32xf32>
    %c0_1 = arith.constant 0 : index
    %c0_2 = arith.constant 0 : index
    %1 = vector.load %arg1[%c0_1, %c0_2] : memref<104x128xf32, #tpu.memory_space<vmem>>, vector<32x128xf32>
    %c32 = arith.constant 32 : index
    %c0_3 = arith.constant 0 : index
    %2 = vector.load %arg1[%c32, %c0_3] : memref<104x128xf32, #tpu.memory_space<vmem>>, vector<32x128xf32>
    %c64 = arith.constant 64 : index
    %c0_4 = arith.constant 0 : index
    %3 = vector.load %arg1[%c64, %c0_4] : memref<104x128xf32, #tpu.memory_space<vmem>>, vector<32x128xf32>
    %c96 = arith.constant 96 : index
    %c0_5 = arith.constant 0 : index
    %4 = vector.load %arg1[%c96, %c0_5] : memref<104x128xf32, #tpu.memory_space<vmem>>, vector<8x128xf32>
    %5 = vector.extract_strided_slice %4 {offsets = [0, 0], sizes = [1, 32], strides = [1, 1]} : vector<8x128xf32> to vector<1x32xf32>
    %6 = vector.extract_strided_slice %4 {offsets = [1, 0], sizes = [1, 32], strides = [1, 1]} : vector<8x128xf32> to vector<1x32xf32>
    %7 = vector.extract_strided_slice %4 {offsets = [2, 0], sizes = [1, 32], strides = [1, 1]} : vector<8x128xf32> to vector<1x32xf32>
    %8 = vector.extract_strided_slice %4 {offsets = [3, 0], sizes = [1, 32], strides = [1, 1]} : vector<8x128xf32> to vector<1x32xf32>
    %9 = vector.extract_strided_slice %4 {offsets = [4, 0], sizes = [1, 128], strides = [1, 1]} : vector<8x128xf32> to vector<1x128xf32>
    %10 = vector.extract_strided_slice %4 {offsets = [5, 0], sizes = [1, 32], strides = [1, 1]} : vector<8x128xf32> to vector<1x32xf32>
    %11 = vector.extract_strided_slice %4 {offsets = [6, 0], sizes = [1, 128], strides = [1, 1]} : vector<8x128xf32> to vector<1x128xf32>
    %cst = arith.constant dense<0.000000e+00> : vector<16xf32>
    %12 = vector.multi_reduction <add>, %0, %cst [1] : vector<16x32xf32> to vector<16xf32>
    %13 = vector.shape_cast %12 : vector<16xf32> to vector<16x1xf32>
    %cst_6 = arith.constant 3.200000e+01 : f32
    %14 = vector.broadcast %cst_6 : f32 to vector<16x1xf32>
    %15 = arith.divf %13, %14 : vector<16x1xf32>
    %16 = vector.broadcast %15 : vector<16x1xf32> to vector<16x32xf32>
    %17 = arith.subf %0, %16 : vector<16x32xf32>
    %18 = arith.mulf %17, %17 : vector<16x32xf32>
    %cst_7 = arith.constant dense<0.000000e+00> : vector<16xf32>
    %19 = vector.multi_reduction <add>, %18, %cst_7 [1] : vector<16x32xf32> to vector<16xf32>
    %20 = vector.shape_cast %19 : vector<16xf32> to vector<16x1xf32>
    %cst_8 = arith.constant 3.200000e+01 : f32
    %21 = vector.broadcast %cst_8 : f32 to vector<16x1xf32>
    %22 = arith.divf %20, %21 : vector<16x1xf32>
    %23 = vector.broadcast %15 : vector<16x1xf32> to vector<16x32xf32>
    %24 = arith.subf %0, %23 : vector<16x32xf32>
    %cst_9 = arith.constant 9.99999974E-6 : f32
    %25 = vector.broadcast %cst_9 : f32 to vector<16x1xf32>
    %26 = arith.addf %22, %25 : vector<16x1xf32>
    %27 = math.rsqrt %26 : vector<16x1xf32>
    %28 = vector.broadcast %27 : vector<16x1xf32> to vector<16x32xf32>
    %29 = arith.mulf %24, %28 : vector<16x32xf32>
    %30 = vector.broadcast %5 : vector<1x32xf32> to vector<16x32xf32>
    %31 = arith.mulf %29, %30 : vector<16x32xf32>
    %32 = vector.broadcast %6 : vector<1x32xf32> to vector<16x32xf32>
    %33 = arith.addf %31, %32 : vector<16x32xf32>
    %cst_10 = arith.constant dense<0.000000e+00> : vector<16x128xf32>
    %34 = tpu.matmul %33, %1, %cst_10 {dimension_numbers = #tpu.dot_dimension_numbers<[1], [0], [0], [1], [0, 0, 1, 1], [], []>, precision = #tpu.contract_precision<fp32>} : vector<16x32xf32>, vector<32x128xf32>, vector<16x128xf32> -> vector<16x128xf32>
    %35 = vector.broadcast %9 : vector<1x128xf32> to vector<16x128xf32>
    %36 = arith.addf %34, %35 : vector<16x128xf32>
    %37 = vector.extract_strided_slice %36 {offsets = [0, 0], sizes = [16, 32], strides = [1, 1]} : vector<16x128xf32> to vector<16x32xf32>
    %38 = vector.shape_cast %37 : vector<16x32xf32> to vector<2x8x32xf32>
    %39 = vector.extract_strided_slice %36 {offsets = [0, 32], sizes = [16, 32], strides = [1, 1]} : vector<16x128xf32> to vector<16x32xf32>
    %40 = vector.shape_cast %39 : vector<16x32xf32> to vector<2x8x32xf32>
    %41 = vector.extract_strided_slice %36 {offsets = [0, 64], sizes = [16, 32], strides = [1, 1]} : vector<16x128xf32> to vector<16x32xf32>
    %42 = vector.shape_cast %41 : vector<16x32xf32> to vector<2x8x32xf32>
    %43 = vector.extract_strided_slice %38 {offsets = [0, 0, 0], sizes = [2, 8, 16], strides = [1, 1, 1]} : vector<2x8x32xf32> to vector<2x8x16xf32>
    %44 = vector.extract_strided_slice %38 {offsets = [0, 0, 16], sizes = [2, 8, 16], strides = [1, 1, 1]} : vector<2x8x32xf32> to vector<2x8x16xf32>
    %45 = tpu.concatenate %43, %44 in 0 : vector<2x8x16xf32>, vector<2x8x16xf32> -> vector<4x8x16xf32>
    %46 = vector.extract_strided_slice %40 {offsets = [0, 0, 0], sizes = [2, 8, 16], strides = [1, 1, 1]} : vector<2x8x32xf32> to vector<2x8x16xf32>
    %47 = vector.extract_strided_slice %40 {offsets = [0, 0, 16], sizes = [2, 8, 16], strides = [1, 1, 1]} : vector<2x8x32xf32> to vector<2x8x16xf32>
    %48 = tpu.concatenate %46, %47 in 0 : vector<2x8x16xf32>, vector<2x8x16xf32> -> vector<4x8x16xf32>
    %49 = vector.extract_strided_slice %42 {offsets = [0, 0, 0], sizes = [2, 8, 16], strides = [1, 1, 1]} : vector<2x8x32xf32> to vector<2x8x16xf32>
    %50 = vector.extract_strided_slice %42 {offsets = [0, 0, 16], sizes = [2, 8, 16], strides = [1, 1, 1]} : vector<2x8x32xf32> to vector<2x8x16xf32>
    %51 = tpu.concatenate %49, %50 in 0 : vector<2x8x16xf32>, vector<2x8x16xf32> -> vector<4x8x16xf32>
    "tpu.trace_start"() <{level = 10 : i32, message = "nqd,nkd->nqk"}> : () -> ()
    %cst_11 = arith.constant dense<0.000000e+00> : vector<4x8x8xf32>
    %52 = tpu.matmul %45, %48, %cst_11 {dimension_numbers = #tpu.dot_dimension_numbers<[2], [2], [1], [1], [0, 0, 0, 1, 1, 1], [0], [0]>, precision = #tpu.contract_precision<fp32>} : vector<4x8x16xf32>, vector<4x8x16xf32>, vector<4x8x8xf32> -> vector<4x8x8xf32>
    "tpu.trace_stop"() : () -> ()
    %cst_12 = arith.constant 2.500000e-01 : f32
    %53 = vector.broadcast %cst_12 : f32 to vector<4x8x8xf32>
    %54 = arith.mulf %52, %53 : vector<4x8x8xf32>
    %cst_13 = arith.constant dense<0xFF800000> : vector<4x8xf32>
    %55 = vector.multi_reduction <maximumf>, %54, %cst_13 [2] : vector<4x8x8xf32> to vector<4x8xf32>
    %56 = vector.shape_cast %55 : vector<4x8xf32> to vector<4x8x1xf32>
    %57 = vector.broadcast %56 : vector<4x8x1xf32> to vector<4x8x8xf32>
    %58 = arith.subf %54, %57 : vector<4x8x8xf32>
    %59 = math.exp %58 : vector<4x8x8xf32>
    %cst_14 = arith.constant dense<0.000000e+00> : vector<4x8xf32>
    %60 = vector.multi_reduction <add>, %59, %cst_14 [2] : vector<4x8x8xf32> to vector<4x8xf32>
    %61 = vector.shape_cast %60 : vector<4x8xf32> to vector<4x8x1xf32>
    %62 = vector.broadcast %61 : vector<4x8x1xf32> to vector<4x8x8xf32>
    %63 = arith.divf %59, %62 : vector<4x8x8xf32>
    "tpu.trace_start"() <{level = 10 : i32, message = "nqk,nkd->nqd"}> : () -> ()
    %cst_15 = arith.constant dense<0.000000e+00> : vector<4x8x16xf32>
    %64 = tpu.matmul %63, %51, %cst_15 {dimension_numbers = #tpu.dot_dimension_numbers<[2], [1], [1], [2], [0, 0, 0, 1, 1, 2], [0], [0]>, precision = #tpu.contract_precision<fp32>} : vector<4x8x8xf32>, vector<4x8x16xf32>, vector<4x8x16xf32> -> vector<4x8x16xf32>
    "tpu.trace_stop"() : () -> ()
    %65 = vector.extract_strided_slice %64 {offsets = [0, 0, 0], sizes = [2, 8, 16], strides = [1, 1, 1]} : vector<4x8x16xf32> to vector<2x8x16xf32>
    %66 = vector.extract_strided_slice %64 {offsets = [2, 0, 0], sizes = [2, 8, 16], strides = [1, 1, 1]} : vector<4x8x16xf32> to vector<2x8x16xf32>
    %67 = tpu.concatenate %65, %66 in 2 : vector<2x8x16xf32>, vector<2x8x16xf32> -> vector<2x8x32xf32>
    %68 = vector.shape_cast %67 : vector<2x8x32xf32> to vector<16x32xf32>
    %69 = arith.addf %0, %68 : vector<16x32xf32>
    %cst_16 = arith.constant dense<0.000000e+00> : vector<16xf32>
    %70 = vector.multi_reduction <add>, %69, %cst_16 [1] : vector<16x32xf32> to vector<16xf32>
    %71 = vector.shape_cast %70 : vector<16xf32> to vector<16x1xf32>
    %cst_17 = arith.constant 3.200000e+01 : f32
    %72 = vector.broadcast %cst_17 : f32 to vector<16x1xf32>
    %73 = arith.divf %71, %72 : vector<16x1xf32>
    %74 = vector.broadcast %73 : vector<16x1xf32> to vector<16x32xf32>
    %75 = arith.subf %69, %74 : vector<16x32xf32>
    %76 = arith.mulf %75, %75 : vector<16x32xf32>
    %cst_18 = arith.constant dense<0.000000e+00> : vector<16xf32>
    %77 = vector.multi_reduction <add>, %76, %cst_18 [1] : vector<16x32xf32> to vector<16xf32>
    %78 = vector.shape_cast %77 : vector<16xf32> to vector<16x1xf32>
    %cst_19 = arith.constant 3.200000e+01 : f32
    %79 = vector.broadcast %cst_19 : f32 to vector<16x1xf32>
    %80 = arith.divf %78, %79 : vector<16x1xf32>
    %81 = vector.broadcast %73 : vector<16x1xf32> to vector<16x32xf32>
    %82 = arith.subf %69, %81 : vector<16x32xf32>
    %cst_20 = arith.constant 9.99999974E-6 : f32
    %83 = vector.broadcast %cst_20 : f32 to vector<16x1xf32>
    %84 = arith.addf %80, %83 : vector<16x1xf32>
    %85 = math.rsqrt %84 : vector<16x1xf32>
    %86 = vector.broadcast %85 : vector<16x1xf32> to vector<16x32xf32>
    %87 = arith.mulf %82, %86 : vector<16x32xf32>
    %88 = vector.broadcast %7 : vector<1x32xf32> to vector<16x32xf32>
    %89 = arith.mulf %87, %88 : vector<16x32xf32>
    %90 = vector.broadcast %8 : vector<1x32xf32> to vector<16x32xf32>
    %91 = arith.addf %89, %90 : vector<16x32xf32>
    %cst_21 = arith.constant dense<0.000000e+00> : vector<16x128xf32>
    %92 = tpu.matmul %91, %2, %cst_21 {dimension_numbers = #tpu.dot_dimension_numbers<[1], [0], [0], [1], [0, 0, 1, 1], [], []>, precision = #tpu.contract_precision<fp32>} : vector<16x32xf32>, vector<32x128xf32>, vector<16x128xf32> -> vector<16x128xf32>
    %93 = vector.broadcast %11 : vector<1x128xf32> to vector<16x128xf32>
    %94 = arith.addf %92, %93 : vector<16x128xf32>
    %cst_22 = arith.constant 5.000000e-01 : f32
    %95 = vector.broadcast %cst_22 : f32 to vector<16x128xf32>
    %96 = arith.mulf %95, %94 : vector<16x128xf32>
    %cst_23 = arith.constant 0.707106769 : f32
    %97 = vector.broadcast %cst_23 : f32 to vector<16x128xf32>
    %98 = arith.mulf %94, %97 : vector<16x128xf32>
    %99 = math.erf %98 : vector<16x128xf32>
    %cst_24 = arith.constant 1.000000e+00 : f32
    %100 = vector.broadcast %cst_24 : f32 to vector<16x128xf32>
    %101 = arith.addf %100, %99 : vector<16x128xf32>
    %102 = arith.mulf %96, %101 : vector<16x128xf32>
    %cst_25 = arith.constant dense<0.000000e+00> : vector<16x32xf32>
    %103 = tpu.matmul %102, %3, %cst_25 {dimension_numbers = #tpu.dot_dimension_numbers<[1], [1], [0], [0], [0, 0, 1, 0], [], []>, precision = #tpu.contract_precision<fp32>} : vector<16x128xf32>, vector<32x128xf32>, vector<16x32xf32> -> vector<16x32xf32>
    %104 = vector.broadcast %10 : vector<1x32xf32> to vector<16x32xf32>
    %105 = arith.addf %103, %104 : vector<16x32xf32>
    %106 = arith.addf %69, %105 : vector<16x32xf32>
    %c0_26 = arith.constant 0 : index
    %c0_27 = arith.constant 0 : index
    %107 = vector.load %arg2[%c0_26, %c0_27] : memref<16x32xf32, #tpu.memory_space<vmem>>, vector<16x32xf32>
    tpu.vector_store %arg2[%c0_26, %c0_27], %106 {strides = array<i32>} : memref<16x32xf32, #tpu.memory_space<vmem>>, vector<16x32xf32>,
    return
  }
}

</mosaic_0001>

<llo_original>
// kernel: tpu_custom_call.1
$region0: #{tpu_custom_call.1}
  #allocation0 [shape = 'u32[]', space=smem, size = 0x4, offset = 0x4, fixed_abs, tag = 'smem constant byte address 0x4 - core index']
  #allocation1 [shape = 'u32[144,128]{1,0:T(1,128)}', space=vmem, size = 0x12000, scoped, tag = 'internal scratch']
  %s0 = inlined_call_operand.hbm [shape: f32[16,32], index: 0, kind: input, shape index: {}]
  %s1 = inlined_call_operand.hbm [shape: f32[104,128], index: 1, kind: input, shape index: {}]
  %s2 = inlined_call_operand.hbm [shape: f32[16,32], index: 2, kind: output, shape index: {}]
  %s3 = sld [smem:[#allocation0]]
  $region26: #{tpu_custom_call.1} parent=0
    _
  %s5 = ssub.s32 1, %s3
  %s6 = scalar_select 0, %s5, %s3
  $region1: #{tpu_custom_call.1} parent=0
    #allocation2 [shape = 'u8[8192]{0}', space=vmem, size = 0x2000, scoped, tag = 'input window, operand 0, single buffered']
    #allocation3 [shape = 's32[1]{0}', space=sflag, size = 0x4, scoped, tag = 'scoped memory for tpu_custom_call.1']
    #allocation4 [shape = 's32[1]{0}', space=sflag, size = 0x4, scoped, tag = 'scoped memory for tpu_custom_call.1']
    #allocation5 [shape = 'u8[53248]{0}', space=vmem, size = 0xd000, scoped, tag = 'input window, operand 1, single buffered']
    #allocation6 [shape = 's32[1]{0}', space=sflag, size = 0x4, scoped, tag = 'scoped memory for tpu_custom_call.1']
    #allocation7 [shape = 'u8[8192]{0}', space=vmem, size = 0x2000, scoped, tag = 'output window, operand 0, single buffered']
    %7 = vsyncpa [#allocation3], 0
    %8 = vsyncpa [#allocation6], 0
    %9 = vsyncpa [#allocation4], 0
    // Predicated region
    $region2: #{tpu_custom_call.1} parent=1 // pred_check
      _
    $region3: #{tpu_custom_call.1} parent=1 // pred_check_branch
      %11 = sbr.rel (0) target = $region5
    $region4: #{tpu_custom_call.1} parent=1 // pred_region
      %s13 = ssub.s32 256, 256
      %14 = vsyncadd [#allocation3], %s13
      %s15 = sshll.u32 [#allocation2], 4
      %s16 = int_to_ptr.vmem [resolvable:$true] %s15
      %21 = dma.hbm_to_vmem [thread:$0]  %s0, 256, %s16, [#allocation3], 128, 128, 8
    $region5: #{tpu_custom_call.1} parent=1 // pred_fallthru
      _
    // Predicated region
    $region6: #{tpu_custom_call.1} parent=1 // pred_check
      _
    $region7: #{tpu_custom_call.1} parent=1 // pred_check_branch
      %23 = sbr.rel (0) target = $region9
    $region8: #{tpu_custom_call.1} parent=1 // pred_region
      %s25 = ssub.s32 1664, 1664
      %26 = vsyncadd [#allocation6], %s25
      %s27 = sshll.u32 [#allocation5], 4
      %s28 = int_to_ptr.vmem [resolvable:$true] %s27
      %33 = dma.hbm_to_vmem [thread:$0]  %s1, 1664, %s28, [#allocation6], 128, 128, 8
    $region9: #{tpu_custom_call.1} parent=1 // pred_fallthru
      _
    // Predicated region
    $region10: #{tpu_custom_call.1} parent=1 // pred_check
      _
    $region11: #{tpu_custom_call.1} parent=1 // pred_check_branch
      %35 = sbr.rel (0) target = $region13
    $region12: #{tpu_custom_call.1} parent=1 // pred_region
      %36 = dma.done [#allocation3], 256
    $region13: #{tpu_custom_call.1} parent=1 // pred_fallthru
      _
    // Predicated region
    $region14: #{tpu_custom_call.1} parent=1 // pred_check
      _
    $region15: #{tpu_custom_call.1} parent=1 // pred_check_branch
      %38 = sbr.rel (0) target = $region17
    $region16: #{tpu_custom_call.1} parent=1 // pred_region
      %39 = dma.done [#allocation6], 1664
    $region17: #{tpu_custom_call.1} parent=1 // pred_fallthru
      _
    %v40 = vld [vmem:[#allocation2] sm:$0xff]
    %v41 = vld [vmem:[#allocation2 + $0x8] sm:$0xff]
    %v42 = vld [vmem:[#allocation5] sm:$0xff]
    %v43 = vld [vmem:[#allocation5 + $0x8] sm:$0xff]
    %v44 = vld [vmem:[#allocation5 + $0x10] sm:$0xff]
    %v45 = vld [vmem:[#allocation5 + $0x18] sm:$0xff]
    %v46 = vld [vmem:[#allocation5 + $0x20] sm:$0xff]
    %v47 = vld [vmem:[#allocation5 + $0x28] sm:$0xff]
    %v48 = vld [vmem:[#allocation5 + $0x30] sm:$0xff]
    %v49 = vld [vmem:[#allocation5 + $0x38] sm:$0xff]
    %v50 = vld [vmem:[#allocation5 + $0x40] sm:$0xff]
    %v51 = vld [vmem:[#allocation5 + $0x48] sm:$0xff]
    %v52 = vld [vmem:[#allocation5 + $0x50] sm:$0xff]
    %v53 = vld [vmem:[#allocation5 + $0x58] sm:$0xff]
    %v54 = vld [vmem:[#allocation5 + $0x60] sm:$0xff]
    %vm55 = vcmask 261120
    %v56 = vsel %vm55, %v40, 0.0
    %57 = vadd.xlane.f32.xlu0 %v56
    %v58 = vpop.xlane.xlu0 %57
    %v59 = vsel %vm55, %v41, 0.0
    %60 = vadd.xlane.f32.xlu0 %v59
    %v61 = vpop.xlane.xlu0 %60
    %v62 = vrcp.pop 32.0
    %v63 = vmul.f32 %v58, %v62
    %v64 = vmul.f32 %v61, %v62
    %v65 = vsub.f32 %v40, %v63
    %v66 = vsub.f32 %v41, %v64
    %v67 = vmul.f32 %v65, %v65
    %v68 = vmul.f32 %v66, %v66
    %v69 = vsel %vm55, %v67, 0.0
    %70 = vadd.xlane.f32.xlu0 %v69
    %v71 = vpop.xlane.xlu0 %70
    %v72 = vsel %vm55, %v68, 0.0
    %73 = vadd.xlane.f32.xlu0 %v72
    %v74 = vpop.xlane.xlu0 %73
    %v75 = vmul.f32 %v71, %v62
    %v76 = vmul.f32 %v74, %v62
    %v77 = vadd.f32 %v75, 1e-05
    %v78 = vadd.f32 %v76, 1e-05
    %v79 = vrsqrt.pop %v77
    %v80 = vrsqrt.pop %v78
    %v81 = vmul.f32 %v65, %v79
    %v82 = vmul.f32 %v66, %v80
    %v83 = vlaneseq
    %v84 = vshrl.u32 %v83, 7
    %v85 = vsub.s32 0, %v84
    %v86 = vrot.slane %v54, %v85
    %v87 = vmul.f32 %v81, %v86
    %v88 = vmul.f32 %v82, %v86
    %v89 = vlaneseq
    %v90 = vshrl.u32 %v89, 7
    %v91 = vsub.s32 1, %v90
    %v92 = vrot.slane %v54, %v91
    %v93 = vadd.f32 %v87, %v92
    %v94 = vadd.f32 %v88, %v92
    %v95 = vlaneseq
    %v96 = vshrl.u32 %v95, 7
    %v97 = vsub.s32 4, %v96
    %v98 = vrot.slane %v54, %v97
    %v100 = vsel %vm55, %v93, 0
    %v103 = vsel %vm55, %v94, 0
    %105 = vmatprep.subr.mxu0 0.0
    %v106 = vand.u32 %v42, 4294901760
    %107 = vmatpush1.msra.mxu0 %v106
    %108 = vmatprep.subr.mxu0 0.0
    %v109 = vand.u32 %v43, 4294901760
    %110 = vmatpush1.msra.mxu0 %v109
    %111 = vmatprep.subr.mxu0 0.0
    %v112 = vand.u32 %v44, 4294901760
    %113 = vmatpush1.msra.mxu0 %v112
    %114 = vmatprep.subr.mxu0 0.0
    %v115 = vand.u32 %v45, 4294901760
    %116 = vmatpush1.msra.mxu0 %v115
    %117 = vmatprep.subr.mxu0 0.0
    %118 = vmatpush1.msra.mxu0 0.0
    %119 = vmatprep.subr.mxu0 0.0
    %120 = vmatpush1.msra.mxu0 0.0
    %121 = vmatprep.subr.mxu0 0.0
    %122 = vmatpush1.msra.mxu0 0.0
    %123 = vmatprep.subr.mxu0 0.0
    %124 = vmatpush1.msra.mxu0 0.0
    %125 = vmatprep.subr.mxu0 0.0
    %126 = vmatpush1.msra.mxu0 0.0
    %127 = vmatprep.subr.mxu0 0.0
    %128 = vmatpush1.msra.mxu0 0.0
    %129 = vmatprep.subr.mxu0 0.0
    %130 = vmatpush1.msra.mxu0 0.0
    %131 = vmatprep.subr.mxu0 0.0
    %132 = vmatpush1.msra.mxu0 0.0
    %133 = vmatprep.subr.mxu0 0.0
    %134 = vmatpush1.msra.mxu0 0.0
    %135 = vmatprep.subr.mxu0 0.0
    %136 = vmatpush1.msra.mxu0 0.0
    %137 = vmatprep.subr.mxu0 0.0
    %138 = vmatpush1.msra.mxu0 0.0
    %139 = vmatprep.subr.mxu0 0.0
    %140 = vmatpush1.msra.mxu0 0.0
    %141 = vmatprep.subr.mxu0 0.0
    %142 = vmatpush1.msra.mxu0 0.0
    %143 = vmatprep.subr.mxu0 0.0
    %144 = vmatpush1.msra.mxu0 0.0
    %145 = vmatprep.subr.mxu0 0.0
    %146 = vmatpush1.msra.mxu0 0.0
    %147 = vmatprep.subr.mxu0 0.0
    %148 = vmatpush1.msra.mxu0 0.0
    %149 = vmatprep.subr.mxu0 0.0
    %150 = vmatpush1.msra.mxu0 0.0
    %151 = vmatprep.subr.mxu0 0.0
    %152 = vmatpush1.msra.mxu0 0.0
    %153 = vmatprep.subr.mxu0 0.0
    %154 = vmatpush1.msra.mxu0 0.0
    %155 = vmatprep.subr.mxu0 0.0
    %156 = vmatpush1.msra.mxu0 0.0
    %157 = vmatprep.subr.mxu0 0.0
    %158 = vmatpush1.msra.mxu0 0.0
    %159 = vmatprep.subr.mxu0 0.0
    %160 = vmatpush1.msra.mxu0 0.0
    %161 = vmatprep.subr.mxu0 0.0
    %162 = vmatpush1.msra.mxu0 0.0
    %163 = vmatprep.subr.mxu0 0.0
    %164 = vmatpush1.msra.mxu0 0.0
    %165 = vmatprep.subr.mxu0 0.0
    %166 = vmatpush1.msra.mxu0 0.0
    %167 = vmatprep.subr.mxu0 0.0
    %168 = vmatpush1.msra.mxu0 0.0
    %169 = vmatprep.subr.mxu0 0.0
    %170 = vmatpush1.msra.mxu0 0.0
    %171 = vmatprep.subr.mxu0 0.0
    %172 = vmatpush1.msra.mxu0 0.0
    %173 = vmatprep.mubr.f32.mxu0 0.0
    %v174 = vand.u32 %v100, 4294901760
    %v175 = vsub.f32 %v100, %v174
    %v176 = vand.u32 %v175, 4294901760
    %v177 = vsub.f32 %v175, %v176
    %v178 = vand.u32 %v177, 4294901760
    %179 = vmatmul.mubr.f32.gmra.mrb[0].mxu0 %v178
    %v180 = vpop.f32.mrb[0].mxu0
    %v181 = vadd.f32 %v98, %v180
    %v182 = vpop.f32.mrb[0].mxu0
    %183 = vmatprep.mubr.f32.mxu0 0.0
    %v184 = vand.u32 %v103, 4294901760
    %v185 = vsub.f32 %v103, %v184
    %v186 = vand.u32 %v185, 4294901760
    %v187 = vsub.f32 %v185, %v186
    %v188 = vand.u32 %v187, 4294901760
    %189 = vmatmul.mubr.f32.gmra.mrb[0].mxu0 %v188
    %v190 = vpop.f32.mrb[0].mxu0
    %v191 = vadd.f32 %v98, %v190
    %v192 = vpop.f32.mrb[0].mxu0
    %193 = vdwg.mxu0
    %194 = vmatprep.subr.mxu0 0.0
    %v195 = vand.u32 %v42, 4294901760
    %v196 = vsub.f32 %v42, %v195
    %v197 = vand.u32 %v196, 4294901760
    %v198 = vsub.f32 %v196, %v197
    %v199 = vand.u32 %v198, 4294901760
    %200 = vmatpush1.msra.mxu0 %v199
    %201 = vmatprep.subr.mxu0 0.0
    %v202 = vand.u32 %v43, 4294901760
    %v203 = vsub.f32 %v43, %v202
    %v204 = vand.u32 %v203, 4294901760
    %v205 = vsub.f32 %v203, %v204
    %v206 = vand.u32 %v205, 4294901760
    %207 = vmatpush1.msra.mxu0 %v206
    %208 = vmatprep.subr.mxu0 0.0
    %v209 = vand.u32 %v44, 4294901760
    %v210 = vsub.f32 %v44, %v209
    %v211 = vand.u32 %v210, 4294901760
    %v212 = vsub.f32 %v210, %v211
    %v213 = vand.u32 %v212, 4294901760
    %214 = vmatpush1.msra.mxu0 %v213
    %215 = vmatprep.subr.mxu0 0.0
    %v216 = vand.u32 %v45, 4294901760
    %v217 = vsub.f32 %v45, %v216
    %v218 = vand.u32 %v217, 4294901760
    %v219 = vsub.f32 %v217, %v218
    %v220 = vand.u32 %v219, 4294901760
    %221 = vmatpush1.msra.mxu0 %v220
    %222 = vmatprep.subr.mxu0 0.0
    %223 = vmatpush1.msra.mxu0 0.0
    %224 = vmatprep.subr.mxu0 0.0
    %225 = vmatpush1.msra.mxu0 0.0
    %226 = vmatprep.subr.mxu0 0.0
    %227 = vmatpush1.msra.mxu0 0.0
    %228 = vmatprep.subr.mxu0 0.0
    %229 = vmatpush1.msra.mxu0 0.0
    %230 = vmatprep.subr.mxu0 0.0
    %231 = vmatpush1.msra.mxu0 0.0
    %232 = vmatprep.subr.mxu0 0.0
    %233 = vmatpush1.msra.mxu0 0.0
    %234 = vmatprep.subr.mxu0 0.0
    %235 = vmatpush1.msra.mxu0 0.0
    %236 = vmatprep.subr.mxu0 0.0
    %237 = vmatpush1.msra.mxu0 0.0
    %238 = vmatprep.subr.mxu0 0.0
    %239 = vmatpush1.msra.mxu0 0.0
    %240 = vmatprep.subr.mxu0 0.0
    %241 = vmatpush1.msra.mxu0 0.0
    %242 = vmatprep.subr.mxu0 0.0
    %243 = vmatpush1.msra.mxu0 0.0
    %244 = vmatprep.subr.mxu0 0.0
    %245 = vmatpush1.msra.mxu0 0.0
    %246 = vmatprep.subr.mxu0 0.0
    %247 = vmatpush1.msra.mxu0 0.0
    %248 = vmatprep.subr.mxu0 0.0
    %249 = vmatpush1.msra.mxu0 0.0
    %250 = vmatprep.subr.mxu0 0.0
    %251 = vmatpush1.msra.mxu0 0.0
    %252 = vmatprep.subr.mxu0 0.0
    %253 = vmatpush1.msra.mxu0 0.0
    %254 = vmatprep.subr.mxu0 0.0
    %255 = vmatpush1.msra.mxu0 0.0
    %256 = vmatprep.subr.mxu0 0.0
    %257 = vmatpush1.msra.mxu0 0.0
    %258 = vmatprep.subr.mxu0 0.0
    %259 = vmatpush1.msra.mxu0 0.0
    %260 = vmatprep.subr.mxu0 0.0
    %261 = vmatpush1.msra.mxu0 0.0
    %262 = vmatprep.subr.mxu0 0.0
    %263 = vmatpush1.msra.mxu0 0.0
    %264 = vmatprep.subr.mxu0 0.0
    %265 = vmatpush1.msra.mxu0 0.0
    %266 = vmatprep.subr.mxu0 0.0
    %267 = vmatpush1.msra.mxu0 0.0
    %268 = vmatprep.subr.mxu0 0.0
    %269 = vmatpush1.msra.mxu0 0.0
    %270 = vmatprep.subr.mxu0 0.0
    %271 = vmatpush1.msra.mxu0 0.0
    %272 = vmatprep.subr.mxu0 0.0
    %273 = vmatpush1.msra.mxu0 0.0
    %274 = vmatprep.subr.mxu0 0.0
    %275 = vmatpush1.msra.mxu0 0.0
    %276 = vmatprep.subr.mxu0 0.0
    %277 = vmatpush1.msra.mxu0 0.0
    %278 = vmatprep.mubr.f32.mxu0 0.0
    %v279 = vand.u32 %v100, 4294901760
    %280 = vmatmul.mubr.f32.gmra.mrb[0].mxu0 %v279
    %v281 = vpop.f32.mrb[0].mxu0
    %v282 = vadd.f32 %v181, %v281
    %v283 = vpop.f32.mrb[0].mxu0
    %284 = vmatprep.mubr.f32.mxu0 0.0
    %v285 = vand.u32 %v103, 4294901760
    %286 = vmatmul.mubr.f32.gmra.mrb[0].mxu0 %v285
    %v287 = vpop.f32.mrb[0].mxu0
    %v288 = vadd.f32 %v191, %v287
    %v289 = vpop.f32.mrb[0].mxu0
    %290 = vdwg.mxu0
    %291 = vmatprep.subr.mxu0 0.0
    %v292 = vand.u32 %v42, 4294901760
    %v293 = vsub.f32 %v42, %v292
    %294 = vmatpush1.msra.mxu0 %v293
    %295 = vmatprep.subr.mxu0 0.0
    %v296 = vand.u32 %v43, 4294901760
    %v297 = vsub.f32 %v43, %v296
    %298 = vmatpush1.msra.mxu0 %v297
    %299 = vmatprep.subr.mxu0 0.0
    %v300 = vand.u32 %v44, 4294901760
    %v301 = vsub.f32 %v44, %v300
    %302 = vmatpush1.msra.mxu0 %v301
    %303 = vmatprep.subr.mxu0 0.0
    %v304 = vand.u32 %v45, 4294901760
    %v305 = vsub.f32 %v45, %v304
    %306 = vmatpush1.msra.mxu0 %v305
    %307 = vmatprep.subr.mxu0 0.0
    %308 = vmatpush1.msra.mxu0 0.0
    %309 = vmatprep.subr.mxu0 0.0
    %310 = vmatpush1.msra.mxu0 0.0
    %311 = vmatprep.subr.mxu0 0.0
    %312 = vmatpush1.msra.mxu0 0.0
    %313 = vmatprep.subr.mxu0 0.0
    %314 = vmatpush1.msra.mxu0 0.0
    %315 = vmatprep.subr.mxu0 0.0
    %316 = vmatpush1.msra.mxu0 0.0
    %317 = vmatprep.subr.mxu0 0.0
    %318 = vmatpush1.msra.mxu0 0.0
    %319 = vmatprep.subr.mxu0 0.0
    %320 = vmatpush1.msra.mxu0 0.0
    %321 = vmatprep.subr.mxu0 0.0
    %322 = vmatpush1.msra.mxu0 0.0
    %323 = vmatprep.subr.mxu0 0.0
    %324 = vmatpush1.msra.mxu0 0.0
    %325 = vmatprep.subr.mxu0 0.0
    %326 = vmatpush1.msra.mxu0 0.0
    %327 = vmatprep.subr.mxu0 0.0
    %328 = vmatpush1.msra.mxu0 0.0
    %329 = vmatprep.subr.mxu0 0.0
    %330 = vmatpush1.msra.mxu0 0.0
    %331 = vmatprep.subr.mxu0 0.0
    %332 = vmatpush1.msra.mxu0 0.0
    %333 = vmatprep.subr.mxu0 0.0
    %334 = vmatpush1.msra.mxu0 0.0
    %335 = vmatprep.subr.mxu0 0.0
    %336 = vmatpush1.msra.mxu0 0.0
    %337 = vmatprep.subr.mxu0 0.0
    %338 = vmatpush1.msra.mxu0 0.0
    %339 = vmatprep.subr.mxu0 0.0
    %340 = vmatpush1.msra.mxu0 0.0
    %341 = vmatprep.subr.mxu0 0.0
    %342 = vmatpush1.msra.mxu0 0.0
    %343 = vmatprep.subr.mxu0 0.0
    %344 = vmatpush1.msra.mxu0 0.0
    %345 = vmatprep.subr.mxu0 0.0
    %346 = vmatpush1.msra.mxu0 0.0
    %347 = vmatprep.subr.mxu0 0.0
    %348 = vmatpush1.msra.mxu0 0.0
    %349 = vmatprep.subr.mxu0 0.0
    %350 = vmatpush1.msra.mxu0 0.0
    %351 = vmatprep.subr.mxu0 0.0
    %352 = vmatpush1.msra.mxu0 0.0
    %353 = vmatprep.subr.mxu0 0.0
    %354 = vmatpush1.msra.mxu0 0.0
    %355 = vmatprep.subr.mxu0 0.0
    %356 = vmatpush1.msra.mxu0 0.0
    %357 = vmatprep.subr.mxu0 0.0
    %358 = vmatpush1.msra.mxu0 0.0
    %359 = vmatprep.subr.mxu0 0.0
    %360 = vmatpush1.msra.mxu0 0.0
    %361 = vmatprep.subr.mxu0 0.0
    %362 = vmatpush1.msra.mxu0 0.0
    %363 = vmatprep.mubr.f32.mxu0 0.0
    %v364 = vand.u32 %v100, 4294901760
    %v365 = vsub.f32 %v100, %v364
    %366 = vmatmul.mubr.f32.gmra.mrb[0].mxu0 %v365
    %v367 = vpop.f32.mrb[0].mxu0
    %v368 = vadd.f32 %v282, %v367
    %v369 = vpop.f32.mrb[0].mxu0
    %370 = vmatprep.mubr.f32.mxu0 0.0
    %v371 = vand.u32 %v103, 4294901760
    %v372 = vsub.f32 %v103, %v371
    %373 = vmatmul.mubr.f32.gmra.mrb[0].mxu0 %v372
    %v374 = vpop.f32.mrb[0].mxu0
    %v375 = vadd.f32 %v288, %v374
    %v376 = vpop.f32.mrb[0].mxu0
    %377 = vdwg.mxu0
    %378 = vmatprep.subr.mxu0 0.0
    %v379 = vand.u32 %v42, 4294901760
    %380 = vmatpush1.msra.mxu0 %v379
    %381 = vmatprep.subr.mxu0 0.0
    %v382 = vand.u32 %v43, 4294901760
    %383 = vmatpush1.msra.mxu0 %v382
    %384 = vmatprep.subr.mxu0 0.0
    %v385 = vand.u32 %v44, 4294901760
    %386 = vmatpush1.msra.mxu0 %v385
    %387 = vmatprep.subr.mxu0 0.0
    %v388 = vand.u32 %v45, 4294901760
    %389 = vmatpush1.msra.mxu0 %v388
    %390 = vmatprep.subr.mxu0 0.0
    %391 = vmatpush1.msra.mxu0 0.0
    %392 = vmatprep.subr.mxu0 0.0
    %393 = vmatpush1.msra.mxu0 0.0
    %394 = vmatprep.subr.mxu0 0.0
    %395 = vmatpush1.msra.mxu0 0.0
    %396 = vmatprep.subr.mxu0 0.0
    %397 = vmatpush1.msra.mxu0 0.0
    %398 = vmatprep.subr.mxu0 0.0
    %399 = vmatpush1.msra.mxu0 0.0
    %400 = vmatprep.subr.mxu0 0.0
    %401 = vmatpush1.msra.mxu0 0.0
    %402 = vmatprep.subr.mxu0 0.0
    %403 = vmatpush1.msra.mxu0 0.0
    %404 = vmatprep.subr.mxu0 0.0
    %405 = vmatpush1.msra.mxu0 0.0
    %406 = vmatprep.subr.mxu0 0.0
    %407 = vmatpush1.msra.mxu0 0.0
    %408 = vmatprep.subr.mxu0 0.0
    %409 = vmatpush1.msra.mxu0 0.0
    %410 = vmatprep.subr.mxu0 0.0
    %411 = vmatpush1.msra.mxu0 0.0
    %412 = vmatprep.subr.mxu0 0.0
    %413 = vmatpush1.msra.mxu0 0.0
    %414 = vmatprep.subr.mxu0 0.0
    %415 = vmatpush1.msra.mxu0 0.0
    %416 = vmatprep.subr.mxu0 0.0
    %417 = vmatpush1.msra.mxu0 0.0
    %418 = vmatprep.subr.mxu0 0.0
    %419 = vmatpush1.msra.mxu0 0.0
    %420 = vmatprep.subr.mxu0 0.0
    %421 = vmatpush1.msra.mxu0 0.0
    %422 = vmatprep.subr.mxu0 0.0
    %423 = vmatpush1.msra.mxu0 0.0
    %424 = vmatprep.subr.mxu0 0.0
    %425 = vmatpush1.msra.mxu0 0.0
    %426 = vmatprep.subr.mxu0 0.0
    %427 = vmatpush1.msra.mxu0 0.0
    %428 = vmatprep.subr.mxu0 0.0
    %429 = vmatpush1.msra.mxu0 0.0
    %430 = vmatprep.subr.mxu0 0.0
    %431 = vmatpush1.msra.mxu0 0.0
    %432 = vmatprep.subr.mxu0 0.0
    %433 = vmatpush1.msra.mxu0 0.0
    %434 = vmatprep.subr.mxu0 0.0
    %435 = vmatpush1.msra.mxu0 0.0
    %436 = vmatprep.subr.mxu0 0.0
    %437 = vmatpush1.msra.mxu0 0.0
    %438 = vmatprep.subr.mxu0 0.0
    %439 = vmatpush1.msra.mxu0 0.0
    %440 = vmatprep.subr.mxu0 0.0
    %441 = vmatpush1.msra.mxu0 0.0
    %442 = vmatprep.subr.mxu0 0.0
    %443 = vmatpush1.msra.mxu0 0.0
    %444 = vmatprep.subr.mxu0 0.0
    %445 = vmatpush1.msra.mxu0 0.0
    %446 = vmatprep.mubr.f32.mxu0 0.0
    %v447 = vand.u32 %v100, 4294901760
    %v448 = vsub.f32 %v100, %v447
    %v449 = vand.u32 %v448, 4294901760
    %450 = vmatmul.mubr.f32.gmra.mrb[0].mxu0 %v449
    %v451 = vpop.f32.mrb[0].mxu0
    %v452 = vadd.f32 %v368, %v451
    %v453 = vpop.f32.mrb[0].mxu0
    %454 = vmatprep.mubr.f32.mxu0 0.0
    %v455 = vand.u32 %v103, 4294901760
    %v456 = vsub.f32 %v103, %v455
    %v457 = vand.u32 %v456, 4294901760
    %458 = vmatmul.mubr.f32.gmra.mrb[0].mxu0 %v457
    %v459 = vpop.f32.mrb[0].mxu0
    %v460 = vadd.f32 %v375, %v459
    %v461 = vpop.f32.mrb[0].mxu0
    %462 = vdwg.mxu0
    %463 = vmatprep.subr.mxu0 0.0
    %v464 = vand.u32 %v42, 4294901760
    %v465 = vsub.f32 %v42, %v464
    %v466 = vand.u32 %v465, 4294901760
    %467 = vmatpush1.msra.mxu0 %v466
    %468 = vmatprep.subr.mxu0 0.0
    %v469 = vand.u32 %v43, 4294901760
    %v470 = vsub.f32 %v43, %v469
    %v471 = vand.u32 %v470, 4294901760
    %472 = vmatpush1.msra.mxu0 %v471
    %473 = vmatprep.subr.mxu0 0.0
    %v474 = vand.u32 %v44, 4294901760
    %v475 = vsub.f32 %v44, %v474
    %v476 = vand.u32 %v475, 4294901760
    %477 = vmatpush1.msra.mxu0 %v476
    %478 = vmatprep.subr.mxu0 0.0
    %v479 = vand.u32 %v45, 4294901760
    %v480 = vsub.f32 %v45, %v479
    %v481 = vand.u32 %v480, 4294901760
    %482 = vmatpush1.msra.mxu0 %v481
    %483 = vmatprep.subr.mxu0 0.0
    %484 = vmatpush1.msra.mxu0 0.0
    %485 = vmatprep.subr.mxu0 0.0
    %486 = vmatpush1.msra.mxu0 0.0
    %487 = vmatprep.subr.mxu0 0.0
    %488 = vmatpush1.msra.mxu0 0.0
    %489 = vmatprep.subr.mxu0 0.0
    %490 = vmatpush1.msra.mxu0 0.0
    %491 = vmatprep.subr.mxu0 0.0
    %492 = vmatpush1.msra.mxu0 0.0
    %493 = vmatprep.subr.mxu0 0.0
    %494 = vmatpush1.msra.mxu0 0.0
    %495 = vmatprep.subr.mxu0 0.0
    %496 = vmatpush1.msra.mxu0 0.0
    %497 = vmatprep.subr.mxu0 0.0
    %498 = vmatpush1.msra.mxu0 0.0
    %499 = vmatprep.subr.mxu0 0.0
    %500 = vmatpush1.msra.mxu0 0.0
    %501 = vmatprep.subr.mxu0 0.0
    %502 = vmatpush1.msra.mxu0 0.0
    %503 = vmatprep.subr.mxu0 0.0
    %504 = vmatpush1.msra.mxu0 0.0
    %505 = vmatprep.subr.mxu0 0.0
    %506 = vmatpush1.msra.mxu0 0.0
    %507 = vmatprep.subr.mxu0 0.0
    %508 = vmatpush1.msra.mxu0 0.0
    %509 = vmatprep.subr.mxu0 0.0
    %510 = vmatpush1.msra.mxu0 0.0
    %511 = vmatprep.subr.mxu0 0.0
    %512 = vmatpush1.msra.mxu0 0.0
    %513 = vmatprep.subr.mxu0 0.0
    %514 = vmatpush1.msra.mxu0 0.0
    %515 = vmatprep.subr.mxu0 0.0
    %516 = vmatpush1.msra.mxu0 0.0
    %517 = vmatprep.subr.mxu0 0.0
    %518 = vmatpush1.msra.mxu0 0.0
    %519 = vmatprep.subr.mxu0 0.0
    %520 = vmatpush1.msra.mxu0 0.0
    %521 = vmatprep.subr.mxu0 0.0
    %522 = vmatpush1.msra.mxu0 0.0
    %523 = vmatprep.subr.mxu0 0.0
    %524 = vmatpush1.msra.mxu0 0.0
    %525 = vmatprep.subr.mxu0 0.0
    %526 = vmatpush1.msra.mxu0 0.0
    %527 = vmatprep.subr.mxu0 0.0
    %528 = vmatpush1.msra.mxu0 0.0
    %529 = vmatprep.subr.mxu0 0.0
    %530 = vmatpush1.msra.mxu0 0.0
    %531 = vmatprep.subr.mxu0 0.0
    %532 = vmatpush1.msra.mxu0 0.0
    %533 = vmatprep.subr.mxu0 0.0
    %534 = vmatpush1.msra.mxu0 0.0
    %535 = vmatprep.subr.mxu0 0.0
    %536 = vmatpush1.msra.mxu0 0.0
    %537 = vmatprep.subr.mxu0 0.0
    %538 = vmatpush1.msra.mxu0 0.0
    %539 = vmatprep.mubr.f32.mxu0 0.0
    %v540 = vand.u32 %v100, 4294901760
    %541 = vmatmul.mubr.f32.gmra.mrb[0].mxu0 %v540
    %v542 = vpop.f32.mrb[0].mxu0
    %v543 = vadd.f32 %v452, %v542
    %v544 = vpop.f32.mrb[0].mxu0
    %545 = vmatprep.mubr.f32.mxu0 0.0
    %v546 = vand.u32 %v103, 4294901760
    %547 = vmatmul.mubr.f32.gmra.mrb[0].mxu0 %v546
    %v548 = vpop.f32.mrb[0].mxu0
    %v549 = vadd.f32 %v460, %v548
    %v550 = vpop.f32.mrb[0].mxu0
    %551 = vdwg.mxu0
    %552 = vmatprep.subr.mxu0 0.0
    %v553 = vand.u32 %v42, 4294901760
    %554 = vmatpush1.msra.mxu0 %v553
    %555 = vmatprep.subr.mxu0 0.0
    %v556 = vand.u32 %v43, 4294901760
    %557 = vmatpush1.msra.mxu0 %v556
    %558 = vmatprep.subr.mxu0 0.0
    %v559 = vand.u32 %v44, 4294901760
    %560 = vmatpush1.msra.mxu0 %v559
    %561 = vmatprep.subr.mxu0 0.0
    %v562 = vand.u32 %v45, 4294901760
    %563 = vmatpush1.msra.mxu0 %v562
    %564 = vmatprep.subr.mxu0 0.0
    %565 = vmatpush1.msra.mxu0 0.0
    %566 = vmatprep.subr.mxu0 0.0
    %567 = vmatpush1.msra.mxu0 0.0
    %568 = vmatprep.subr.mxu0 0.0
    %569 = vmatpush1.msra.mxu0 0.0
    %570 = vmatprep.subr.mxu0 0.0
    %571 = vmatpush1.msra.mxu0 0.0
    %572 = vmatprep.subr.mxu0 0.0
    %573 = vmatpush1.msra.mxu0 0.0
    %574 = vmatprep.subr.mxu0 0.0
    %575 = vmatpush1.msra.mxu0 0.0
    %576 = vmatprep.subr.mxu0 0.0
    %577 = vmatpush1.msra.mxu0 0.0
    %578 = vmatprep.subr.mxu0 0.0
    %579 = vmatpush1.msra.mxu0 0.0
    %580 = vmatprep.subr.mxu0 0.0
    %581 = vmatpush1.msra.mxu0 0.0
    %582 = vmatprep.subr.mxu0 0.0
    %583 = vmatpush1.msra.mxu0 0.0
    %584 = vmatprep.subr.mxu0 0.0
    %585 = vmatpush1.msra.mxu0 0.0
    %586 = vmatprep.subr.mxu0 0.0
    %587 = vmatpush1.msra.mxu0 0.0
    %588 = vmatprep.subr.mxu0 0.0
    %589 = vmatpush1.msra.mxu0 0.0
    %590 = vmatprep.subr.mxu0 0.0
    %591 = vmatpush1.msra.mxu0 0.0
    %592 = vmatprep.subr.mxu0 0.0
    %593 = vmatpush1.msra.mxu0 0.0
    %594 = vmatprep.subr.mxu0 0.0
    %595 = vmatpush1.msra.mxu0 0.0
    %596 = vmatprep.subr.mxu0 0.0
    %597 = vmatpush1.msra.mxu0 0.0
    %598 = vmatprep.subr.mxu0 0.0
    %599 = vmatpush1.msra.mxu0 0.0
    %600 = vmatprep.subr.mxu0 0.0
    %601 = vmatpush1.msra.mxu0 0.0
    %602 = vmatprep.subr.mxu0 0.0
    %603 = vmatpush1.msra.mxu0 0.0
    %604 = vmatprep.subr.mxu0 0.0
    %605 = vmatpush1.msra.mxu0 0.0
    %606 = vmatprep.subr.mxu0 0.0
    %607 = vmatpush1.msra.mxu0 0.0
    %608 = vmatprep.subr.mxu0 0.0
    %609 = vmatpush1.msra.mxu0 0.0
    %610 = vmatprep.subr.mxu0 0.0
    %611 = vmatpush1.msra.mxu0 0.0
    %612 = vmatprep.subr.mxu0 0.0
    %613 = vmatpush1.msra.mxu0 0.0
    %614 = vmatprep.subr.mxu0 0.0
    %615 = vmatpush1.msra.mxu0 0.0
    %616 = vmatprep.subr.mxu0 0.0
    %617 = vmatpush1.msra.mxu0 0.0
    %618 = vmatprep.subr.mxu0 0.0
    %619 = vmatpush1.msra.mxu0 0.0
    %620 = vmatprep.mubr.f32.mxu0 0.0
    %v621 = vand.u32 %v100, 4294901760
    %622 = vmatmul.mubr.f32.gmra.mrb[0].mxu0 %v621
    %v623 = vpop.f32.mrb[0].mxu0
    %v624 = vadd.f32 %v543, %v623
    %v625 = vpop.f32.mrb[0].mxu0
    %626 = vmatprep.mubr.f32.mxu0 0.0
    %v627 = vand.u32 %v103, 4294901760
    %628 = vmatmul.mubr.f32.gmra.mrb[0].mxu0 %v627
    %v629 = vpop.f32.mrb[0].mxu0
    %v630 = vadd.f32 %v549, %v629
    %v631 = vpop.f32.mrb[0].mxu0
    %632 = vdwg.mxu0
    %635 = vrot.lane.b32.xlu0 %v624, 112
    %v636 = vpop.permute.xlu0 %635
    %637 = vrot.lane.b32.xlu0 %v630, 112
    %v638 = vpop.permute.xlu0 %637
    %639 = vrot.lane.b32.xlu0 %v624, 96
    %v640 = vpop.permute.xlu0 %639
    %vm641 = vcmask 130048
    %v642 = vsel %vm641, %v624, 0
    %v644 = vsel %vm641, %v640, 0
    %646 = vmatprep.subr.mxu0 0.0
    %v647 = vand.u32 %v644, 4294901760
    %648 = vmatpush1.xpose.msra.mxu0 %v647
    %649 = vmatprep.subr.mxu0 0.0
    %650 = vmatpush1.xpose.msra.mxu0 0.0
    %651 = vmatprep.subr.mxu0 0.0
    %652 = vmatpush1.xpose.msra.mxu0 0.0
    %653 = vmatprep.subr.mxu0 0.0
    %654 = vmatpush1.xpose.msra.mxu0 0.0
    %655 = vmatprep.subr.mxu0 0.0
    %656 = vmatpush1.xpose.msra.mxu0 0.0
    %657 = vmatprep.subr.mxu0 0.0
    %658 = vmatpush1.xpose.msra.mxu0 0.0
    %659 = vmatprep.subr.mxu0 0.0
    %660 = vmatpush1.xpose.msra.mxu0 0.0
    %661 = vmatprep.subr.mxu0 0.0
    %662 = vmatpush1.xpose.msra.mxu0 0.0
    %663 = vmatprep.subr.mxu0 0.0
    %664 = vmatpush1.xpose.msra.mxu0 0.0
    %665 = vmatprep.subr.mxu0 0.0
    %666 = vmatpush1.xpose.msra.mxu0 0.0
    %667 = vmatprep.subr.mxu0 0.0
    %668 = vmatpush1.xpose.msra.mxu0 0.0
    %669 = vmatprep.subr.mxu0 0.0
    %670 = vmatpush1.xpose.msra.mxu0 0.0
    %671 = vmatprep.subr.mxu0 0.0
    %672 = vmatpush1.xpose.msra.mxu0 0.0
    %673 = vmatprep.subr.mxu0 0.0
    %674 = vmatpush1.xpose.msra.mxu0 0.0
    %675 = vmatprep.subr.mxu0 0.0
    %676 = vmatpush1.xpose.msra.mxu0 0.0
    %677 = vmatprep.subr.mxu0 0.0
    %678 = vmatpush1.xpose.msra.mxu0 0.0
    %679 = vmatprep.subr.mxu0 0.0
    %680 = vmatpush1.xpose.msra.mxu0 0.0
    %681 = vmatprep.subr.mxu0 0.0
    %682 = vmatpush1.xpose.msra.mxu0 0.0
    %683 = vmatprep.subr.mxu0 0.0
    %684 = vmatpush1.xpose.msra.mxu0 0.0
    %685 = vmatprep.subr.mxu0 0.0
    %686 = vmatpush1.xpose.msra.mxu0 0.0
    %687 = vmatprep.subr.mxu0 0.0
    %688 = vmatpush1.xpose.msra.mxu0 0.0
    %689 = vmatprep.subr.mxu0 0.0
    %690 = vmatpush1.xpose.msra.mxu0 0.0
    %691 = vmatprep.subr.mxu0 0.0
    %692 = vmatpush1.xpose.msra.mxu0 0.0
    %693 = vmatprep.subr.mxu0 0.0
    %694 = vmatpush1.xpose.msra.mxu0 0.0
    %695 = vmatprep.subr.mxu0 0.0
    %696 = vmatpush1.xpose.msra.mxu0 0.0
    %697 = vmatprep.subr.mxu0 0.0
    %698 = vmatpush1.xpose.msra.mxu0 0.0
    %699 = vmatprep.subr.mxu0 0.0
    %700 = vmatpush1.xpose.msra.mxu0 0.0
    %701 = vmatprep.subr.mxu0 0.0
    %702 = vmatpush1.xpose.msra.mxu0 0.0
    %703 = vmatprep.subr.mxu0 0.0
    %704 = vmatpush1.xpose.msra.mxu0 0.0
    %705 = vmatprep.subr.mxu0 0.0
    %706 = vmatpush1.xpose.msra.mxu0 0.0
    %707 = vmatprep.subr.mxu0 0.0
    %708 = vmatpush1.xpose.msra.mxu0 0.0
    %709 = vmatprep.subr.mxu0 0.0
    %710 = vmatpush1.xpose.msra.mxu0 0.0
    %711 = vmatprep.mubr.f32.mxu0 0.0
    %v712 = vand.u32 %v642, 4294901760
    %v713 = vsub.f32 %v642, %v712
    %v714 = vand.u32 %v713, 4294901760
    %v715 = vsub.f32 %v713, %v714
    %v716 = vand.u32 %v715, 4294901760
    %717 = vmatmul.mubr.f32.gmra.mrb[0].mxu0 %v716
    %v718 = vpop.f32.mrb[0].mxu0
    %v719 = vadd.f32 0.0, %v718
    %v720 = vpop.f32.mrb[0].mxu0
    %721 = vdwg.mxu0
    %722 = vmatprep.subr.mxu0 0.0
    %v723 = vand.u32 %v644, 4294901760
    %v724 = vsub.f32 %v644, %v723
    %v725 = vand.u32 %v724, 4294901760
    %v726 = vsub.f32 %v724, %v725
    %v727 = vand.u32 %v726, 4294901760
    %728 = vmatpush1.xpose.msra.mxu0 %v727
    %729 = vmatprep.subr.mxu0 0.0
    %730 = vmatpush1.xpose.msra.mxu0 0.0
    %731 = vmatprep.subr.mxu0 0.0
    %732 = vmatpush1.xpose.msra.mxu0 0.0
    %733 = vmatprep.subr.mxu0 0.0
    %734 = vmatpush1.xpose.msra.mxu0 0.0
    %735 = vmatprep.subr.mxu0 0.0
    %736 = vmatpush1.xpose.msra.mxu0 0.0
    %737 = vmatprep.subr.mxu0 0.0
    %738 = vmatpush1.xpose.msra.mxu0 0.0
    %739 = vmatprep.subr.mxu0 0.0
    %740 = vmatpush1.xpose.msra.mxu0 0.0
    %741 = vmatprep.subr.mxu0 0.0
    %742 = vmatpush1.xpose.msra.mxu0 0.0
    %743 = vmatprep.subr.mxu0 0.0
    %744 = vmatpush1.xpose.msra.mxu0 0.0
    %745 = vmatprep.subr.mxu0 0.0
    %746 = vmatpush1.xpose.msra.mxu0 0.0
    %747 = vmatprep.subr.mxu0 0.0
    %748 = vmatpush1.xpose.msra.mxu0 0.0
    %749 = vmatprep.subr.mxu0 0.0
    %750 = vmatpush1.xpose.msra.mxu0 0.0
    %751 = vmatprep.subr.mxu0 0.0
    %752 = vmatpush1.xpose.msra.mxu0 0.0
    %753 = vmatprep.subr.mxu0 0.0
    %754 = vmatpush1.xpose.msra.mxu0 0.0
    %755 = vmatprep.subr.mxu0 0.0
    %756 = vmatpush1.xpose.msra.mxu0 0.0
    %757 = vmatprep.subr.mxu0 0.0
    %758 = vmatpush1.xpose.msra.mxu0 0.0
    %759 = vmatprep.subr.mxu0 0.0
    %760 = vmatpush1.xpose.msra.mxu0 0.0
    %761 = vmatprep.subr.mxu0 0.0
    %762 = vmatpush1.xpose.msra.mxu0 0.0
    %763 = vmatprep.subr.mxu0 0.0
    %764 = vmatpush1.xpose.msra.mxu0 0.0
    %765 = vmatprep.subr.mxu0 0.0
    %766 = vmatpush1.xpose.msra.mxu0 0.0
    %767 = vmatprep.subr.mxu0 0.0
    %768 = vmatpush1.xpose.msra.mxu0 0.0
    %769 = vmatprep.subr.mxu0 0.0
    %770 = vmatpush1.xpose.msra.mxu0 0.0
    %771 = vmatprep.subr.mxu0 0.0
    %772 = vmatpush1.xpose.msra.mxu0 0.0
    %773 = vmatprep.subr.mxu0 0.0
    %774 = vmatpush1.xpose.msra.mxu0 0.0
    %775 = vmatprep.subr.mxu0 0.0
    %776 = vmatpush1.xpose.msra.mxu0 0.0
    %777 = vmatprep.subr.mxu0 0.0
    %778 = vmatpush1.xpose.msra.mxu0 0.0
    %779 = vmatprep.subr.mxu0 0.0
    %780 = vmatpush1.xpose.msra.mxu0 0.0
    %781 = vmatprep.subr.mxu0 0.0
    %782 = vmatpush1.xpose.msra.mxu0 0.0
    %783 = vmatprep.subr.mxu0 0.0
    %784 = vmatpush1.xpose.msra.mxu0 0.0
    %785 = vmatprep.subr.mxu0 0.0
    %786 = vmatpush1.xpose.msra.mxu0 0.0
    %787 = vmatprep.subr.mxu0 0.0
    %788 = vmatpush1.xpose.msra.mxu0 0.0
    %789 = vmatprep.subr.mxu0 0.0
    %790 = vmatpush1.xpose.msra.mxu0 0.0
    %791 = vmatprep.mubr.f32.mxu0 0.0
    %v792 = vand.u32 %v642, 4294901760
    %793 = vmatmul.mubr.f32.gmra.mrb[0].mxu0 %v792
    %v794 = vpop.f32.mrb[0].mxu0
    %v795 = vadd.f32 %v719, %v794
    %v796 = vpop.f32.mrb[0].mxu0
    %797 = vdwg.mxu0
    %798 = vmatprep.subr.mxu0 0.0
    %v799 = vand.u32 %v644, 4294901760
    %v800 = vsub.f32 %v644, %v799
    %801 = vmatpush1.xpose.msra.mxu0 %v800
    %802 = vmatprep.subr.mxu0 0.0
    %803 = vmatpush1.xpose.msra.mxu0 0.0
    %804 = vmatprep.subr.mxu0 0.0
    %805 = vmatpush1.xpose.msra.mxu0 0.0
    %806 = vmatprep.subr.mxu0 0.0
    %807 = vmatpush1.xpose.msra.mxu0 0.0
    %808 = vmatprep.subr.mxu0 0.0
    %809 = vmatpush1.xpose.msra.mxu0 0.0
    %810 = vmatprep.subr.mxu0 0.0
    %811 = vmatpush1.xpose.msra.mxu0 0.0
    %812 = vmatprep.subr.mxu0 0.0
    %813 = vmatpush1.xpose.msra.mxu0 0.0
    %814 = vmatprep.subr.mxu0 0.0
    %815 = vmatpush1.xpose.msra.mxu0 0.0
    %816 = vmatprep.subr.mxu0 0.0
    %817 = vmatpush1.xpose.msra.mxu0 0.0
    %818 = vmatprep.subr.mxu0 0.0
    %819 = vmatpush1.xpose.msra.mxu0 0.0
    %820 = vmatprep.subr.mxu0 0.0
    %821 = vmatpush1.xpose.msra.mxu0 0.0
    %822 = vmatprep.subr.mxu0 0.0
    %823 = vmatpush1.xpose.msra.mxu0 0.0
    %824 = vmatprep.subr.mxu0 0.0
    %825 = vmatpush1.xpose.msra.mxu0 0.0
    %826 = vmatprep.subr.mxu0 0.0
    %827 = vmatpush1.xpose.msra.mxu0 0.0
    %828 = vmatprep.subr.mxu0 0.0
    %829 = vmatpush1.xpose.msra.mxu0 0.0
    %830 = vmatprep.subr.mxu0 0.0
    %831 = vmatpush1.xpose.msra.mxu0 0.0
    %832 = vmatprep.subr.mxu0 0.0
    %833 = vmatpush1.xpose.msra.mxu0 0.0
    %834 = vmatprep.subr.mxu0 0.0
    %835 = vmatpush1.xpose.msra.mxu0 0.0
    %836 = vmatprep.subr.mxu0 0.0
    %837 = vmatpush1.xpose.msra.mxu0 0.0
    %838 = vmatprep.subr.mxu0 0.0
    %839 = vmatpush1.xpose.msra.mxu0 0.0
    %840 = vmatprep.subr.mxu0 0.0
    %841 = vmatpush1.xpose.msra.mxu0 0.0
    %842 = vmatprep.subr.mxu0 0.0
    %843 = vmatpush1.xpose.msra.mxu0 0.0
    %844 = vmatprep.subr.mxu0 0.0
    %845 = vmatpush1.xpose.msra.mxu0 0.0
    %846 = vmatprep.subr.mxu0 0.0
    %847 = vmatpush1.xpose.msra.mxu0 0.0
    %848 = vmatprep.subr.mxu0 0.0
    %849 = vmatpush1.xpose.msra.mxu0 0.0
    %850 = vmatprep.subr.mxu0 0.0
    %851 = vmatpush1.xpose.msra.mxu0 0.0
    %852 = vmatprep.subr.mxu0 0.0
    %853 = vmatpush1.xpose.msra.mxu0 0.0
    %854 = vmatprep.subr.mxu0 0.0
    %855 = vmatpush1.xpose.msra.mxu0 0.0
    %856 = vmatprep.subr.mxu0 0.0
    %857 = vmatpush1.xpose.msra.mxu0 0.0
    %858 = vmatprep.subr.mxu0 0.0
    %859 = vmatpush1.xpose.msra.mxu0 0.0
    %860 = vmatprep.subr.mxu0 0.0
    %861 = vmatpush1.xpose.msra.mxu0 0.0
    %862 = vmatprep.subr.mxu0 0.0
    %863 = vmatpush1.xpose.msra.mxu0 0.0
    %864 = vmatprep.mubr.f32.mxu0 0.0
    %v865 = vand.u32 %v642, 4294901760
    %v866 = vsub.f32 %v642, %v865
    %867 = vmatmul.mubr.f32.gmra.mrb[0].mxu0 %v866
    %v868 = vpop.f32.mrb[0].mxu0
    %v869 = vadd.f32 %v795, %v868
    %v870 = vpop.f32.mrb[0].mxu0
    %871 = vdwg.mxu0
    %872 = vmatprep.subr.mxu0 0.0
    %v873 = vand.u32 %v644, 4294901760
    %874 = vmatpush1.xpose.msra.mxu0 %v873
    %875 = vmatprep.subr.mxu0 0.0
    %876 = vmatpush1.xpose.msra.mxu0 0.0
    %877 = vmatprep.subr.mxu0 0.0
    %878 = vmatpush1.xpose.msra.mxu0 0.0
    %879 = vmatprep.subr.mxu0 0.0
    %880 = vmatpush1.xpose.msra.mxu0 0.0
    %881 = vmatprep.subr.mxu0 0.0
    %882 = vmatpush1.xpose.msra.mxu0 0.0
    %883 = vmatprep.subr.mxu0 0.0
    %884 = vmatpush1.xpose.msra.mxu0 0.0
    %885 = vmatprep.subr.mxu0 0.0
    %886 = vmatpush1.xpose.msra.mxu0 0.0
    %887 = vmatprep.subr.mxu0 0.0
    %888 = vmatpush1.xpose.msra.mxu0 0.0
    %889 = vmatprep.subr.mxu0 0.0
    %890 = vmatpush1.xpose.msra.mxu0 0.0
    %891 = vmatprep.subr.mxu0 0.0
    %892 = vmatpush1.xpose.msra.mxu0 0.0
    %893 = vmatprep.subr.mxu0 0.0
    %894 = vmatpush1.xpose.msra.mxu0 0.0
    %895 = vmatprep.subr.mxu0 0.0
    %896 = vmatpush1.xpose.msra.mxu0 0.0
    %897 = vmatprep.subr.mxu0 0.0
    %898 = vmatpush1.xpose.msra.mxu0 0.0
    %899 = vmatprep.subr.mxu0 0.0
    %900 = vmatpush1.xpose.msra.mxu0 0.0
    %901 = vmatprep.subr.mxu0 0.0
    %902 = vmatpush1.xpose.msra.mxu0 0.0
    %903 = vmatprep.subr.mxu0 0.0
    %904 = vmatpush1.xpose.msra.mxu0 0.0
    %905 = vmatprep.subr.mxu0 0.0
    %906 = vmatpush1.xpose.msra.mxu0 0.0
    %907 = vmatprep.subr.mxu0 0.0
    %908 = vmatpush1.xpose.msra.mxu0 0.0
    %909 = vmatprep.subr.mxu0 0.0
    %910 = vmatpush1.xpose.msra.mxu0 0.0
    %911 = vmatprep.subr.mxu0 0.0
    %912 = vmatpush1.xpose.msra.mxu0 0.0
    %913 = vmatprep.subr.mxu0 0.0
    %914 = vmatpush1.xpose.msra.mxu0 0.0
    %915 = vmatprep.subr.mxu0 0.0
    %916 = vmatpush1.xpose.msra.mxu0 0.0
    %917 = vmatprep.subr.mxu0 0.0
    %918 = vmatpush1.xpose.msra.mxu0 0.0
    %919 = vmatprep.subr.mxu0 0.0
    %920 = vmatpush1.xpose.msra.mxu0 0.0
    %921 = vmatprep.subr.mxu0 0.0
    %922 = vmatpush1.xpose.msra.mxu0 0.0
    %923 = vmatprep.subr.mxu0 0.0
    %924 = vmatpush1.xpose.msra.mxu0 0.0
    %925 = vmatprep.subr.mxu0 0.0
    %926 = vmatpush1.xpose.msra.mxu0 0.0
    %927 = vmatprep.subr.mxu0 0.0
    %928 = vmatpush1.xpose.msra.mxu0 0.0
    %929 = vmatprep.subr.mxu0 0.0
    %930 = vmatpush1.xpose.msra.mxu0 0.0
    %931 = vmatprep.subr.mxu0 0.0
    %932 = vmatpush1.xpose.msra.mxu0 0.0
    %933 = vmatprep.subr.mxu0 0.0
    %934 = vmatpush1.xpose.msra.mxu0 0.0
    %935 = vmatprep.subr.mxu0 0.0
    %936 = vmatpush1.xpose.msra.mxu0 0.0
    %937 = vmatprep.mubr.f32.mxu0 0.0
    %v938 = vand.u32 %v642, 4294901760
    %v939 = vsub.f32 %v642, %v938
    %v940 = vand.u32 %v939, 4294901760
    %941 = vmatmul.mubr.f32.gmra.mrb[0].mxu0 %v940
    %v942 = vpop.f32.mrb[0].mxu0
    %v943 = vadd.f32 %v869, %v942
    %v944 = vpop.f32.mrb[0].mxu0
    %945 = vdwg.mxu0
    %946 = vmatprep.subr.mxu0 0.0
    %v947 = vand.u32 %v644, 4294901760
    %v948 = vsub.f32 %v644, %v947
    %v949 = vand.u32 %v948, 4294901760
    %950 = vmatpush1.xpose.msra.mxu0 %v949
    %951 = vmatprep.subr.mxu0 0.0
    %952 = vmatpush1.xpose.msra.mxu0 0.0
    %953 = vmatprep.subr.mxu0 0.0
    %954 = vmatpush1.xpose.msra.mxu0 0.0
    %955 = vmatprep.subr.mxu0 0.0
    %956 = vmatpush1.xpose.msra.mxu0 0.0
    %957 = vmatprep.subr.mxu0 0.0
    %958 = vmatpush1.xpose.msra.mxu0 0.0
    %959 = vmatprep.subr.mxu0 0.0
    %960 = vmatpush1.xpose.msra.mxu0 0.0
    %961 = vmatprep.subr.mxu0 0.0
    %962 = vmatpush1.xpose.msra.mxu0 0.0
    %963 = vmatprep.subr.mxu0 0.0
    %964 = vmatpush1.xpose.msra.mxu0 0.0
    %965 = vmatprep.subr.mxu0 0.0
    %966 = vmatpush1.xpose.msra.mxu0 0.0
    %967 = vmatprep.subr.mxu0 0.0
    %968 = vmatpush1.xpose.msra.mxu0 0.0
    %969 = vmatprep.subr.mxu0 0.0
    %970 = vmatpush1.xpose.msra.mxu0 0.0
    %971 = vmatprep.subr.mxu0 0.0
    %972 = vmatpush1.xpose.msra.mxu0 0.0
    %973 = vmatprep.subr.mxu0 0.0
    %974 = vmatpush1.xpose.msra.mxu0 0.0
    %975 = vmatprep.subr.mxu0 0.0
    %976 = vmatpush1.xpose.msra.mxu0 0.0
    %977 = vmatprep.subr.mxu0 0.0
    %978 = vmatpush1.xpose.msra.mxu0 0.0
    %979 = vmatprep.subr.mxu0 0.0
    %980 = vmatpush1.xpose.msra.mxu0 0.0
    %981 = vmatprep.subr.mxu0 0.0
    %982 = vmatpush1.xpose.msra.mxu0 0.0
    %983 = vmatprep.subr.mxu0 0.0
    %984 = vmatpush1.xpose.msra.mxu0 0.0
    %985 = vmatprep.subr.mxu0 0.0
    %986 = vmatpush1.xpose.msra.mxu0 0.0
    %987 = vmatprep.subr.mxu0 0.0
    %988 = vmatpush1.xpose.msra.mxu0 0.0
    %989 = vmatprep.subr.mxu0 0.0
    %990 = vmatpush1.xpose.msra.mxu0 0.0
    %991 = vmatprep.subr.mxu0 0.0
    %992 = vmatpush1.xpose.msra.mxu0 0.0
    %993 = vmatprep.subr.mxu0 0.0
    %994 = vmatpush1.xpose.msra.mxu0 0.0
    %995 = vmatprep.subr.mxu0 0.0
    %996 = vmatpush1.xpose.msra.mxu0 0.0
    %997 = vmatprep.subr.mxu0 0.0
    %998 = vmatpush1.xpose.msra.mxu0 0.0
    %999 = vmatprep.subr.mxu0 0.0
    %1000 = vmatpush1.xpose.msra.mxu0 0.0
    %1001 = vmatprep.subr.mxu0 0.0
    %1002 = vmatpush1.xpose.msra.mxu0 0.0
    %1003 = vmatprep.subr.mxu0 0.0
    %1004 = vmatpush1.xpose.msra.mxu0 0.0
    %1005 = vmatprep.subr.mxu0 0.0
    %1006 = vmatpush1.xpose.msra.mxu0 0.0
    %1007 = vmatprep.subr.mxu0 0.0
    %1008 = vmatpush1.xpose.msra.mxu0 0.0
    %1009 = vmatprep.subr.mxu0 0.0
    %1010 = vmatpush1.xpose.msra.mxu0 0.0
    %1011 = vmatprep.subr.mxu0 0.0
    %1012 = vmatpush1.xpose.msra.mxu0 0.0
    %1013 = vmatprep.mubr.f32.mxu0 0.0
    %v1014 = vand.u32 %v642, 4294901760
    %1015 = vmatmul.mubr.f32.gmra.mrb[0].mxu0 %v1014
    %v1016 = vpop.f32.mrb[0].mxu0
    %v1017 = vadd.f32 %v943, %v1016
    %v1018 = vpop.f32.mrb[0].mxu0
    %1019 = vdwg.mxu0
    %1020 = vmatprep.subr.mxu0 0.0
    %v1021 = vand.u32 %v644, 4294901760
    %1022 = vmatpush1.xpose.msra.mxu0 %v1021
    %1023 = vmatprep.subr.mxu0 0.0
    %1024 = vmatpush1.xpose.msra.mxu0 0.0
    %1025 = vmatprep.subr.mxu0 0.0
    %1026 = vmatpush1.xpose.msra.mxu0 0.0
    %1027 = vmatprep.subr.mxu0 0.0
    %1028 = vmatpush1.xpose.msra.mxu0 0.0
    %1029 = vmatprep.subr.mxu0 0.0
    %1030 = vmatpush1.xpose.msra.mxu0 0.0
    %1031 = vmatprep.subr.mxu0 0.0
    %1032 = vmatpush1.xpose.msra.mxu0 0.0
    %1033 = vmatprep.subr.mxu0 0.0
    %1034 = vmatpush1.xpose.msra.mxu0 0.0
    %1035 = vmatprep.subr.mxu0 0.0
    %1036 = vmatpush1.xpose.msra.mxu0 0.0
    %1037 = vmatprep.subr.mxu0 0.0
    %1038 = vmatpush1.xpose.msra.mxu0 0.0
    %1039 = vmatprep.subr.mxu0 0.0
    %1040 = vmatpush1.xpose.msra.mxu0 0.0
    %1041 = vmatprep.subr.mxu0 0.0
    %1042 = vmatpush1.xpose.msra.mxu0 0.0
    %1043 = vmatprep.subr.mxu0 0.0
    %1044 = vmatpush1.xpose.msra.mxu0 0.0
    %1045 = vmatprep.subr.mxu0 0.0
    %1046 = vmatpush1.xpose.msra.mxu0 0.0
    %1047 = vmatprep.subr.mxu0 0.0
    %1048 = vmatpush1.xpose.msra.mxu0 0.0
    %1049 = vmatprep.subr.mxu0 0.0
    %1050 = vmatpush1.xpose.msra.mxu0 0.0
    %1051 = vmatprep.subr.mxu0 0.0
    %1052 = vmatpush1.xpose.msra.mxu0 0.0
    %1053 = vmatprep.subr.mxu0 0.0
    %1054 = vmatpush1.xpose.msra.mxu0 0.0
    %1055 = vmatprep.subr.mxu0 0.0
    %1056 = vmatpush1.xpose.msra.mxu0 0.0
    %1057 = vmatprep.subr.mxu0 0.0
    %1058 = vmatpush1.xpose.msra.mxu0 0.0
    %1059 = vmatprep.subr.mxu0 0.0
    %1060 = vmatpush1.xpose.msra.mxu0 0.0
    %1061 = vmatprep.subr.mxu0 0.0
    %1062 = vmatpush1.xpose.msra.mxu0 0.0
    %1063 = vmatprep.subr.mxu0 0.0
    %1064 = vmatpush1.xpose.msra.mxu0 0.0
    %1065 = vmatprep.subr.mxu0 0.0
    %1066 = vmatpush1.xpose.msra.mxu0 0.0
    %1067 = vmatprep.subr.mxu0 0.0
    %1068 = vmatpush1.xpose.msra.mxu0 0.0
    %1069 = vmatprep.subr.mxu0 0.0
    %1070 = vmatpush1.xpose.msra.mxu0 0.0
    %1071 = vmatprep.subr.mxu0 0.0
    %1072 = vmatpush1.xpose.msra.mxu0 0.0
    %1073 = vmatprep.subr.mxu0 0.0
    %1074 = vmatpush1.xpose.msra.mxu0 0.0
    %1075 = vmatprep.subr.mxu0 0.0
    %1076 = vmatpush1.xpose.msra.mxu0 0.0
    %1077 = vmatprep.subr.mxu0 0.0
    %1078 = vmatpush1.xpose.msra.mxu0 0.0
    %1079 = vmatprep.subr.mxu0 0.0
    %1080 = vmatpush1.xpose.msra.mxu0 0.0
    %1081 = vmatprep.subr.mxu0 0.0
    %1082 = vmatpush1.xpose.msra.mxu0 0.0
    %1083 = vmatprep.subr.mxu0 0.0
    %1084 = vmatpush1.xpose.msra.mxu0 0.0
    %1085 = vmatprep.mubr.f32.mxu0 0.0
    %v1086 = vand.u32 %v642, 4294901760
    %1087 = vmatmul.mubr.f32.gmra.mrb[0].mxu0 %v1086
    %v1088 = vpop.f32.mrb[0].mxu0
    %v1089 = vadd.f32 %v1017, %v1088
    %v1090 = vpop.f32.mrb[0].mxu0
    %1091 = vdwg.mxu0
    %1092 = vrot.lane.b32.xlu0 %v630, 96
    %v1093 = vpop.permute.xlu0 %1092
    %v1094 = vsel %vm641, %v630, 0
    %v1096 = vsel %vm641, %v1093, 0
    %1098 = vmatprep.subr.mxu0 0.0
    %v1099 = vand.u32 %v1096, 4294901760
    %1100 = vmatpush1.xpose.msra.mxu0 %v1099
    %1101 = vmatprep.subr.mxu0 0.0
    %1102 = vmatpush1.xpose.msra.mxu0 0.0
    %1103 = vmatprep.subr.mxu0 0.0
    %1104 = vmatpush1.xpose.msra.mxu0 0.0
    %1105 = vmatprep.subr.mxu0 0.0
    %1106 = vmatpush1.xpose.msra.mxu0 0.0
    %1107 = vmatprep.subr.mxu0 0.0
    %1108 = vmatpush1.xpose.msra.mxu0 0.0
    %1109 = vmatprep.subr.mxu0 0.0
    %1110 = vmatpush1.xpose.msra.mxu0 0.0
    %1111 = vmatprep.subr.mxu0 0.0
    %1112 = vmatpush1.xpose.msra.mxu0 0.0
    %1113 = vmatprep.subr.mxu0 0.0
    %1114 = vmatpush1.xpose.msra.mxu0 0.0
    %1115 = vmatprep.subr.mxu0 0.0
    %1116 = vmatpush1.xpose.msra.mxu0 0.0
    %1117 = vmatprep.subr.mxu0 0.0
    %1118 = vmatpush1.xpose.msra.mxu0 0.0
    %1119 = vmatprep.subr.mxu0 0.0
    %1120 = vmatpush1.xpose.msra.mxu0 0.0
    %1121 = vmatprep.subr.mxu0 0.0
    %1122 = vmatpush1.xpose.msra.mxu0 0.0
    %1123 = vmatprep.subr.mxu0 0.0
    %1124 = vmatpush1.xpose.msra.mxu0 0.0
    %1125 = vmatprep.subr.mxu0 0.0
    %1126 = vmatpush1.xpose.msra.mxu0 0.0
    %1127 = vmatprep.subr.mxu0 0.0
    %1128 = vmatpush1.xpose.msra.mxu0 0.0
    %1129 = vmatprep.subr.mxu0 0.0
    %1130 = vmatpush1.xpose.msra.mxu0 0.0
    %1131 = vmatprep.subr.mxu0 0.0
    %1132 = vmatpush1.xpose.msra.mxu0 0.0
    %1133 = vmatprep.subr.mxu0 0.0
    %1134 = vmatpush1.xpose.msra.mxu0 0.0
    %1135 = vmatprep.subr.mxu0 0.0
    %1136 = vmatpush1.xpose.msra.mxu0 0.0
    %1137 = vmatprep.subr.mxu0 0.0
    %1138 = vmatpush1.xpose.msra.mxu0 0.0
    %1139 = vmatprep.subr.mxu0 0.0
    %1140 = vmatpush1.xpose.msra.mxu0 0.0
    %1141 = vmatprep.subr.mxu0 0.0
    %1142 = vmatpush1.xpose.msra.mxu0 0.0
    %1143 = vmatprep.subr.mxu0 0.0
    %1144 = vmatpush1.xpose.msra.mxu0 0.0
    %1145 = vmatprep.subr.mxu0 0.0
    %1146 = vmatpush1.xpose.msra.mxu0 0.0
    %1147 = vmatprep.subr.mxu0 0.0
    %1148 = vmatpush1.xpose.msra.mxu0 0.0
    %1149 = vmatprep.subr.mxu0 0.0
    %1150 = vmatpush1.xpose.msra.mxu0 0.0
    %1151 = vmatprep.subr.mxu0 0.0
    %1152 = vmatpush1.xpose.msra.mxu0 0.0
    %1153 = vmatprep.subr.mxu0 0.0
    %1154 = vmatpush1.xpose.msra.mxu0 0.0
    %1155 = vmatprep.subr.mxu0 0.0
    %1156 = vmatpush1.xpose.msra.mxu0 0.0
    %1157 = vmatprep.subr.mxu0 0.0
    %1158 = vmatpush1.xpose.msra.mxu0 0.0
    %1159 = vmatprep.subr.mxu0 0.0
    %1160 = vmatpush1.xpose.msra.mxu0 0.0
    %1161 = vmatprep.subr.mxu0 0.0
    %1162 = vmatpush1.xpose.msra.mxu0 0.0
    %1163 = vmatprep.mubr.f32.mxu0 0.0
    %v1164 = vand.u32 %v1094, 4294901760
    %v1165 = vsub.f32 %v1094, %v1164
    %v1166 = vand.u32 %v1165, 4294901760
    %v1167 = vsub.f32 %v1165, %v1166
    %v1168 = vand.u32 %v1167, 4294901760
    %1169 = vmatmul.mubr.f32.gmra.mrb[0].mxu0 %v1168
    %v1170 = vpop.f32.mrb[0].mxu0
    %v1171 = vadd.f32 0.0, %v1170
    %v1172 = vpop.f32.mrb[0].mxu0
    %1173 = vdwg.mxu0
    %1174 = vmatprep.subr.mxu0 0.0
    %v1175 = vand.u32 %v1096, 4294901760
    %v1176 = vsub.f32 %v1096, %v1175
    %v1177 = vand.u32 %v1176, 4294901760
    %v1178 = vsub.f32 %v1176, %v1177
    %v1179 = vand.u32 %v1178, 4294901760
    %1180 = vmatpush1.xpose.msra.mxu0 %v1179
    %1181 = vmatprep.subr.mxu0 0.0
    %1182 = vmatpush1.xpose.msra.mxu0 0.0
    %1183 = vmatprep.subr.mxu0 0.0
    %1184 = vmatpush1.xpose.msra.mxu0 0.0
    %1185 = vmatprep.subr.mxu0 0.0
    %1186 = vmatpush1.xpose.msra.mxu0 0.0
    %1187 = vmatprep.subr.mxu0 0.0
    %1188 = vmatpush1.xpose.msra.mxu0 0.0
    %1189 = vmatprep.subr.mxu0 0.0
    %1190 = vmatpush1.xpose.msra.mxu0 0.0
    %1191 = vmatprep.subr.mxu0 0.0
    %1192 = vmatpush1.xpose.msra.mxu0 0.0
    %1193 = vmatprep.subr.mxu0 0.0
    %1194 = vmatpush1.xpose.msra.mxu0 0.0
    %1195 = vmatprep.subr.mxu0 0.0
    %1196 = vmatpush1.xpose.msra.mxu0 0.0
    %1197 = vmatprep.subr.mxu0 0.0
    %1198 = vmatpush1.xpose.msra.mxu0 0.0
    %1199 = vmatprep.subr.mxu0 0.0
    %1200 = vmatpush1.xpose.msra.mxu0 0.0
    %1201 = vmatprep.subr.mxu0 0.0
    %1202 = vmatpush1.xpose.msra.mxu0 0.0
    %1203 = vmatprep.subr.mxu0 0.0
    %1204 = vmatpush1.xpose.msra.mxu0 0.0
    %1205 = vmatprep.subr.mxu0 0.0
    %1206 = vmatpush1.xpose.msra.mxu0 0.0
    %1207 = vmatprep.subr.mxu0 0.0
    %1208 = vmatpush1.xpose.msra.mxu0 0.0
    %1209 = vmatprep.subr.mxu0 0.0
    %1210 = vmatpush1.xpose.msra.mxu0 0.0
    %1211 = vmatprep.subr.mxu0 0.0
    %1212 = vmatpush1.xpose.msra.mxu0 0.0
    %1213 = vmatprep.subr.mxu0 0.0
    %1214 = vmatpush1.xpose.msra.mxu0 0.0
    %1215 = vmatprep.subr.mxu0 0.0
    %1216 = vmatpush1.xpose.msra.mxu0 0.0
    %1217 = vmatprep.subr.mxu0 0.0
    %1218 = vmatpush1.xpose.msra.mxu0 0.0
    %1219 = vmatprep.subr.mxu0 0.0
    %1220 = vmatpush1.xpose.msra.mxu0 0.0
    %1221 = vmatprep.subr.mxu0 0.0
    %1222 = vmatpush1.xpose.msra.mxu0 0.0
    %1223 = vmatprep.subr.mxu0 0.0
    %1224 = vmatpush1.xpose.msra.mxu0 0.0
    %1225 = vmatprep.subr.mxu0 0.0
    %1226 = vmatpush1.xpose.msra.mxu0 0.0
    %1227 = vmatprep.subr.mxu0 0.0
    %1228 = vmatpush1.xpose.msra.mxu0 0.0
    %1229 = vmatprep.subr.mxu0 0.0
    %1230 = vmatpush1.xpose.msra.mxu0 0.0
    %1231 = vmatprep.subr.mxu0 0.0
    %1232 = vmatpush1.xpose.msra.mxu0 0.0
    %1233 = vmatprep.subr.mxu0 0.0
    %1234 = vmatpush1.xpose.msra.mxu0 0.0
    %1235 = vmatprep.subr.mxu0 0.0
    %1236 = vmatpush1.xpose.msra.mxu0 0.0
    %1237 = vmatprep.subr.mxu0 0.0
    %1238 = vmatpush1.xpose.msra.mxu0 0.0
    %1239 = vmatprep.subr.mxu0 0.0
    %1240 = vmatpush1.xpose.msra.mxu0 0.0
    %1241 = vmatprep.subr.mxu0 0.0
    %1242 = vmatpush1.xpose.msra.mxu0 0.0
    %1243 = vmatprep.mubr.f32.mxu0 0.0
    %v1244 = vand.u32 %v1094, 4294901760
    %1245 = vmatmul.mubr.f32.gmra.mrb[0].mxu0 %v1244
    %v1246 = vpop.f32.mrb[0].mxu0
    %v1247 = vadd.f32 %v1171, %v1246
    %v1248 = vpop.f32.mrb[0].mxu0
    %1249 = vdwg.mxu0
    %1250 = vmatprep.subr.mxu0 0.0
    %v1251 = vand.u32 %v1096, 4294901760
    %v1252 = vsub.f32 %v1096, %v1251
    %1253 = vmatpush1.xpose.msra.mxu0 %v1252
    %1254 = vmatprep.subr.mxu0 0.0
    %1255 = vmatpush1.xpose.msra.mxu0 0.0
    %1256 = vmatprep.subr.mxu0 0.0
    %1257 = vmatpush1.xpose.msra.mxu0 0.0
    %1258 = vmatprep.subr.mxu0 0.0
    %1259 = vmatpush1.xpose.msra.mxu0 0.0
    %1260 = vmatprep.subr.mxu0 0.0
    %1261 = vmatpush1.xpose.msra.mxu0 0.0
    %1262 = vmatprep.subr.mxu0 0.0
    %1263 = vmatpush1.xpose.msra.mxu0 0.0
    %1264 = vmatprep.subr.mxu0 0.0
    %1265 = vmatpush1.xpose.msra.mxu0 0.0
    %1266 = vmatprep.subr.mxu0 0.0
    %1267 = vmatpush1.xpose.msra.mxu0 0.0
    %1268 = vmatprep.subr.mxu0 0.0
    %1269 = vmatpush1.xpose.msra.mxu0 0.0
    %1270 = vmatprep.subr.mxu0 0.0
    %1271 = vmatpush1.xpose.msra.mxu0 0.0
    %1272 = vmatprep.subr.mxu0 0.0
    %1273 = vmatpush1.xpose.msra.mxu0 0.0
    %1274 = vmatprep.subr.mxu0 0.0
    %1275 = vmatpush1.xpose.msra.mxu0 0.0
    %1276 = vmatprep.subr.mxu0 0.0
    %1277 = vmatpush1.xpose.msra.mxu0 0.0
    %1278 = vmatprep.subr.mxu0 0.0
    %1279 = vmatpush1.xpose.msra.mxu0 0.0
    %1280 = vmatprep.subr.mxu0 0.0
    %1281 = vmatpush1.xpose.msra.mxu0 0.0
    %1282 = vmatprep.subr.mxu0 0.0
    %1283 = vmatpush1.xpose.msra.mxu0 0.0
    %1284 = vmatprep.subr.mxu0 0.0
    %1285 = vmatpush1.xpose.msra.mxu0 0.0
    %1286 = vmatprep.subr.mxu0 0.0
    %1287 = vmatpush1.xpose.msra.mxu0 0.0
    %1288 = vmatprep.subr.mxu0 0.0
    %1289 = vmatpush1.xpose.msra.mxu0 0.0
    %1290 = vmatprep.subr.mxu0 0.0
    %1291 = vmatpush1.xpose.msra.mxu0 0.0
    %1292 = vmatprep.subr.mxu0 0.0
    %1293 = vmatpush1.xpose.msra.mxu0 0.0
    %1294 = vmatprep.subr.mxu0 0.0
    %1295 = vmatpush1.xpose.msra.mxu0 0.0
    %1296 = vmatprep.subr.mxu0 0.0
    %1297 = vmatpush1.xpose.msra.mxu0 0.0
    %1298 = vmatprep.subr.mxu0 0.0
    %1299 = vmatpush1.xpose.msra.mxu0 0.0
    %1300 = vmatprep.subr.mxu0 0.0
    %1301 = vmatpush1.xpose.msra.mxu0 0.0
    %1302 = vmatprep.subr.mxu0 0.0
    %1303 = vmatpush1.xpose.msra.mxu0 0.0
    %1304 = vmatprep.subr.mxu0 0.0
    %1305 = vmatpush1.xpose.msra.mxu0 0.0
    %1306 = vmatprep.subr.mxu0 0.0
    %1307 = vmatpush1.xpose.msra.mxu0 0.0
    %1308 = vmatprep.subr.mxu0 0.0
    %1309 = vmatpush1.xpose.msra.mxu0 0.0
    %1310 = vmatprep.subr.mxu0 0.0
    %1311 = vmatpush1.xpose.msra.mxu0 0.0
    %1312 = vmatprep.subr.mxu0 0.0
    %1313 = vmatpush1.xpose.msra.mxu0 0.0
    %1314 = vmatprep.subr.mxu0 0.0
    %1315 = vmatpush1.xpose.msra.mxu0 0.0
    %1316 = vmatprep.mubr.f32.mxu0 0.0
    %v1317 = vand.u32 %v1094, 4294901760
    %v1318 = vsub.f32 %v1094, %v1317
    %1319 = vmatmul.mubr.f32.gmra.mrb[0].mxu0 %v1318
    %v1320 = vpop.f32.mrb[0].mxu0
    %v1321 = vadd.f32 %v1247, %v1320
    %v1322 = vpop.f32.mrb[0].mxu0
    %1323 = vdwg.mxu0
    %1324 = vmatprep.subr.mxu0 0.0
    %v1325 = vand.u32 %v1096, 4294901760
    %1326 = vmatpush1.xpose.msra.mxu0 %v1325
    %1327 = vmatprep.subr.mxu0 0.0
    %1328 = vmatpush1.xpose.msra.mxu0 0.0
    %1329 = vmatprep.subr.mxu0 0.0
    %1330 = vmatpush1.xpose.msra.mxu0 0.0
    %1331 = vmatprep.subr.mxu0 0.0
    %1332 = vmatpush1.xpose.msra.mxu0 0.0
    %1333 = vmatprep.subr.mxu0 0.0
    %1334 = vmatpush1.xpose.msra.mxu0 0.0
    %1335 = vmatprep.subr.mxu0 0.0
    %1336 = vmatpush1.xpose.msra.mxu0 0.0
    %1337 = vmatprep.subr.mxu0 0.0
    %1338 = vmatpush1.xpose.msra.mxu0 0.0
    %1339 = vmatprep.subr.mxu0 0.0
    %1340 = vmatpush1.xpose.msra.mxu0 0.0
    %1341 = vmatprep.subr.mxu0 0.0
    %1342 = vmatpush1.xpose.msra.mxu0 0.0
    %1343 = vmatprep.subr.mxu0 0.0
    %1344 = vmatpush1.xpose.msra.mxu0 0.0
    %1345 = vmatprep.subr.mxu0 0.0
    %1346 = vmatpush1.xpose.msra.mxu0 0.0
    %1347 = vmatprep.subr.mxu0 0.0
    %1348 = vmatpush1.xpose.msra.mxu0 0.0
    %1349 = vmatprep.subr.mxu0 0.0
    %1350 = vmatpush1.xpose.msra.mxu0 0.0
    %1351 = vmatprep.subr.mxu0 0.0
    %1352 = vmatpush1.xpose.msra.mxu0 0.0
    %1353 = vmatprep.subr.mxu0 0.0
    %1354 = vmatpush1.xpose.msra.mxu0 0.0
    %1355 = vmatprep.subr.mxu0 0.0
    %1356 = vmatpush1.xpose.msra.mxu0 0.0
    %1357 = vmatprep.subr.mxu0 0.0
    %1358 = vmatpush1.xpose.msra.mxu0 0.0
    %1359 = vmatprep.subr.mxu0 0.0
    %1360 = vmatpush1.xpose.msra.mxu0 0.0
    %1361 = vmatprep.subr.mxu0 0.0
    %1362 = vmatpush1.xpose.msra.mxu0 0.0
    %1363 = vmatprep.subr.mxu0 0.0
    %1364 = vmatpush1.xpose.msra.mxu0 0.0
    %1365 = vmatprep.subr.mxu0 0.0
    %1366 = vmatpush1.xpose.msra.mxu0 0.0
    %1367 = vmatprep.subr.mxu0 0.0
    %1368 = vmatpush1.xpose.msra.mxu0 0.0
    %1369 = vmatprep.subr.mxu0 0.0
    %1370 = vmatpush1.xpose.msra.mxu0 0.0
    %1371 = vmatprep.subr.mxu0 0.0
    %1372 = vmatpush1.xpose.msra.mxu0 0.0
    %1373 = vmatprep.subr.mxu0 0.0
    %1374 = vmatpush1.xpose.msra.mxu0 0.0
    %1375 = vmatprep.subr.mxu0 0.0
    %1376 = vmatpush1.xpose.msra.mxu0 0.0
    %1377 = vmatprep.subr.mxu0 0.0
    %1378 = vmatpush1.xpose.msra.mxu0 0.0
    %1379 = vmatprep.subr.mxu0 0.0
    %1380 = vmatpush1.xpose.msra.mxu0 0.0
    %1381 = vmatprep.subr.mxu0 0.0
    %1382 = vmatpush1.xpose.msra.mxu0 0.0
    %1383 = vmatprep.subr.mxu0 0.0
    %1384 = vmatpush1.xpose.msra.mxu0 0.0
    %1385 = vmatprep.subr.mxu0 0.0
    %1386 = vmatpush1.xpose.msra.mxu0 0.0
    %1387 = vmatprep.subr.mxu0 0.0
    %1388 = vmatpush1.xpose.msra.mxu0 0.0
    %1389 = vmatprep.mubr.f32.mxu0 0.0
    %v1390 = vand.u32 %v1094, 4294901760
    %v1391 = vsub.f32 %v1094, %v1390
    %v1392 = vand.u32 %v1391, 4294901760
    %1393 = vmatmul.mubr.f32.gmra.mrb[0].mxu0 %v1392
    %v1394 = vpop.f32.mrb[0].mxu0
    %v1395 = vadd.f32 %v1321, %v1394
    %v1396 = vpop.f32.mrb[0].mxu0
    %1397 = vdwg.mxu0
    %1398 = vmatprep.subr.mxu0 0.0
    %v1399 = vand.u32 %v1096, 4294901760
    %v1400 = vsub.f32 %v1096, %v1399
    %v1401 = vand.u32 %v1400, 4294901760
    %1402 = vmatpush1.xpose.msra.mxu0 %v1401
    %1403 = vmatprep.subr.mxu0 0.0
    %1404 = vmatpush1.xpose.msra.mxu0 0.0
    %1405 = vmatprep.subr.mxu0 0.0
    %1406 = vmatpush1.xpose.msra.mxu0 0.0
    %1407 = vmatprep.subr.mxu0 0.0
    %1408 = vmatpush1.xpose.msra.mxu0 0.0
    %1409 = vmatprep.subr.mxu0 0.0
    %1410 = vmatpush1.xpose.msra.mxu0 0.0
    %1411 = vmatprep.subr.mxu0 0.0
    %1412 = vmatpush1.xpose.msra.mxu0 0.0
    %1413 = vmatprep.subr.mxu0 0.0
    %1414 = vmatpush1.xpose.msra.mxu0 0.0
    %1415 = vmatprep.subr.mxu0 0.0
    %1416 = vmatpush1.xpose.msra.mxu0 0.0
    %1417 = vmatprep.subr.mxu0 0.0
    %1418 = vmatpush1.xpose.msra.mxu0 0.0
    %1419 = vmatprep.subr.mxu0 0.0
    %1420 = vmatpush1.xpose.msra.mxu0 0.0
    %1421 = vmatprep.subr.mxu0 0.0
    %1422 = vmatpush1.xpose.msra.mxu0 0.0
    %1423 = vmatprep.subr.mxu0 0.0
    %1424 = vmatpush1.xpose.msra.mxu0 0.0
    %1425 = vmatprep.subr.mxu0 0.0
    %1426 = vmatpush1.xpose.msra.mxu0 0.0
    %1427 = vmatprep.subr.mxu0 0.0
    %1428 = vmatpush1.xpose.msra.mxu0 0.0
    %1429 = vmatprep.subr.mxu0 0.0
    %1430 = vmatpush1.xpose.msra.mxu0 0.0
    %1431 = vmatprep.subr.mxu0 0.0
    %1432 = vmatpush1.xpose.msra.mxu0 0.0
    %1433 = vmatprep.subr.mxu0 0.0
    %1434 = vmatpush1.xpose.msra.mxu0 0.0
    %1435 = vmatprep.subr.mxu0 0.0
    %1436 = vmatpush1.xpose.msra.mxu0 0.0
    %1437 = vmatprep.subr.mxu0 0.0
    %1438 = vmatpush1.xpose.msra.mxu0 0.0
    %1439 = vmatprep.subr.mxu0 0.0
    %1440 = vmatpush1.xpose.msra.mxu0 0.0
    %1441 = vmatprep.subr.mxu0 0.0
    %1442 = vmatpush1.xpose.msra.mxu0 0.0
    %1443 = vmatprep.subr.mxu0 0.0
    %1444 = vmatpush1.xpose.msra.mxu0 0.0
    %1445 = vmatprep.subr.mxu0 0.0
    %1446 = vmatpush1.xpose.msra.mxu0 0.0
    %1447 = vmatprep.subr.mxu0 0.0
    %1448 = vmatpush1.xpose.msra.mxu0 0.0
    %1449 = vmatprep.subr.mxu0 0.0
    %1450 = vmatpush1.xpose.msra.mxu0 0.0
    %1451 = vmatprep.subr.mxu0 0.0
    %1452 = vmatpush1.xpose.msra.mxu0 0.0
    %1453 = vmatprep.subr.mxu0 0.0
    %1454 = vmatpush1.xpose.msra.mxu0 0.0
    %1455 = vmatprep.subr.mxu0 0.0
    %1456 = vmatpush1.xpose.msra.mxu0 0.0
    %1457 = vmatprep.subr.mxu0 0.0
    %1458 = vmatpush1.xpose.msra.mxu0 0.0
    %1459 = vmatprep.subr.mxu0 0.0
    %1460 = vmatpush1.xpose.msra.mxu0 0.0
    %1461 = vmatprep.subr.mxu0 0.0
    %1462 = vmatpush1.xpose.msra.mxu0 0.0
    %1463 = vmatprep.subr.mxu0 0.0
    %1464 = vmatpush1.xpose.msra.mxu0 0.0
    %1465 = vmatprep.mubr.f32.mxu0 0.0
    %v1466 = vand.u32 %v1094, 4294901760
    %1467 = vmatmul.mubr.f32.gmra.mrb[0].mxu0 %v1466
    %v1468 = vpop.f32.mrb[0].mxu0
    %v1469 = vadd.f32 %v1395, %v1468
    %v1470 = vpop.f32.mrb[0].mxu0
    %1471 = vdwg.mxu0
    %1472 = vmatprep.subr.mxu0 0.0
    %v1473 = vand.u32 %v1096, 4294901760
    %1474 = vmatpush1.xpose.msra.mxu0 %v1473
    %1475 = vmatprep.subr.mxu0 0.0
    %1476 = vmatpush1.xpose.msra.mxu0 0.0
    %1477 = vmatprep.subr.mxu0 0.0
    %1478 = vmatpush1.xpose.msra.mxu0 0.0
    %1479 = vmatprep.subr.mxu0 0.0
    %1480 = vmatpush1.xpose.msra.mxu0 0.0
    %1481 = vmatprep.subr.mxu0 0.0
    %1482 = vmatpush1.xpose.msra.mxu0 0.0
    %1483 = vmatprep.subr.mxu0 0.0
    %1484 = vmatpush1.xpose.msra.mxu0 0.0
    %1485 = vmatprep.subr.mxu0 0.0
    %1486 = vmatpush1.xpose.msra.mxu0 0.0
    %1487 = vmatprep.subr.mxu0 0.0
    %1488 = vmatpush1.xpose.msra.mxu0 0.0
    %1489 = vmatprep.subr.mxu0 0.0
    %1490 = vmatpush1.xpose.msra.mxu0 0.0
    %1491 = vmatprep.subr.mxu0 0.0
    %1492 = vmatpush1.xpose.msra.mxu0 0.0
    %1493 = vmatprep.subr.mxu0 0.0
    %1494 = vmatpush1.xpose.msra.mxu0 0.0
    %1495 = vmatprep.subr.mxu0 0.0
    %1496 = vmatpush1.xpose.msra.mxu0 0.0
    %1497 = vmatprep.subr.mxu0 0.0
    %1498 = vmatpush1.xpose.msra.mxu0 0.0
    %1499 = vmatprep.subr.mxu0 0.0
    %1500 = vmatpush1.xpose.msra.mxu0 0.0
    %1501 = vmatprep.subr.mxu0 0.0
    %1502 = vmatpush1.xpose.msra.mxu0 0.0
    %1503 = vmatprep.subr.mxu0 0.0
    %1504 = vmatpush1.xpose.msra.mxu0 0.0
    %1505 = vmatprep.subr.mxu0 0.0
    %1506 = vmatpush1.xpose.msra.mxu0 0.0
    %1507 = vmatprep.subr.mxu0 0.0
    %1508 = vmatpush1.xpose.msra.mxu0 0.0
    %1509 = vmatprep.subr.mxu0 0.0
    %1510 = vmatpush1.xpose.msra.mxu0 0.0
    %1511 = vmatprep.subr.mxu0 0.0
    %1512 = vmatpush1.xpose.msra.mxu0 0.0
    %1513 = vmatprep.subr.mxu0 0.0
    %1514 = vmatpush1.xpose.msra.mxu0 0.0
    %1515 = vmatprep.subr.mxu0 0.0
    %1516 = vmatpush1.xpose.msra.mxu0 0.0
    %1517 = vmatprep.subr.mxu0 0.0
    %1518 = vmatpush1.xpose.msra.mxu0 0.0
    %1519 = vmatprep.subr.mxu0 0.0
    %1520 = vmatpush1.xpose.msra.mxu0 0.0
    %1521 = vmatprep.subr.mxu0 0.0
    %1522 = vmatpush1.xpose.msra.mxu0 0.0
    %1523 = vmatprep.subr.mxu0 0.0
    %1524 = vmatpush1.xpose.msra.mxu0 0.0
    %1525 = vmatprep.subr.mxu0 0.0
    %1526 = vmatpush1.xpose.msra.mxu0 0.0
    %1527 = vmatprep.subr.mxu0 0.0
    %1528 = vmatpush1.xpose.msra.mxu0 0.0
    %1529 = vmatprep.subr.mxu0 0.0
    %1530 = vmatpush1.xpose.msra.mxu0 0.0
    %1531 = vmatprep.subr.mxu0 0.0
    %1532 = vmatpush1.xpose.msra.mxu0 0.0
    %1533 = vmatprep.subr.mxu0 0.0
    %1534 = vmatpush1.xpose.msra.mxu0 0.0
    %1535 = vmatprep.subr.mxu0 0.0
    %1536 = vmatpush1.xpose.msra.mxu0 0.0
    %1537 = vmatprep.mubr.f32.mxu0 0.0
    %v1538 = vand.u32 %v1094, 4294901760
    %1539 = vmatmul.mubr.f32.gmra.mrb[0].mxu0 %v1538
    %v1540 = vpop.f32.mrb[0].mxu0
    %v1541 = vadd.f32 %v1469, %v1540
    %v1542 = vpop.f32.mrb[0].mxu0
    %1543 = vdwg.mxu0
    %1544 = vrot.lane.b32.xlu0 %v636, 96
    %v1545 = vpop.permute.xlu0 %1544
    %v1546 = vsel %vm641, %v636, 0
    %v1548 = vsel %vm641, %v1545, 0
    %1550 = vmatprep.subr.mxu0 0.0
    %v1551 = vand.u32 %v1548, 4294901760
    %1552 = vmatpush1.xpose.msra.mxu0 %v1551
    %1553 = vmatprep.subr.mxu0 0.0
    %1554 = vmatpush1.xpose.msra.mxu0 0.0
    %1555 = vmatprep.subr.mxu0 0.0
    %1556 = vmatpush1.xpose.msra.mxu0 0.0
    %1557 = vmatprep.subr.mxu0 0.0
    %1558 = vmatpush1.xpose.msra.mxu0 0.0
    %1559 = vmatprep.subr.mxu0 0.0
    %1560 = vmatpush1.xpose.msra.mxu0 0.0
    %1561 = vmatprep.subr.mxu0 0.0
    %1562 = vmatpush1.xpose.msra.mxu0 0.0
    %1563 = vmatprep.subr.mxu0 0.0
    %1564 = vmatpush1.xpose.msra.mxu0 0.0
    %1565 = vmatprep.subr.mxu0 0.0
    %1566 = vmatpush1.xpose.msra.mxu0 0.0
    %1567 = vmatprep.subr.mxu0 0.0
    %1568 = vmatpush1.xpose.msra.mxu0 0.0
    %1569 = vmatprep.subr.mxu0 0.0
    %1570 = vmatpush1.xpose.msra.mxu0 0.0
    %1571 = vmatprep.subr.mxu0 0.0
    %1572 = vmatpush1.xpose.msra.mxu0 0.0
    %1573 = vmatprep.subr.mxu0 0.0
    %1574 = vmatpush1.xpose.msra.mxu0 0.0
    %1575 = vmatprep.subr.mxu0 0.0
    %1576 = vmatpush1.xpose.msra.mxu0 0.0
    %1577 = vmatprep.subr.mxu0 0.0
    %1578 = vmatpush1.xpose.msra.mxu0 0.0
    %1579 = vmatprep.subr.mxu0 0.0
    %1580 = vmatpush1.xpose.msra.mxu0 0.0
    %1581 = vmatprep.subr.mxu0 0.0
    %1582 = vmatpush1.xpose.msra.mxu0 0.0
    %1583 = vmatprep.subr.mxu0 0.0
    %1584 = vmatpush1.xpose.msra.mxu0 0.0
    %1585 = vmatprep.subr.mxu0 0.0
    %1586 = vmatpush1.xpose.msra.mxu0 0.0
    %1587 = vmatprep.subr.mxu0 0.0
    %1588 = vmatpush1.xpose.msra.mxu0 0.0
    %1589 = vmatprep.subr.mxu0 0.0
    %1590 = vmatpush1.xpose.msra.mxu0 0.0
    %1591 = vmatprep.subr.mxu0 0.0
    %1592 = vmatpush1.xpose.msra.mxu0 0.0
    %1593 = vmatprep.subr.mxu0 0.0
    %1594 = vmatpush1.xpose.msra.mxu0 0.0
    %1595 = vmatprep.subr.mxu0 0.0
    %1596 = vmatpush1.xpose.msra.mxu0 0.0
    %1597 = vmatprep.subr.mxu0 0.0
    %1598 = vmatpush1.xpose.msra.mxu0 0.0
    %1599 = vmatprep.subr.mxu0 0.0
    %1600 = vmatpush1.xpose.msra.mxu0 0.0
    %1601 = vmatprep.subr.mxu0 0.0
    %1602 = vmatpush1.xpose.msra.mxu0 0.0
    %1603 = vmatprep.subr.mxu0 0.0
    %1604 = vmatpush1.xpose.msra.mxu0 0.0
    %1605 = vmatprep.subr.mxu0 0.0
    %1606 = vmatpush1.xpose.msra.mxu0 0.0
    %1607 = vmatprep.subr.mxu0 0.0
    %1608 = vmatpush1.xpose.msra.mxu0 0.0
    %1609 = vmatprep.subr.mxu0 0.0
    %1610 = vmatpush1.xpose.msra.mxu0 0.0
    %1611 = vmatprep.subr.mxu0 0.0
    %1612 = vmatpush1.xpose.msra.mxu0 0.0
    %1613 = vmatprep.subr.mxu0 0.0
    %1614 = vmatpush1.xpose.msra.mxu0 0.0
    %1615 = vmatprep.mubr.f32.mxu0 0.0
    %v1616 = vand.u32 %v1546, 4294901760
    %v1617 = vsub.f32 %v1546, %v1616
    %v1618 = vand.u32 %v1617, 4294901760
    %v1619 = vsub.f32 %v1617, %v1618
    %v1620 = vand.u32 %v1619, 4294901760
    %1621 = vmatmul.mubr.f32.gmra.mrb[0].mxu0 %v1620
    %v1622 = vpop.f32.mrb[0].mxu0
    %v1623 = vadd.f32 0.0, %v1622
    %v1624 = vpop.f32.mrb[0].mxu0
    %1625 = vdwg.mxu0
    %1626 = vmatprep.subr.mxu0 0.0
    %v1627 = vand.u32 %v1548, 4294901760
    %v1628 = vsub.f32 %v1548, %v1627
    %v1629 = vand.u32 %v1628, 4294901760
    %v1630 = vsub.f32 %v1628, %v1629
    %v1631 = vand.u32 %v1630, 4294901760
    %1632 = vmatpush1.xpose.msra.mxu0 %v1631
    %1633 = vmatprep.subr.mxu0 0.0
    %1634 = vmatpush1.xpose.msra.mxu0 0.0
    %1635 = vmatprep.subr.mxu0 0.0
    %1636 = vmatpush1.xpose.msra.mxu0 0.0
    %1637 = vmatprep.subr.mxu0 0.0
    %1638 = vmatpush1.xpose.msra.mxu0 0.0
    %1639 = vmatprep.subr.mxu0 0.0
    %1640 = vmatpush1.xpose.msra.mxu0 0.0
    %1641 = vmatprep.subr.mxu0 0.0
    %1642 = vmatpush1.xpose.msra.mxu0 0.0
    %1643 = vmatprep.subr.mxu0 0.0
    %1644 = vmatpush1.xpose.msra.mxu0 0.0
    %1645 = vmatprep.subr.mxu0 0.0
    %1646 = vmatpush1.xpose.msra.mxu0 0.0
    %1647 = vmatprep.subr.mxu0 0.0
    %1648 = vmatpush1.xpose.msra.mxu0 0.0
    %1649 = vmatprep.subr.mxu0 0.0
    %1650 = vmatpush1.xpose.msra.mxu0 0.0
    %1651 = vmatprep.subr.mxu0 0.0
    %1652 = vmatpush1.xpose.msra.mxu0 0.0
    %1653 = vmatprep.subr.mxu0 0.0
    %1654 = vmatpush1.xpose.msra.mxu0 0.0
    %1655 = vmatprep.subr.mxu0 0.0
    %1656 = vmatpush1.xpose.msra.mxu0 0.0
    %1657 = vmatprep.subr.mxu0 0.0
    %1658 = vmatpush1.xpose.msra.mxu0 0.0
    %1659 = vmatprep.subr.mxu0 0.0
    %1660 = vmatpush1.xpose.msra.mxu0 0.0
    %1661 = vmatprep.subr.mxu0 0.0
    %1662 = vmatpush1.xpose.msra.mxu0 0.0
    %1663 = vmatprep.subr.mxu0 0.0
    %1664 = vmatpush1.xpose.msra.mxu0 0.0
    %1665 = vmatprep.subr.mxu0 0.0
    %1666 = vmatpush1.xpose.msra.mxu0 0.0
    %1667 = vmatprep.subr.mxu0 0.0
    %1668 = vmatpush1.xpose.msra.mxu0 0.0
    %1669 = vmatprep.subr.mxu0 0.0
    %1670 = vmatpush1.xpose.msra.mxu0 0.0
    %1671 = vmatprep.subr.mxu0 0.0
    %1672 = vmatpush1.xpose.msra.mxu0 0.0
    %1673 = vmatprep.subr.mxu0 0.0
    %1674 = vmatpush1.xpose.msra.mxu0 0.0
    %1675 = vmatprep.subr.mxu0 0.0
    %1676 = vmatpush1.xpose.msra.mxu0 0.0
    %1677 = vmatprep.subr.mxu0 0.0
    %1678 = vmatpush1.xpose.msra.mxu0 0.0
    %1679 = vmatprep.subr.mxu0 0.0
    %1680 = vmatpush1.xpose.msra.mxu0 0.0
    %1681 = vmatprep.subr.mxu0 0.0
    %1682 = vmatpush1.xpose.msra.mxu0 0.0
    %1683 = vmatprep.subr.mxu0 0.0
    %1684 = vmatpush1.xpose.msra.mxu0 0.0
    %1685 = vmatprep.subr.mxu0 0.0
    %1686 = vmatpush1.xpose.msra.mxu0 0.0
    %1687 = vmatprep.subr.mxu0 0.0
    %1688 = vmatpush1.xpose.msra.mxu0 0.0
    %1689 = vmatprep.subr.mxu0 0.0
    %1690 = vmatpush1.xpose.msra.mxu0 0.0
    %1691 = vmatprep.subr.mxu0 0.0
    %1692 = vmatpush1.xpose.msra.mxu0 0.0
    %1693 = vmatprep.subr.mxu0 0.0
    %1694 = vmatpush1.xpose.msra.mxu0 0.0
    %1695 = vmatprep.mubr.f32.mxu0 0.0
    %v1696 = vand.u32 %v1546, 4294901760
    %1697 = vmatmul.mubr.f32.gmra.mrb[0].mxu0 %v1696
    %v1698 = vpop.f32.mrb[0].mxu0
    %v1699 = vadd.f32 %v1623, %v1698
    %v1700 = vpop.f32.mrb[0].mxu0
    %1701 = vdwg.mxu0
    %1702 = vmatprep.subr.mxu0 0.0
    %v1703 = vand.u32 %v1548, 4294901760
    %v1704 = vsub.f32 %v1548, %v1703
    %1705 = vmatpush1.xpose.msra.mxu0 %v1704
    %1706 = vmatprep.subr.mxu0 0.0
    %1707 = vmatpush1.xpose.msra.mxu0 0.0
    %1708 = vmatprep.subr.mxu0 0.0
    %1709 = vmatpush1.xpose.msra.mxu0 0.0
    %1710 = vmatprep.subr.mxu0 0.0
    %1711 = vmatpush1.xpose.msra.mxu0 0.0
    %1712 = vmatprep.subr.mxu0 0.0
    %1713 = vmatpush1.xpose.msra.mxu0 0.0
    %1714 = vmatprep.subr.mxu0 0.0
    %1715 = vmatpush1.xpose.msra.mxu0 0.0
    %1716 = vmatprep.subr.mxu0 0.0
    %1717 = vmatpush1.xpose.msra.mxu0 0.0
    %1718 = vmatprep.subr.mxu0 0.0
    %1719 = vmatpush1.xpose.msra.mxu0 0.0
    %1720 = vmatprep.subr.mxu0 0.0
    %1721 = vmatpush1.xpose.msra.mxu0 0.0
    %1722 = vmatprep.subr.mxu0 0.0
    %1723 = vmatpush1.xpose.msra.mxu0 0.0
    %1724 = vmatprep.subr.mxu0 0.0
    %1725 = vmatpush1.xpose.msra.mxu0 0.0
    %1726 = vmatprep.subr.mxu0 0.0
    %1727 = vmatpush1.xpose.msra.mxu0 0.0
    %1728 = vmatprep.subr.mxu0 0.0
    %1729 = vmatpush1.xpose.msra.mxu0 0.0
    %1730 = vmatprep.subr.mxu0 0.0
    %1731 = vmatpush1.xpose.msra.mxu0 0.0
    %1732 = vmatprep.subr.mxu0 0.0
    %1733 = vmatpush1.xpose.msra.mxu0 0.0
    %1734 = vmatprep.subr.mxu0 0.0
    %1735 = vmatpush1.xpose.msra.mxu0 0.0
    %1736 = vmatprep.subr.mxu0 0.0
    %1737 = vmatpush1.xpose.msra.mxu0 0.0
    %1738 = vmatprep.subr.mxu0 0.0
    %1739 = vmatpush1.xpose.msra.mxu0 0.0
    %1740 = vmatprep.subr.mxu0 0.0
    %1741 = vmatpush1.xpose.msra.mxu0 0.0
    %1742 = vmatprep.subr.mxu0 0.0
    %1743 = vmatpush1.xpose.msra.mxu0 0.0
    %1744 = vmatprep.subr.mxu0 0.0
    %1745 = vmatpush1.xpose.msra.mxu0 0.0
    %1746 = vmatprep.subr.mxu0 0.0
    %1747 = vmatpush1.xpose.msra.mxu0 0.0
    %1748 = vmatprep.subr.mxu0 0.0
    %1749 = vmatpush1.xpose.msra.mxu0 0.0
    %1750 = vmatprep.subr.mxu0 0.0
    %1751 = vmatpush1.xpose.msra.mxu0 0.0
    %1752 = vmatprep.subr.mxu0 0.0
    %1753 = vmatpush1.xpose.msra.mxu0 0.0
    %1754 = vmatprep.subr.mxu0 0.0
    %1755 = vmatpush1.xpose.msra.mxu0 0.0
    %1756 = vmatprep.subr.mxu0 0.0
    %1757 = vmatpush1.xpose.msra.mxu0 0.0
    %1758 = vmatprep.subr.mxu0 0.0
    %1759 = vmatpush1.xpose.msra.mxu0 0.0
    %1760 = vmatprep.subr.mxu0 0.0
    %1761 = vmatpush1.xpose.msra.mxu0 0.0
    %1762 = vmatprep.subr.mxu0 0.0
    %1763 = vmatpush1.xpose.msra.mxu0 0.0
    %1764 = vmatprep.subr.mxu0 0.0
    %1765 = vmatpush1.xpose.msra.mxu0 0.0
    %1766 = vmatprep.subr.mxu0 0.0
    %1767 = vmatpush1.xpose.msra.mxu0 0.0
    %1768 = vmatprep.mubr.f32.mxu0 0.0
    %v1769 = vand.u32 %v1546, 4294901760
    %v1770 = vsub.f32 %v1546, %v1769
    %1771 = vmatmul.mubr.f32.gmra.mrb[0].mxu0 %v1770
    %v1772 = vpop.f32.mrb[0].mxu0
    %v1773 = vadd.f32 %v1699, %v1772
    %v1774 = vpop.f32.mrb[0].mxu0
    %1775 = vdwg.mxu0
    %1776 = vmatprep.subr.mxu0 0.0
    %v1777 = vand.u32 %v1548, 4294901760
    %1778 = vmatpush1.xpose.msra.mxu0 %v1777
    %1779 = vmatprep.subr.mxu0 0.0
    %1780 = vmatpush1.xpose.msra.mxu0 0.0
    %1781 = vmatprep.subr.mxu0 0.0
    %1782 = vmatpush1.xpose.msra.mxu0 0.0
    %1783 = vmatprep.subr.mxu0 0.0
    %1784 = vmatpush1.xpose.msra.mxu0 0.0
    %1785 = vmatprep.subr.mxu0 0.0
    %1786 = vmatpush1.xpose.msra.mxu0 0.0
    %1787 = vmatprep.subr.mxu0 0.0
    %1788 = vmatpush1.xpose.msra.mxu0 0.0
    %1789 = vmatprep.subr.mxu0 0.0
    %1790 = vmatpush1.xpose.msra.mxu0 0.0
    %1791 = vmatprep.subr.mxu0 0.0
    %1792 = vmatpush1.xpose.msra.mxu0 0.0
    %1793 = vmatprep.subr.mxu0 0.0
    %1794 = vmatpush1.xpose.msra.mxu0 0.0
    %1795 = vmatprep.subr.mxu0 0.0
    %1796 = vmatpush1.xpose.msra.mxu0 0.0
    %1797 = vmatprep.subr.mxu0 0.0
    %1798 = vmatpush1.xpose.msra.mxu0 0.0
    %1799 = vmatprep.subr.mxu0 0.0
    %1800 = vmatpush1.xpose.msra.mxu0 0.0
    %1801 = vmatprep.subr.mxu0 0.0
    %1802 = vmatpush1.xpose.msra.mxu0 0.0
    %1803 = vmatprep.subr.mxu0 0.0
    %1804 = vmatpush1.xpose.msra.mxu0 0.0
    %1805 = vmatprep.subr.mxu0 0.0
    %1806 = vmatpush1.xpose.msra.mxu0 0.0
    %1807 = vmatprep.subr.mxu0 0.0
    %1808 = vmatpush1.xpose.msra.mxu0 0.0
    %1809 = vmatprep.subr.mxu0 0.0
    %1810 = vmatpush1.xpose.msra.mxu0 0.0
    %1811 = vmatprep.subr.mxu0 0.0
    %1812 = vmatpush1.xpose.msra.mxu0 0.0
    %1813 = vmatprep.subr.mxu0 0.0
    %1814 = vmatpush1.xpose.msra.mxu0 0.0
    %1815 = vmatprep.subr.mxu0 0.0
    %1816 = vmatpush1.xpose.msra.mxu0 0.0
    %1817 = vmatprep.subr.mxu0 0.0
    %1818 = vmatpush1.xpose.msra.mxu0 0.0
    %1819 = vmatprep.subr.mxu0 0.0
    %1820 = vmatpush1.xpose.msra.mxu0 0.0
    %1821 = vmatprep.subr.mxu0 0.0
    %1822 = vmatpush1.xpose.msra.mxu0 0.0
    %1823 = vmatprep.subr.mxu0 0.0
    %1824 = vmatpush1.xpose.msra.mxu0 0.0
    %1825 = vmatprep.subr.mxu0 0.0
    %1826 = vmatpush1.xpose.msra.mxu0 0.0
    %1827 = vmatprep.subr.mxu0 0.0
    %1828 = vmatpush1.xpose.msra.mxu0 0.0
    %1829 = vmatprep.subr.mxu0 0.0
    %1830 = vmatpush1.xpose.msra.mxu0 0.0
    %1831 = vmatprep.subr.mxu0 0.0
    %1832 = vmatpush1.xpose.msra.mxu0 0.0
    %1833 = vmatprep.subr.mxu0 0.0
    %1834 = vmatpush1.xpose.msra.mxu0 0.0
    %1835 = vmatprep.subr.mxu0 0.0
    %1836 = vmatpush1.xpose.msra.mxu0 0.0
    %1837 = vmatprep.subr.mxu0 0.0
    %1838 = vmatpush1.xpose.msra.mxu0 0.0
    %1839 = vmatprep.subr.mxu0 0.0
    %1840 = vmatpush1.xpose.msra.mxu0 0.0
    %1841 = vmatprep.mubr.f32.mxu0 0.0
    %v1842 = vand.u32 %v1546, 4294901760
    %v1843 = vsub.f32 %v1546, %v1842
    %v1844 = vand.u32 %v1843, 4294901760
    %1845 = vmatmul.mubr.f32.gmra.mrb[0].mxu0 %v1844
    %v1846 = vpop.f32.mrb[0].mxu0
    %v1847 = vadd.f32 %v1773, %v1846
    %v1848 = vpop.f32.mrb[0].mxu0
    %1849 = vdwg.mxu0
    %1850 = vmatprep.subr.mxu0 0.0
    %v1851 = vand.u32 %v1548, 4294901760
    %v1852 = vsub.f32 %v1548, %v1851
    %v1853 = vand.u32 %v1852, 4294901760
    %1854 = vmatpush1.xpose.msra.mxu0 %v1853
    %1855 = vmatprep.subr.mxu0 0.0
    %1856 = vmatpush1.xpose.msra.mxu0 0.0
    %1857 = vmatprep.subr.mxu0 0.0
    %1858 = vmatpush1.xpose.msra.mxu0 0.0
    %1859 = vmatprep.subr.mxu0 0.0
    %1860 = vmatpush1.xpose.msra.mxu0 0.0
    %1861 = vmatprep.subr.mxu0 0.0
    %1862 = vmatpush1.xpose.msra.mxu0 0.0
    %1863 = vmatprep.subr.mxu0 0.0
    %1864 = vmatpush1.xpose.msra.mxu0 0.0
    %1865 = vmatprep.subr.mxu0 0.0
    %1866 = vmatpush1.xpose.msra.mxu0 0.0
    %1867 = vmatprep.subr.mxu0 0.0
    %1868 = vmatpush1.xpose.msra.mxu0 0.0
    %1869 = vmatprep.subr.mxu0 0.0
    %1870 = vmatpush1.xpose.msra.mxu0 0.0
    %1871 = vmatprep.subr.mxu0 0.0
    %1872 = vmatpush1.xpose.msra.mxu0 0.0
    %1873 = vmatprep.subr.mxu0 0.0
    %1874 = vmatpush1.xpose.msra.mxu0 0.0
    %1875 = vmatprep.subr.mxu0 0.0
    %1876 = vmatpush1.xpose.msra.mxu0 0.0
    %1877 = vmatprep.subr.mxu0 0.0
    %1878 = vmatpush1.xpose.msra.mxu0 0.0
    %1879 = vmatprep.subr.mxu0 0.0
    %1880 = vmatpush1.xpose.msra.mxu0 0.0
    %1881 = vmatprep.subr.mxu0 0.0
    %1882 = vmatpush1.xpose.msra.mxu0 0.0
    %1883 = vmatprep.subr.mxu0 0.0
    %1884 = vmatpush1.xpose.msra.mxu0 0.0
    %1885 = vmatprep.subr.mxu0 0.0
    %1886 = vmatpush1.xpose.msra.mxu0 0.0
    %1887 = vmatprep.subr.mxu0 0.0
    %1888 = vmatpush1.xpose.msra.mxu0 0.0
    %1889 = vmatprep.subr.mxu0 0.0
    %1890 = vmatpush1.xpose.msra.mxu0 0.0
    %1891 = vmatprep.subr.mxu0 0.0
    %1892 = vmatpush1.xpose.msra.mxu0 0.0
    %1893 = vmatprep.subr.mxu0 0.0
    %1894 = vmatpush1.xpose.msra.mxu0 0.0
    %1895 = vmatprep.subr.mxu0 0.0
    %1896 = vmatpush1.xpose.msra.mxu0 0.0
    %1897 = vmatprep.subr.mxu0 0.0
    %1898 = vmatpush1.xpose.msra.mxu0 0.0
    %1899 = vmatprep.subr.mxu0 0.0
    %1900 = vmatpush1.xpose.msra.mxu0 0.0
    %1901 = vmatprep.subr.mxu0 0.0
    %1902 = vmatpush1.xpose.msra.mxu0 0.0
    %1903 = vmatprep.subr.mxu0 0.0
    %1904 = vmatpush1.xpose.msra.mxu0 0.0
    %1905 = vmatprep.subr.mxu0 0.0
    %1906 = vmatpush1.xpose.msra.mxu0 0.0
    %1907 = vmatprep.subr.mxu0 0.0
    %1908 = vmatpush1.xpose.msra.mxu0 0.0
    %1909 = vmatprep.subr.mxu0 0.0
    %1910 = vmatpush1.xpose.msra.mxu0 0.0
    %1911 = vmatprep.subr.mxu0 0.0
    %1912 = vmatpush1.xpose.msra.mxu0 0.0
    %1913 = vmatprep.subr.mxu0 0.0
    %1914 = vmatpush1.xpose.msra.mxu0 0.0
    %1915 = vmatprep.subr.mxu0 0.0
    %1916 = vmatpush1.xpose.msra.mxu0 0.0
    %1917 = vmatprep.mubr.f32.mxu0 0.0
    %v1918 = vand.u32 %v1546, 4294901760
    %1919 = vmatmul.mubr.f32.gmra.mrb[0].mxu0 %v1918
    %v1920 = vpop.f32.mrb[0].mxu0
    %v1921 = vadd.f32 %v1847, %v1920
    %v1922 = vpop.f32.mrb[0].mxu0
    %1923 = vdwg.mxu0
    %1924 = vmatprep.subr.mxu0 0.0
    %v1925 = vand.u32 %v1548, 4294901760
    %1926 = vmatpush1.xpose.msra.mxu0 %v1925
    %1927 = vmatprep.subr.mxu0 0.0
    %1928 = vmatpush1.xpose.msra.mxu0 0.0
    %1929 = vmatprep.subr.mxu0 0.0
    %1930 = vmatpush1.xpose.msra.mxu0 0.0
    %1931 = vmatprep.subr.mxu0 0.0
    %1932 = vmatpush1.xpose.msra.mxu0 0.0
    %1933 = vmatprep.subr.mxu0 0.0
    %1934 = vmatpush1.xpose.msra.mxu0 0.0
    %1935 = vmatprep.subr.mxu0 0.0
    %1936 = vmatpush1.xpose.msra.mxu0 0.0
    %1937 = vmatprep.subr.mxu0 0.0
    %1938 = vmatpush1.xpose.msra.mxu0 0.0
    %1939 = vmatprep.subr.mxu0 0.0
    %1940 = vmatpush1.xpose.msra.mxu0 0.0
    %1941 = vmatprep.subr.mxu0 0.0
    %1942 = vmatpush1.xpose.msra.mxu0 0.0
    %1943 = vmatprep.subr.mxu0 0.0
    %1944 = vmatpush1.xpose.msra.mxu0 0.0
    %1945 = vmatprep.subr.mxu0 0.0
    %1946 = vmatpush1.xpose.msra.mxu0 0.0
    %1947 = vmatprep.subr.mxu0 0.0
    %1948 = vmatpush1.xpose.msra.mxu0 0.0
    %1949 = vmatprep.subr.mxu0 0.0
    %1950 = vmatpush1.xpose.msra.mxu0 0.0
    %1951 = vmatprep.subr.mxu0 0.0
    %1952 = vmatpush1.xpose.msra.mxu0 0.0
    %1953 = vmatprep.subr.mxu0 0.0
    %1954 = vmatpush1.xpose.msra.mxu0 0.0
    %1955 = vmatprep.subr.mxu0 0.0
    %1956 = vmatpush1.xpose.msra.mxu0 0.0
    %1957 = vmatprep.subr.mxu0 0.0
    %1958 = vmatpush1.xpose.msra.mxu0 0.0
    %1959 = vmatprep.subr.mxu0 0.0
    %1960 = vmatpush1.xpose.msra.mxu0 0.0
    %1961 = vmatprep.subr.mxu0 0.0
    %1962 = vmatpush1.xpose.msra.mxu0 0.0
    %1963 = vmatprep.subr.mxu0 0.0
    %1964 = vmatpush1.xpose.msra.mxu0 0.0
    %1965 = vmatprep.subr.mxu0 0.0
    %1966 = vmatpush1.xpose.msra.mxu0 0.0
    %1967 = vmatprep.subr.mxu0 0.0
    %1968 = vmatpush1.xpose.msra.mxu0 0.0
    %1969 = vmatprep.subr.mxu0 0.0
    %1970 = vmatpush1.xpose.msra.mxu0 0.0
    %1971 = vmatprep.subr.mxu0 0.0
    %1972 = vmatpush1.xpose.msra.mxu0 0.0
    %1973 = vmatprep.subr.mxu0 0.0
    %1974 = vmatpush1.xpose.msra.mxu0 0.0
    %1975 = vmatprep.subr.mxu0 0.0
    %1976 = vmatpush1.xpose.msra.mxu0 0.0
    %1977 = vmatprep.subr.mxu0 0.0
    %1978 = vmatpush1.xpose.msra.mxu0 0.0
    %1979 = vmatprep.subr.mxu0 0.0
    %1980 = vmatpush1.xpose.msra.mxu0 0.0
    %1981 = vmatprep.subr.mxu0 0.0
    %1982 = vmatpush1.xpose.msra.mxu0 0.0
    %1983 = vmatprep.subr.mxu0 0.0
    %1984 = vmatpush1.xpose.msra.mxu0 0.0
    %1985 = vmatprep.subr.mxu0 0.0
    %1986 = vmatpush1.xpose.msra.mxu0 0.0
    %1987 = vmatprep.subr.mxu0 0.0
    %1988 = vmatpush1.xpose.msra.mxu0 0.0
    %1989 = vmatprep.mubr.f32.mxu0 0.0
    %v1990 = vand.u32 %v1546, 4294901760
    %1991 = vmatmul.mubr.f32.gmra.mrb[0].mxu0 %v1990
    %v1992 = vpop.f32.mrb[0].mxu0
    %v1993 = vadd.f32 %v1921, %v1992
    %v1994 = vpop.f32.mrb[0].mxu0
    %1995 = vdwg.mxu0
    %1996 = vrot.lane.b32.xlu0 %v638, 96
    %v1997 = vpop.permute.xlu0 %1996
    %v1998 = vsel %vm641, %v638, 0
    %v2000 = vsel %vm641, %v1997, 0
    %2002 = vmatprep.subr.mxu0 0.0
    %v2003 = vand.u32 %v2000, 4294901760
    %2004 = vmatpush1.xpose.msra.mxu0 %v2003
    %2005 = vmatprep.subr.mxu0 0.0
    %2006 = vmatpush1.xpose.msra.mxu0 0.0
    %2007 = vmatprep.subr.mxu0 0.0
    %2008 = vmatpush1.xpose.msra.mxu0 0.0
    %2009 = vmatprep.subr.mxu0 0.0
    %2010 = vmatpush1.xpose.msra.mxu0 0.0
    %2011 = vmatprep.subr.mxu0 0.0
    %2012 = vmatpush1.xpose.msra.mxu0 0.0
    %2013 = vmatprep.subr.mxu0 0.0
    %2014 = vmatpush1.xpose.msra.mxu0 0.0
    %2015 = vmatprep.subr.mxu0 0.0
    %2016 = vmatpush1.xpose.msra.mxu0 0.0
    %2017 = vmatprep.subr.mxu0 0.0
    %2018 = vmatpush1.xpose.msra.mxu0 0.0
    %2019 = vmatprep.subr.mxu0 0.0
    %2020 = vmatpush1.xpose.msra.mxu0 0.0
    %2021 = vmatprep.subr.mxu0 0.0
    %2022 = vmatpush1.xpose.msra.mxu0 0.0
    %2023 = vmatprep.subr.mxu0 0.0
    %2024 = vmatpush1.xpose.msra.mxu0 0.0
    %2025 = vmatprep.subr.mxu0 0.0
    %2026 = vmatpush1.xpose.msra.mxu0 0.0
    %2027 = vmatprep.subr.mxu0 0.0
    %2028 = vmatpush1.xpose.msra.mxu0 0.0
    %2029 = vmatprep.subr.mxu0 0.0
    %2030 = vmatpush1.xpose.msra.mxu0 0.0
    %2031 = vmatprep.subr.mxu0 0.0
    %2032 = vmatpush1.xpose.msra.mxu0 0.0
    %2033 = vmatprep.subr.mxu0 0.0
    %2034 = vmatpush1.xpose.msra.mxu0 0.0
    %2035 = vmatprep.subr.mxu0 0.0
    %2036 = vmatpush1.xpose.msra.mxu0 0.0
    %2037 = vmatprep.subr.mxu0 0.0
    %2038 = vmatpush1.xpose.msra.mxu0 0.0
    %2039 = vmatprep.subr.mxu0 0.0
    %2040 = vmatpush1.xpose.msra.mxu0 0.0
    %2041 = vmatprep.subr.mxu0 0.0
    %2042 = vmatpush1.xpose.msra.mxu0 0.0
    %2043 = vmatprep.subr.mxu0 0.0
    %2044 = vmatpush1.xpose.msra.mxu0 0.0
    %2045 = vmatprep.subr.mxu0 0.0
    %2046 = vmatpush1.xpose.msra.mxu0 0.0
    %2047 = vmatprep.subr.mxu0 0.0
    %2048 = vmatpush1.xpose.msra.mxu0 0.0
    %2049 = vmatprep.subr.mxu0 0.0
    %2050 = vmatpush1.xpose.msra.mxu0 0.0
    %2051 = vmatprep.subr.mxu0 0.0
    %2052 = vmatpush1.xpose.msra.mxu0 0.0
    %2053 = vmatprep.subr.mxu0 0.0
    %2054 = vmatpush1.xpose.msra.mxu0 0.0
    %2055 = vmatprep.subr.mxu0 0.0
    %2056 = vmatpush1.xpose.msra.mxu0 0.0
    %2057 = vmatprep.subr.mxu0 0.0
    %2058 = vmatpush1.xpose.msra.mxu0 0.0
    %2059 = vmatprep.subr.mxu0 0.0
    %2060 = vmatpush1.xpose.msra.mxu0 0.0
    %2061 = vmatprep.subr.mxu0 0.0
    %2062 = vmatpush1.xpose.msra.mxu0 0.0
    %2063 = vmatprep.subr.mxu0 0.0
    %2064 = vmatpush1.xpose.msra.mxu0 0.0
    %2065 = vmatprep.subr.mxu0 0.0
    %2066 = vmatpush1.xpose.msra.mxu0 0.0
    %2067 = vmatprep.mubr.f32.mxu0 0.0
    %v2068 = vand.u32 %v1998, 4294901760
    %v2069 = vsub.f32 %v1998, %v2068
    %v2070 = vand.u32 %v2069, 4294901760
    %v2071 = vsub.f32 %v2069, %v2070
    %v2072 = vand.u32 %v2071, 4294901760
    %2073 = vmatmul.mubr.f32.gmra.mrb[0].mxu0 %v2072
    %v2074 = vpop.f32.mrb[0].mxu0
    %v2075 = vadd.f32 0.0, %v2074
    %v2076 = vpop.f32.mrb[0].mxu0
    %2077 = vdwg.mxu0
    %2078 = vmatprep.subr.mxu0 0.0
    %v2079 = vand.u32 %v2000, 4294901760
    %v2080 = vsub.f32 %v2000, %v2079
    %v2081 = vand.u32 %v2080, 4294901760
    %v2082 = vsub.f32 %v2080, %v2081
    %v2083 = vand.u32 %v2082, 4294901760
    %2084 = vmatpush1.xpose.msra.mxu0 %v2083
    %2085 = vmatprep.subr.mxu0 0.0
    %2086 = vmatpush1.xpose.msra.mxu0 0.0
    %2087 = vmatprep.subr.mxu0 0.0
    %2088 = vmatpush1.xpose.msra.mxu0 0.0
    %2089 = vmatprep.subr.mxu0 0.0
    %2090 = vmatpush1.xpose.msra.mxu0 0.0
    %2091 = vmatprep.subr.mxu0 0.0
    %2092 = vmatpush1.xpose.msra.mxu0 0.0
    %2093 = vmatprep.subr.mxu0 0.0
    %2094 = vmatpush1.xpose.msra.mxu0 0.0
    %2095 = vmatprep.subr.mxu0 0.0
    %2096 = vmatpush1.xpose.msra.mxu0 0.0
    %2097 = vmatprep.subr.mxu0 0.0
    %2098 = vmatpush1.xpose.msra.mxu0 0.0
    %2099 = vmatprep.subr.mxu0 0.0
    %2100 = vmatpush1.xpose.msra.mxu0 0.0
    %2101 = vmatprep.subr.mxu0 0.0
    %2102 = vmatpush1.xpose.msra.mxu0 0.0
    %2103 = vmatprep.subr.mxu0 0.0
    %2104 = vmatpush1.xpose.msra.mxu0 0.0
    %2105 = vmatprep.subr.mxu0 0.0
    %2106 = vmatpush1.xpose.msra.mxu0 0.0
    %2107 = vmatprep.subr.mxu0 0.0
    %2108 = vmatpush1.xpose.msra.mxu0 0.0
    %2109 = vmatprep.subr.mxu0 0.0
    %2110 = vmatpush1.xpose.msra.mxu0 0.0
    %2111 = vmatprep.subr.mxu0 0.0
    %2112 = vmatpush1.xpose.msra.mxu0 0.0
    %2113 = vmatprep.subr.mxu0 0.0
    %2114 = vmatpush1.xpose.msra.mxu0 0.0
    %2115 = vmatprep.subr.mxu0 0.0
    %2116 = vmatpush1.xpose.msra.mxu0 0.0
    %2117 = vmatprep.subr.mxu0 0.0
    %2118 = vmatpush1.xpose.msra.mxu0 0.0
    %2119 = vmatprep.subr.mxu0 0.0
    %2120 = vmatpush1.xpose.msra.mxu0 0.0
    %2121 = vmatprep.subr.mxu0 0.0
    %2122 = vmatpush1.xpose.msra.mxu0 0.0
    %2123 = vmatprep.subr.mxu0 0.0
    %2124 = vmatpush1.xpose.msra.mxu0 0.0
    %2125 = vmatprep.subr.mxu0 0.0
    %2126 = vmatpush1.xpose.msra.mxu0 0.0
    %2127 = vmatprep.subr.mxu0 0.0
    %2128 = vmatpush1.xpose.msra.mxu0 0.0
    %2129 = vmatprep.subr.mxu0 0.0
    %2130 = vmatpush1.xpose.msra.mxu0 0.0
    %2131 = vmatprep.subr.mxu0 0.0
    %2132 = vmatpush1.xpose.msra.mxu0 0.0
    %2133 = vmatprep.subr.mxu0 0.0
    %2134 = vmatpush1.xpose.msra.mxu0 0.0
    %2135 = vmatprep.subr.mxu0 0.0
    %2136 = vmatpush1.xpose.msra.mxu0 0.0
    %2137 = vmatprep.subr.mxu0 0.0
    %2138 = vmatpush1.xpose.msra.mxu0 0.0
    %2139 = vmatprep.subr.mxu0 0.0
    %2140 = vmatpush1.xpose.msra.mxu0 0.0
    %2141 = vmatprep.subr.mxu0 0.0
    %2142 = vmatpush1.xpose.msra.mxu0 0.0
    %2143 = vmatprep.subr.mxu0 0.0
    %2144 = vmatpush1.xpose.msra.mxu0 0.0
    %2145 = vmatprep.subr.mxu0 0.0
    %2146 = vmatpush1.xpose.msra.mxu0 0.0
    %2147 = vmatprep.mubr.f32.mxu0 0.0
    %v2148 = vand.u32 %v1998, 4294901760
    %2149 = vmatmul.mubr.f32.gmra.mrb[0].mxu0 %v2148
    %v2150 = vpop.f32.mrb[0].mxu0
    %v2151 = vadd.f32 %v2075, %v2150
    %v2152 = vpop.f32.mrb[0].mxu0
    %2153 = vdwg.mxu0
    %2154 = vmatprep.subr.mxu0 0.0
    %v2155 = vand.u32 %v2000, 4294901760
    %v2156 = vsub.f32 %v2000, %v2155
    %2157 = vmatpush1.xpose.msra.mxu0 %v2156
    %2158 = vmatprep.subr.mxu0 0.0
    %2159 = vmatpush1.xpose.msra.mxu0 0.0
    %2160 = vmatprep.subr.mxu0 0.0
    %2161 = vmatpush1.xpose.msra.mxu0 0.0
    %2162 = vmatprep.subr.mxu0 0.0
    %2163 = vmatpush1.xpose.msra.mxu0 0.0
    %2164 = vmatprep.subr.mxu0 0.0
    %2165 = vmatpush1.xpose.msra.mxu0 0.0
    %2166 = vmatprep.subr.mxu0 0.0
    %2167 = vmatpush1.xpose.msra.mxu0 0.0
    %2168 = vmatprep.subr.mxu0 0.0
    %2169 = vmatpush1.xpose.msra.mxu0 0.0
    %2170 = vmatprep.subr.mxu0 0.0
    %2171 = vmatpush1.xpose.msra.mxu0 0.0
    %2172 = vmatprep.subr.mxu0 0.0
    %2173 = vmatpush1.xpose.msra.mxu0 0.0
    %2174 = vmatprep.subr.mxu0 0.0
    %2175 = vmatpush1.xpose.msra.mxu0 0.0
    %2176 = vmatprep.subr.mxu0 0.0
    %2177 = vmatpush1.xpose.msra.mxu0 0.0
    %2178 = vmatprep.subr.mxu0 0.0
    %2179 = vmatpush1.xpose.msra.mxu0 0.0
    %2180 = vmatprep.subr.mxu0 0.0
    %2181 = vmatpush1.xpose.msra.mxu0 0.0
    %2182 = vmatprep.subr.mxu0 0.0
    %2183 = vmatpush1.xpose.msra.mxu0 0.0
    %2184 = vmatprep.subr.mxu0 0.0
    %2185 = vmatpush1.xpose.msra.mxu0 0.0
    %2186 = vmatprep.subr.mxu0 0.0
    %2187 = vmatpush1.xpose.msra.mxu0 0.0
    %2188 = vmatprep.subr.mxu0 0.0
    %2189 = vmatpush1.xpose.msra.mxu0 0.0
    %2190 = vmatprep.subr.mxu0 0.0
    %2191 = vmatpush1.xpose.msra.mxu0 0.0
    %2192 = vmatprep.subr.mxu0 0.0
    %2193 = vmatpush1.xpose.msra.mxu0 0.0
    %2194 = vmatprep.subr.mxu0 0.0
    %2195 = vmatpush1.xpose.msra.mxu0 0.0
    %2196 = vmatprep.subr.mxu0 0.0
    %2197 = vmatpush1.xpose.msra.mxu0 0.0
    %2198 = vmatprep.subr.mxu0 0.0
    %2199 = vmatpush1.xpose.msra.mxu0 0.0
    %2200 = vmatprep.subr.mxu0 0.0
    %2201 = vmatpush1.xpose.msra.mxu0 0.0
    %2202 = vmatprep.subr.mxu0 0.0
    %2203 = vmatpush1.xpose.msra.mxu0 0.0
    %2204 = vmatprep.subr.mxu0 0.0
    %2205 = vmatpush1.xpose.msra.mxu0 0.0
    %2206 = vmatprep.subr.mxu0 0.0
    %2207 = vmatpush1.xpose.msra.mxu0 0.0
    %2208 = vmatprep.subr.mxu0 0.0
    %2209 = vmatpush1.xpose.msra.mxu0 0.0
    %2210 = vmatprep.subr.mxu0 0.0
    %2211 = vmatpush1.xpose.msra.mxu0 0.0
    %2212 = vmatprep.subr.mxu0 0.0
    %2213 = vmatpush1.xpose.msra.mxu0 0.0
    %2214 = vmatprep.subr.mxu0 0.0
    %2215 = vmatpush1.xpose.msra.mxu0 0.0
    %2216 = vmatprep.subr.mxu0 0.0
    %2217 = vmatpush1.xpose.msra.mxu0 0.0
    %2218 = vmatprep.subr.mxu0 0.0
    %2219 = vmatpush1.xpose.msra.mxu0 0.0
    %2220 = vmatprep.mubr.f32.mxu0 0.0
    %v2221 = vand.u32 %v1998, 4294901760
    %v2222 = vsub.f32 %v1998, %v2221
    %2223 = vmatmul.mubr.f32.gmra.mrb[0].mxu0 %v2222
    %v2224 = vpop.f32.mrb[0].mxu0
    %v2225 = vadd.f32 %v2151, %v2224
    %v2226 = vpop.f32.mrb[0].mxu0
    %2227 = vdwg.mxu0
    %2228 = vmatprep.subr.mxu0 0.0
    %v2229 = vand.u32 %v2000, 4294901760
    %2230 = vmatpush1.xpose.msra.mxu0 %v2229
    %2231 = vmatprep.subr.mxu0 0.0
    %2232 = vmatpush1.xpose.msra.mxu0 0.0
    %2233 = vmatprep.subr.mxu0 0.0
    %2234 = vmatpush1.xpose.msra.mxu0 0.0
    %2235 = vmatprep.subr.mxu0 0.0
    %2236 = vmatpush1.xpose.msra.mxu0 0.0
    %2237 = vmatprep.subr.mxu0 0.0
    %2238 = vmatpush1.xpose.msra.mxu0 0.0
    %2239 = vmatprep.subr.mxu0 0.0
    %2240 = vmatpush1.xpose.msra.mxu0 0.0
    %2241 = vmatprep.subr.mxu0 0.0
    %2242 = vmatpush1.xpose.msra.mxu0 0.0
    %2243 = vmatprep.subr.mxu0 0.0
    %2244 = vmatpush1.xpose.msra.mxu0 0.0
    %2245 = vmatprep.subr.mxu0 0.0
    %2246 = vmatpush1.xpose.msra.mxu0 0.0
    %2247 = vmatprep.subr.mxu0 0.0
    %2248 = vmatpush1.xpose.msra.mxu0 0.0
    %2249 = vmatprep.subr.mxu0 0.0
    %2250 = vmatpush1.xpose.msra.mxu0 0.0
    %2251 = vmatprep.subr.mxu0 0.0
    %2252 = vmatpush1.xpose.msra.mxu0 0.0
    %2253 = vmatprep.subr.mxu0 0.0
    %2254 = vmatpush1.xpose.msra.mxu0 0.0
    %2255 = vmatprep.subr.mxu0 0.0
    %2256 = vmatpush1.xpose.msra.mxu0 0.0
    %2257 = vmatprep.subr.mxu0 0.0
    %2258 = vmatpush1.xpose.msra.mxu0 0.0
    %2259 = vmatprep.subr.mxu0 0.0
    %2260 = vmatpush1.xpose.msra.mxu0 0.0
    %2261 = vmatprep.subr.mxu0 0.0
    %2262 = vmatpush1.xpose.msra.mxu0 0.0
    %2263 = vmatprep.subr.mxu0 0.0
    %2264 = vmatpush1.xpose.msra.mxu0 0.0
    %2265 = vmatprep.subr.mxu0 0.0
    %2266 = vmatpush1.xpose.msra.mxu0 0.0
    %2267 = vmatprep.subr.mxu0 0.0
    %2268 = vmatpush1.xpose.msra.mxu0 0.0
    %2269 = vmatprep.subr.mxu0 0.0
    %2270 = vmatpush1.xpose.msra.mxu0 0.0
    %2271 = vmatprep.subr.mxu0 0.0
    %2272 = vmatpush1.xpose.msra.mxu0 0.0
    %2273 = vmatprep.subr.mxu0 0.0
    %2274 = vmatpush1.xpose.msra.mxu0 0.0
    %2275 = vmatprep.subr.mxu0 0.0
    %2276 = vmatpush1.xpose.msra.mxu0 0.0
    %2277 = vmatprep.subr.mxu0 0.0
    %2278 = vmatpush1.xpose.msra.mxu0 0.0
    %2279 = vmatprep.subr.mxu0 0.0
    %2280 = vmatpush1.xpose.msra.mxu0 0.0
    %2281 = vmatprep.subr.mxu0 0.0
    %2282 = vmatpush1.xpose.msra.mxu0 0.0
    %2283 = vmatprep.subr.mxu0 0.0
    %2284 = vmatpush1.xpose.msra.mxu0 0.0
    %2285 = vmatprep.subr.mxu0 0.0
    %2286 = vmatpush1.xpose.msra.mxu0 0.0
    %2287 = vmatprep.subr.mxu0 0.0
    %2288 = vmatpush1.xpose.msra.mxu0 0.0
    %2289 = vmatprep.subr.mxu0 0.0
    %2290 = vmatpush1.xpose.msra.mxu0 0.0
    %2291 = vmatprep.subr.mxu0 0.0
    %2292 = vmatpush1.xpose.msra.mxu0 0.0
    %2293 = vmatprep.mubr.f32.mxu0 0.0
    %v2294 = vand.u32 %v1998, 4294901760
    %v2295 = vsub.f32 %v1998, %v2294
    %v2296 = vand.u32 %v2295, 4294901760
    %2297 = vmatmul.mubr.f32.gmra.mrb[0].mxu0 %v2296
    %v2298 = vpop.f32.mrb[0].mxu0
    %v2299 = vadd.f32 %v2225, %v2298
    %v2300 = vpop.f32.mrb[0].mxu0
    %2301 = vdwg.mxu0
    %2302 = vmatprep.subr.mxu0 0.0
    %v2303 = vand.u32 %v2000, 4294901760
    %v2304 = vsub.f32 %v2000, %v2303
    %v2305 = vand.u32 %v2304, 4294901760
    %2306 = vmatpush1.xpose.msra.mxu0 %v2305
    %2307 = vmatprep.subr.mxu0 0.0
    %2308 = vmatpush1.xpose.msra.mxu0 0.0
    %2309 = vmatprep.subr.mxu0 0.0
    %2310 = vmatpush1.xpose.msra.mxu0 0.0
    %2311 = vmatprep.subr.mxu0 0.0
    %2312 = vmatpush1.xpose.msra.mxu0 0.0
    %2313 = vmatprep.subr.mxu0 0.0
    %2314 = vmatpush1.xpose.msra.mxu0 0.0
    %2315 = vmatprep.subr.mxu0 0.0
    %2316 = vmatpush1.xpose.msra.mxu0 0.0
    %2317 = vmatprep.subr.mxu0 0.0
    %2318 = vmatpush1.xpose.msra.mxu0 0.0
    %2319 = vmatprep.subr.mxu0 0.0
    %2320 = vmatpush1.xpose.msra.mxu0 0.0
    %2321 = vmatprep.subr.mxu0 0.0
    %2322 = vmatpush1.xpose.msra.mxu0 0.0
    %2323 = vmatprep.subr.mxu0 0.0
    %2324 = vmatpush1.xpose.msra.mxu0 0.0
    %2325 = vmatprep.subr.mxu0 0.0
    %2326 = vmatpush1.xpose.msra.mxu0 0.0
    %2327 = vmatprep.subr.mxu0 0.0
    %2328 = vmatpush1.xpose.msra.mxu0 0.0
    %2329 = vmatprep.subr.mxu0 0.0
    %2330 = vmatpush1.xpose.msra.mxu0 0.0
    %2331 = vmatprep.subr.mxu0 0.0
    %2332 = vmatpush1.xpose.msra.mxu0 0.0
    %2333 = vmatprep.subr.mxu0 0.0
    %2334 = vmatpush1.xpose.msra.mxu0 0.0
    %2335 = vmatprep.subr.mxu0 0.0
    %2336 = vmatpush1.xpose.msra.mxu0 0.0
    %2337 = vmatprep.subr.mxu0 0.0
    %2338 = vmatpush1.xpose.msra.mxu0 0.0
    %2339 = vmatprep.subr.mxu0 0.0
    %2340 = vmatpush1.xpose.msra.mxu0 0.0
    %2341 = vmatprep.subr.mxu0 0.0
    %2342 = vmatpush1.xpose.msra.mxu0 0.0
    %2343 = vmatprep.subr.mxu0 0.0
    %2344 = vmatpush1.xpose.msra.mxu0 0.0
    %2345 = vmatprep.subr.mxu0 0.0
    %2346 = vmatpush1.xpose.msra.mxu0 0.0
    %2347 = vmatprep.subr.mxu0 0.0
    %2348 = vmatpush1.xpose.msra.mxu0 0.0
    %2349 = vmatprep.subr.mxu0 0.0
    %2350 = vmatpush1.xpose.msra.mxu0 0.0
    %2351 = vmatprep.subr.mxu0 0.0
    %2352 = vmatpush1.xpose.msra.mxu0 0.0
    %2353 = vmatprep.subr.mxu0 0.0
    %2354 = vmatpush1.xpose.msra.mxu0 0.0
    %2355 = vmatprep.subr.mxu0 0.0
    %2356 = vmatpush1.xpose.msra.mxu0 0.0
    %2357 = vmatprep.subr.mxu0 0.0
    %2358 = vmatpush1.xpose.msra.mxu0 0.0
    %2359 = vmatprep.subr.mxu0 0.0
    %2360 = vmatpush1.xpose.msra.mxu0 0.0
    %2361 = vmatprep.subr.mxu0 0.0
    %2362 = vmatpush1.xpose.msra.mxu0 0.0
    %2363 = vmatprep.subr.mxu0 0.0
    %2364 = vmatpush1.xpose.msra.mxu0 0.0
    %2365 = vmatprep.subr.mxu0 0.0
    %2366 = vmatpush1.xpose.msra.mxu0 0.0
    %2367 = vmatprep.subr.mxu0 0.0
    %2368 = vmatpush1.xpose.msra.mxu0 0.0
    %2369 = vmatprep.mubr.f32.mxu0 0.0
    %v2370 = vand.u32 %v1998, 4294901760
    %2371 = vmatmul.mubr.f32.gmra.mrb[0].mxu0 %v2370
    %v2372 = vpop.f32.mrb[0].mxu0
    %v2373 = vadd.f32 %v2299, %v2372
    %v2374 = vpop.f32.mrb[0].mxu0
    %2375 = vdwg.mxu0
    %2376 = vmatprep.subr.mxu0 0.0
    %v2377 = vand.u32 %v2000, 4294901760
    %2378 = vmatpush1.xpose.msra.mxu0 %v2377
    %2379 = vmatprep.subr.mxu0 0.0
    %2380 = vmatpush1.xpose.msra.mxu0 0.0
    %2381 = vmatprep.subr.mxu0 0.0
    %2382 = vmatpush1.xpose.msra.mxu0 0.0
    %2383 = vmatprep.subr.mxu0 0.0
    %2384 = vmatpush1.xpose.msra.mxu0 0.0
    %2385 = vmatprep.subr.mxu0 0.0
    %2386 = vmatpush1.xpose.msra.mxu0 0.0
    %2387 = vmatprep.subr.mxu0 0.0
    %2388 = vmatpush1.xpose.msra.mxu0 0.0
    %2389 = vmatprep.subr.mxu0 0.0
    %2390 = vmatpush1.xpose.msra.mxu0 0.0
    %2391 = vmatprep.subr.mxu0 0.0
    %2392 = vmatpush1.xpose.msra.mxu0 0.0
    %2393 = vmatprep.subr.mxu0 0.0
    %2394 = vmatpush1.xpose.msra.mxu0 0.0
    %2395 = vmatprep.subr.mxu0 0.0
    %2396 = vmatpush1.xpose.msra.mxu0 0.0
    %2397 = vmatprep.subr.mxu0 0.0
    %2398 = vmatpush1.xpose.msra.mxu0 0.0
    %2399 = vmatprep.subr.mxu0 0.0
    %2400 = vmatpush1.xpose.msra.mxu0 0.0
    %2401 = vmatprep.subr.mxu0 0.0
    %2402 = vmatpush1.xpose.msra.mxu0 0.0
    %2403 = vmatprep.subr.mxu0 0.0
    %2404 = vmatpush1.xpose.msra.mxu0 0.0
    %2405 = vmatprep.subr.mxu0 0.0
    %2406 = vmatpush1.xpose.msra.mxu0 0.0
    %2407 = vmatprep.subr.mxu0 0.0
    %2408 = vmatpush1.xpose.msra.mxu0 0.0
    %2409 = vmatprep.subr.mxu0 0.0
    %2410 = vmatpush1.xpose.msra.mxu0 0.0
    %2411 = vmatprep.subr.mxu0 0.0
    %2412 = vmatpush1.xpose.msra.mxu0 0.0
    %2413 = vmatprep.subr.mxu0 0.0
    %2414 = vmatpush1.xpose.msra.mxu0 0.0
    %2415 = vmatprep.subr.mxu0 0.0
    %2416 = vmatpush1.xpose.msra.mxu0 0.0
    %2417 = vmatprep.subr.mxu0 0.0
    %2418 = vmatpush1.xpose.msra.mxu0 0.0
    %2419 = vmatprep.subr.mxu0 0.0
    %2420 = vmatpush1.xpose.msra.mxu0 0.0
    %2421 = vmatprep.subr.mxu0 0.0
    %2422 = vmatpush1.xpose.msra.mxu0 0.0
    %2423 = vmatprep.subr.mxu0 0.0
    %2424 = vmatpush1.xpose.msra.mxu0 0.0
    %2425 = vmatprep.subr.mxu0 0.0
    %2426 = vmatpush1.xpose.msra.mxu0 0.0
    %2427 = vmatprep.subr.mxu0 0.0
    %2428 = vmatpush1.xpose.msra.mxu0 0.0
    %2429 = vmatprep.subr.mxu0 0.0
    %2430 = vmatpush1.xpose.msra.mxu0 0.0
    %2431 = vmatprep.subr.mxu0 0.0
    %2432 = vmatpush1.xpose.msra.mxu0 0.0
    %2433 = vmatprep.subr.mxu0 0.0
    %2434 = vmatpush1.xpose.msra.mxu0 0.0
    %2435 = vmatprep.subr.mxu0 0.0
    %2436 = vmatpush1.xpose.msra.mxu0 0.0
    %2437 = vmatprep.subr.mxu0 0.0
    %2438 = vmatpush1.xpose.msra.mxu0 0.0
    %2439 = vmatprep.subr.mxu0 0.0
    %2440 = vmatpush1.xpose.msra.mxu0 0.0
    %2441 = vmatprep.mubr.f32.mxu0 0.0
    %v2442 = vand.u32 %v1998, 4294901760
    %2443 = vmatmul.mubr.f32.gmra.mrb[0].mxu0 %v2442
    %v2444 = vpop.f32.mrb[0].mxu0
    %v2445 = vadd.f32 %v2373, %v2444
    %v2446 = vpop.f32.mrb[0].mxu0
    %2447 = vdwg.mxu0
    %v2448 = vmul.f32 %v1089, 0.25
    %v2449 = vmul.f32 %v1541, 0.25
    %v2450 = vmul.f32 %v1993, 0.25
    %v2451 = vmul.f32 %v2445, 0.25
    %vm2452 = vcmask 64512
    %v2453 = vsel %vm2452, %v2448, -inf
    %2454 = vmax.xlane.f32.xlu0 %v2453
    %v2455 = vpop.xlane.xlu0 %2454
    %v2456 = vsel %vm2452, %v2449, -inf
    %2457 = vmax.xlane.f32.xlu0 %v2456
    %v2458 = vpop.xlane.xlu0 %2457
    %v2459 = vsel %vm2452, %v2450, -inf
    %2460 = vmax.xlane.f32.xlu0 %v2459
    %v2461 = vpop.xlane.xlu0 %2460
    %v2462 = vsel %vm2452, %v2451, -inf
    %2463 = vmax.xlane.f32.xlu0 %v2462
    %v2464 = vpop.xlane.xlu0 %2463
    %v2465 = vsub.f32 %v2448, %v2455
    %v2466 = vsub.f32 %v2449, %v2458
    %v2467 = vsub.f32 %v2450, %v2461
    %v2468 = vsub.f32 %v2451, %v2464
    %v2469 = vmul.f32 %v2465, 1.442695
    %v2470 = vpow.pop %v2469
    %v2471 = vmul.f32 %v2466, 1.442695
    %v2472 = vpow.pop %v2471
    %v2473 = vmul.f32 %v2467, 1.442695
    %v2474 = vpow.pop %v2473
    %v2475 = vmul.f32 %v2468, 1.442695
    %v2476 = vpow.pop %v2475
    %v2477 = vsel %vm2452, %v2470, 0.0
    %2478 = vadd.xlane.f32.xlu0 %v2477
    %v2479 = vpop.xlane.xlu0 %2478
    %v2480 = vsel %vm2452, %v2472, 0.0
    %2481 = vadd.xlane.f32.xlu0 %v2480
    %v2482 = vpop.xlane.xlu0 %2481
    %v2483 = vsel %vm2452, %v2474, 0.0
    %2484 = vadd.xlane.f32.xlu0 %v2483
    %v2485 = vpop.xlane.xlu0 %2484
    %v2486 = vsel %vm2452, %v2476, 0.0
    %2487 = vadd.xlane.f32.xlu0 %v2486
    %v2488 = vpop.xlane.xlu0 %2487
    %v2489 = vrcp.pop %v2479
    %v2490 = vmul.f32 %v2470, %v2489
    %v2491 = vrcp.pop %v2482
    %v2492 = vmul.f32 %v2472, %v2491
    %v2493 = vrcp.pop %v2485
    %v2494 = vmul.f32 %v2474, %v2493
    %v2495 = vrcp.pop %v2488
    %v2496 = vmul.f32 %v2476, %v2495
    %2497 = vrot.lane.b32.xlu0 %v624, 64
    %v2498 = vpop.permute.xlu0 %2497
    %v2501 = vsel %vm2452, %v2490, 0
    %2503 = vmatprep.subr.mxu0 0.0
    %v2504 = vand.u32 %v2498, 4294901760
    %2505 = vmatpush1.msra.mxu0 %v2504
    %2506 = vmatprep.subr.mxu0 0.0
    %2507 = vmatpush1.msra.mxu0 0.0
    %2508 = vmatprep.subr.mxu0 0.0
    %2509 = vmatpush1.msra.mxu0 0.0
    %2510 = vmatprep.subr.mxu0 0.0
    %2511 = vmatpush1.msra.mxu0 0.0
    %2512 = vmatprep.subr.mxu0 0.0
    %2513 = vmatpush1.msra.mxu0 0.0
    %2514 = vmatprep.subr.mxu0 0.0
    %2515 = vmatpush1.msra.mxu0 0.0
    %2516 = vmatprep.subr.mxu0 0.0
    %2517 = vmatpush1.msra.mxu0 0.0
    %2518 = vmatprep.subr.mxu0 0.0
    %2519 = vmatpush1.msra.mxu0 0.0
    %2520 = vmatprep.subr.mxu0 0.0
    %2521 = vmatpush1.msra.mxu0 0.0
    %2522 = vmatprep.subr.mxu0 0.0
    %2523 = vmatpush1.msra.mxu0 0.0
    %2524 = vmatprep.subr.mxu0 0.0
    %2525 = vmatpush1.msra.mxu0 0.0
    %2526 = vmatprep.subr.mxu0 0.0
    %2527 = vmatpush1.msra.mxu0 0.0
    %2528 = vmatprep.subr.mxu0 0.0
    %2529 = vmatpush1.msra.mxu0 0.0
    %2530 = vmatprep.subr.mxu0 0.0
    %2531 = vmatpush1.msra.mxu0 0.0
    %2532 = vmatprep.subr.mxu0 0.0
    %2533 = vmatpush1.msra.mxu0 0.0
    %2534 = vmatprep.subr.mxu0 0.0
    %2535 = vmatpush1.msra.mxu0 0.0
    %2536 = vmatprep.subr.mxu0 0.0
    %2537 = vmatpush1.msra.mxu0 0.0
    %2538 = vmatprep.subr.mxu0 0.0
    %2539 = vmatpush1.msra.mxu0 0.0
    %2540 = vmatprep.subr.mxu0 0.0
    %2541 = vmatpush1.msra.mxu0 0.0
    %2542 = vmatprep.subr.mxu0 0.0
    %2543 = vmatpush1.msra.mxu0 0.0
    %2544 = vmatprep.subr.mxu0 0.0
    %2545 = vmatpush1.msra.mxu0 0.0
    %2546 = vmatprep.subr.mxu0 0.0
    %2547 = vmatpush1.msra.mxu0 0.0
    %2548 = vmatprep.subr.mxu0 0.0
    %2549 = vmatpush1.msra.mxu0 0.0
    %2550 = vmatprep.subr.mxu0 0.0
    %2551 = vmatpush1.msra.mxu0 0.0
    %2552 = vmatprep.subr.mxu0 0.0
    %2553 = vmatpush1.msra.mxu0 0.0
    %2554 = vmatprep.subr.mxu0 0.0
    %2555 = vmatpush1.msra.mxu0 0.0
    %2556 = vmatprep.subr.mxu0 0.0
    %2557 = vmatpush1.msra.mxu0 0.0
    %2558 = vmatprep.subr.mxu0 0.0
    %2559 = vmatpush1.msra.mxu0 0.0
    %2560 = vmatprep.subr.mxu0 0.0
    %2561 = vmatpush1.msra.mxu0 0.0
    %2562 = vmatprep.subr.mxu0 0.0
    %2563 = vmatpush1.msra.mxu0 0.0
    %2564 = vmatprep.subr.mxu0 0.0
    %2565 = vmatpush1.msra.mxu0 0.0
    %2566 = vmatprep.subr.mxu0 0.0
    %2567 = vmatpush1.msra.mxu0 0.0
    %2568 = vmatprep.mubr.f32.mxu0 0.0
    %v2569 = vand.u32 %v2501, 4294901760
    %v2570 = vsub.f32 %v2501, %v2569
    %v2571 = vand.u32 %v2570, 4294901760
    %v2572 = vsub.f32 %v2570, %v2571
    %v2573 = vand.u32 %v2572, 4294901760
    %2574 = vmatmul.mubr.f32.gmra.mrb[0].mxu0 %v2573
    %v2575 = vpop.f32.mrb[0].mxu0
    %v2576 = vadd.f32 0.0, %v2575
    %v2577 = vpop.f32.mrb[0].mxu0
    %2578 = vdwg.mxu0
    %2579 = vmatprep.subr.mxu0 0.0
    %v2580 = vand.u32 %v2498, 4294901760
    %v2581 = vsub.f32 %v2498, %v2580
    %v2582 = vand.u32 %v2581, 4294901760
    %v2583 = vsub.f32 %v2581, %v2582
    %v2584 = vand.u32 %v2583, 4294901760
    %2585 = vmatpush1.msra.mxu0 %v2584
    %2586 = vmatprep.subr.mxu0 0.0
    %2587 = vmatpush1.msra.mxu0 0.0
    %2588 = vmatprep.subr.mxu0 0.0
    %2589 = vmatpush1.msra.mxu0 0.0
    %2590 = vmatprep.subr.mxu0 0.0
    %2591 = vmatpush1.msra.mxu0 0.0
    %2592 = vmatprep.subr.mxu0 0.0
    %2593 = vmatpush1.msra.mxu0 0.0
    %2594 = vmatprep.subr.mxu0 0.0
    %2595 = vmatpush1.msra.mxu0 0.0
    %2596 = vmatprep.subr.mxu0 0.0
    %2597 = vmatpush1.msra.mxu0 0.0
    %2598 = vmatprep.subr.mxu0 0.0
    %2599 = vmatpush1.msra.mxu0 0.0
    %2600 = vmatprep.subr.mxu0 0.0
    %2601 = vmatpush1.msra.mxu0 0.0
    %2602 = vmatprep.subr.mxu0 0.0
    %2603 = vmatpush1.msra.mxu0 0.0
    %2604 = vmatprep.subr.mxu0 0.0
    %2605 = vmatpush1.msra.mxu0 0.0
    %2606 = vmatprep.subr.mxu0 0.0
    %2607 = vmatpush1.msra.mxu0 0.0
    %2608 = vmatprep.subr.mxu0 0.0
    %2609 = vmatpush1.msra.mxu0 0.0
    %2610 = vmatprep.subr.mxu0 0.0
    %2611 = vmatpush1.msra.mxu0 0.0
    %2612 = vmatprep.subr.mxu0 0.0
    %2613 = vmatpush1.msra.mxu0 0.0
    %2614 = vmatprep.subr.mxu0 0.0
    %2615 = vmatpush1.msra.mxu0 0.0
    %2616 = vmatprep.subr.mxu0 0.0
    %2617 = vmatpush1.msra.mxu0 0.0
    %2618 = vmatprep.subr.mxu0 0.0
    %2619 = vmatpush1.msra.mxu0 0.0
    %2620 = vmatprep.subr.mxu0 0.0
    %2621 = vmatpush1.msra.mxu0 0.0
    %2622 = vmatprep.subr.mxu0 0.0
    %2623 = vmatpush1.msra.mxu0 0.0
    %2624 = vmatprep.subr.mxu0 0.0
    %2625 = vmatpush1.msra.mxu0 0.0
    %2626 = vmatprep.subr.mxu0 0.0
    %2627 = vmatpush1.msra.mxu0 0.0
    %2628 = vmatprep.subr.mxu0 0.0
    %2629 = vmatpush1.msra.mxu0 0.0
    %2630 = vmatprep.subr.mxu0 0.0
    %2631 = vmatpush1.msra.mxu0 0.0
    %2632 = vmatprep.subr.mxu0 0.0
    %2633 = vmatpush1.msra.mxu0 0.0
    %2634 = vmatprep.subr.mxu0 0.0
    %2635 = vmatpush1.msra.mxu0 0.0
    %2636 = vmatprep.subr.mxu0 0.0
    %2637 = vmatpush1.msra.mxu0 0.0
    %2638 = vmatprep.subr.mxu0 0.0
    %2639 = vmatpush1.msra.mxu0 0.0
    %2640 = vmatprep.subr.mxu0 0.0
    %2641 = vmatpush1.msra.mxu0 0.0
    %2642 = vmatprep.subr.mxu0 0.0
    %2643 = vmatpush1.msra.mxu0 0.0
    %2644 = vmatprep.subr.mxu0 0.0
    %2645 = vmatpush1.msra.mxu0 0.0
    %2646 = vmatprep.subr.mxu0 0.0
    %2647 = vmatpush1.msra.mxu0 0.0
    %2648 = vmatprep.mubr.f32.mxu0 0.0
    %v2649 = vand.u32 %v2501, 4294901760
    %2650 = vmatmul.mubr.f32.gmra.mrb[0].mxu0 %v2649
    %v2651 = vpop.f32.mrb[0].mxu0
    %v2652 = vadd.f32 %v2576, %v2651
    %v2653 = vpop.f32.mrb[0].mxu0
    %2654 = vdwg.mxu0
    %2655 = vmatprep.subr.mxu0 0.0
    %v2656 = vand.u32 %v2498, 4294901760
    %v2657 = vsub.f32 %v2498, %v2656
    %2658 = vmatpush1.msra.mxu0 %v2657
    %2659 = vmatprep.subr.mxu0 0.0
    %2660 = vmatpush1.msra.mxu0 0.0
    %2661 = vmatprep.subr.mxu0 0.0
    %2662 = vmatpush1.msra.mxu0 0.0
    %2663 = vmatprep.subr.mxu0 0.0
    %2664 = vmatpush1.msra.mxu0 0.0
    %2665 = vmatprep.subr.mxu0 0.0
    %2666 = vmatpush1.msra.mxu0 0.0
    %2667 = vmatprep.subr.mxu0 0.0
    %2668 = vmatpush1.msra.mxu0 0.0
    %2669 = vmatprep.subr.mxu0 0.0
    %2670 = vmatpush1.msra.mxu0 0.0
    %2671 = vmatprep.subr.mxu0 0.0
    %2672 = vmatpush1.msra.mxu0 0.0
    %2673 = vmatprep.subr.mxu0 0.0
    %2674 = vmatpush1.msra.mxu0 0.0
    %2675 = vmatprep.subr.mxu0 0.0
    %2676 = vmatpush1.msra.mxu0 0.0
    %2677 = vmatprep.subr.mxu0 0.0
    %2678 = vmatpush1.msra.mxu0 0.0
    %2679 = vmatprep.subr.mxu0 0.0
    %2680 = vmatpush1.msra.mxu0 0.0
    %2681 = vmatprep.subr.mxu0 0.0
    %2682 = vmatpush1.msra.mxu0 0.0
    %2683 = vmatprep.subr.mxu0 0.0
    %2684 = vmatpush1.msra.mxu0 0.0
    %2685 = vmatprep.subr.mxu0 0.0
    %2686 = vmatpush1.msra.mxu0 0.0
    %2687 = vmatprep.subr.mxu0 0.0
    %2688 = vmatpush1.msra.mxu0 0.0
    %2689 = vmatprep.subr.mxu0 0.0
    %2690 = vmatpush1.msra.mxu0 0.0
    %2691 = vmatprep.subr.mxu0 0.0
    %2692 = vmatpush1.msra.mxu0 0.0
    %2693 = vmatprep.subr.mxu0 0.0
    %2694 = vmatpush1.msra.mxu0 0.0
    %2695 = vmatprep.subr.mxu0 0.0
    %2696 = vmatpush1.msra.mxu0 0.0
    %2697 = vmatprep.subr.mxu0 0.0
    %2698 = vmatpush1.msra.mxu0 0.0
    %2699 = vmatprep.subr.mxu0 0.0
    %2700 = vmatpush1.msra.mxu0 0.0
    %2701 = vmatprep.subr.mxu0 0.0
    %2702 = vmatpush1.msra.mxu0 0.0
    %2703 = vmatprep.subr.mxu0 0.0
    %2704 = vmatpush1.msra.mxu0 0.0
    %2705 = vmatprep.subr.mxu0 0.0
    %2706 = vmatpush1.msra.mxu0 0.0
    %2707 = vmatprep.subr.mxu0 0.0
    %2708 = vmatpush1.msra.mxu0 0.0
    %2709 = vmatprep.subr.mxu0 0.0
    %2710 = vmatpush1.msra.mxu0 0.0
    %2711 = vmatprep.subr.mxu0 0.0
    %2712 = vmatpush1.msra.mxu0 0.0
    %2713 = vmatprep.subr.mxu0 0.0
    %2714 = vmatpush1.msra.mxu0 0.0
    %2715 = vmatprep.subr.mxu0 0.0
    %2716 = vmatpush1.msra.mxu0 0.0
    %2717 = vmatprep.subr.mxu0 0.0
    %2718 = vmatpush1.msra.mxu0 0.0
    %2719 = vmatprep.subr.mxu0 0.0
    %2720 = vmatpush1.msra.mxu0 0.0
    %2721 = vmatprep.mubr.f32.mxu0 0.0
    %v2722 = vand.u32 %v2501, 4294901760
    %v2723 = vsub.f32 %v2501, %v2722
    %2724 = vmatmul.mubr.f32.gmra.mrb[0].mxu0 %v2723
    %v2725 = vpop.f32.mrb[0].mxu0
    %v2726 = vadd.f32 %v2652, %v2725
    %v2727 = vpop.f32.mrb[0].mxu0
    %2728 = vdwg.mxu0
    %2729 = vmatprep.subr.mxu0 0.0
    %v2730 = vand.u32 %v2498, 4294901760
    %2731 = vmatpush1.msra.mxu0 %v2730
    %2732 = vmatprep.subr.mxu0 0.0
    %2733 = vmatpush1.msra.mxu0 0.0
    %2734 = vmatprep.subr.mxu0 0.0
    %2735 = vmatpush1.msra.mxu0 0.0
    %2736 = vmatprep.subr.mxu0 0.0
    %2737 = vmatpush1.msra.mxu0 0.0
    %2738 = vmatprep.subr.mxu0 0.0
    %2739 = vmatpush1.msra.mxu0 0.0
    %2740 = vmatprep.subr.mxu0 0.0
    %2741 = vmatpush1.msra.mxu0 0.0
    %2742 = vmatprep.subr.mxu0 0.0
    %2743 = vmatpush1.msra.mxu0 0.0
    %2744 = vmatprep.subr.mxu0 0.0
    %2745 = vmatpush1.msra.mxu0 0.0
    %2746 = vmatprep.subr.mxu0 0.0
    %2747 = vmatpush1.msra.mxu0 0.0
    %2748 = vmatprep.subr.mxu0 0.0
    %2749 = vmatpush1.msra.mxu0 0.0
    %2750 = vmatprep.subr.mxu0 0.0
    %2751 = vmatpush1.msra.mxu0 0.0
    %2752 = vmatprep.subr.mxu0 0.0
    %2753 = vmatpush1.msra.mxu0 0.0
    %2754 = vmatprep.subr.mxu0 0.0
    %2755 = vmatpush1.msra.mxu0 0.0
    %2756 = vmatprep.subr.mxu0 0.0
    %2757 = vmatpush1.msra.mxu0 0.0
    %2758 = vmatprep.subr.mxu0 0.0
    %2759 = vmatpush1.msra.mxu0 0.0
    %2760 = vmatprep.subr.mxu0 0.0
    %2761 = vmatpush1.msra.mxu0 0.0
    %2762 = vmatprep.subr.mxu0 0.0
    %2763 = vmatpush1.msra.mxu0 0.0
    %2764 = vmatprep.subr.mxu0 0.0
    %2765 = vmatpush1.msra.mxu0 0.0
    %2766 = vmatprep.subr.mxu0 0.0
    %2767 = vmatpush1.msra.mxu0 0.0
    %2768 = vmatprep.subr.mxu0 0.0
    %2769 = vmatpush1.msra.mxu0 0.0
    %2770 = vmatprep.subr.mxu0 0.0
    %2771 = vmatpush1.msra.mxu0 0.0
    %2772 = vmatprep.subr.mxu0 0.0
    %2773 = vmatpush1.msra.mxu0 0.0
    %2774 = vmatprep.subr.mxu0 0.0
    %2775 = vmatpush1.msra.mxu0 0.0
    %2776 = vmatprep.subr.mxu0 0.0
    %2777 = vmatpush1.msra.mxu0 0.0
    %2778 = vmatprep.subr.mxu0 0.0
    %2779 = vmatpush1.msra.mxu0 0.0
    %2780 = vmatprep.subr.mxu0 0.0
    %2781 = vmatpush1.msra.mxu0 0.0
    %2782 = vmatprep.subr.mxu0 0.0
    %2783 = vmatpush1.msra.mxu0 0.0
    %2784 = vmatprep.subr.mxu0 0.0
    %2785 = vmatpush1.msra.mxu0 0.0
    %2786 = vmatprep.subr.mxu0 0.0
    %2787 = vmatpush1.msra.mxu0 0.0
    %2788 = vmatprep.subr.mxu0 0.0
    %2789 = vmatpush1.msra.mxu0 0.0
    %2790 = vmatprep.subr.mxu0 0.0
    %2791 = vmatpush1.msra.mxu0 0.0
    %2792 = vmatprep.subr.mxu0 0.0
    %2793 = vmatpush1.msra.mxu0 0.0
    %2794 = vmatprep.mubr.f32.mxu0 0.0
    %v2795 = vand.u32 %v2501, 4294901760
    %v2796 = vsub.f32 %v2501, %v2795
    %v2797 = vand.u32 %v2796, 4294901760
    %2798 = vmatmul.mubr.f32.gmra.mrb[0].mxu0 %v2797
    %v2799 = vpop.f32.mrb[0].mxu0
    %v2800 = vadd.f32 %v2726, %v2799
    %v2801 = vpop.f32.mrb[0].mxu0
    %2802 = vdwg.mxu0
    %2803 = vmatprep.subr.mxu0 0.0
    %v2804 = vand.u32 %v2498, 4294901760
    %v2805 = vsub.f32 %v2498, %v2804
    %v2806 = vand.u32 %v2805, 4294901760
    %2807 = vmatpush1.msra.mxu0 %v2806
    %2808 = vmatprep.subr.mxu0 0.0
    %2809 = vmatpush1.msra.mxu0 0.0
    %2810 = vmatprep.subr.mxu0 0.0
    %2811 = vmatpush1.msra.mxu0 0.0
    %2812 = vmatprep.subr.mxu0 0.0
    %2813 = vmatpush1.msra.mxu0 0.0
    %2814 = vmatprep.subr.mxu0 0.0
    %2815 = vmatpush1.msra.mxu0 0.0
    %2816 = vmatprep.subr.mxu0 0.0
    %2817 = vmatpush1.msra.mxu0 0.0
    %2818 = vmatprep.subr.mxu0 0.0
    %2819 = vmatpush1.msra.mxu0 0.0
    %2820 = vmatprep.subr.mxu0 0.0
    %2821 = vmatpush1.msra.mxu0 0.0
    %2822 = vmatprep.subr.mxu0 0.0
    %2823 = vmatpush1.msra.mxu0 0.0
    %2824 = vmatprep.subr.mxu0 0.0
    %2825 = vmatpush1.msra.mxu0 0.0
    %2826 = vmatprep.subr.mxu0 0.0
    %2827 = vmatpush1.msra.mxu0 0.0
    %2828 = vmatprep.subr.mxu0 0.0
    %2829 = vmatpush1.msra.mxu0 0.0
    %2830 = vmatprep.subr.mxu0 0.0
    %2831 = vmatpush1.msra.mxu0 0.0
    %2832 = vmatprep.subr.mxu0 0.0
    %2833 = vmatpush1.msra.mxu0 0.0
    %2834 = vmatprep.subr.mxu0 0.0
    %2835 = vmatpush1.msra.mxu0 0.0
    %2836 = vmatprep.subr.mxu0 0.0
    %2837 = vmatpush1.msra.mxu0 0.0
    %2838 = vmatprep.subr.mxu0 0.0
    %2839 = vmatpush1.msra.mxu0 0.0
    %2840 = vmatprep.subr.mxu0 0.0
    %2841 = vmatpush1.msra.mxu0 0.0
    %2842 = vmatprep.subr.mxu0 0.0
    %2843 = vmatpush1.msra.mxu0 0.0
    %2844 = vmatprep.subr.mxu0 0.0
    %2845 = vmatpush1.msra.mxu0 0.0
    %2846 = vmatprep.subr.mxu0 0.0
    %2847 = vmatpush1.msra.mxu0 0.0
    %2848 = vmatprep.subr.mxu0 0.0
    %2849 = vmatpush1.msra.mxu0 0.0
    %2850 = vmatprep.subr.mxu0 0.0
    %2851 = vmatpush1.msra.mxu0 0.0
    %2852 = vmatprep.subr.mxu0 0.0
    %2853 = vmatpush1.msra.mxu0 0.0
    %2854 = vmatprep.subr.mxu0 0.0
    %2855 = vmatpush1.msra.mxu0 0.0
    %2856 = vmatprep.subr.mxu0 0.0
    %2857 = vmatpush1.msra.mxu0 0.0
    %2858 = vmatprep.subr.mxu0 0.0
    %2859 = vmatpush1.msra.mxu0 0.0
    %2860 = vmatprep.subr.mxu0 0.0
    %2861 = vmatpush1.msra.mxu0 0.0
    %2862 = vmatprep.subr.mxu0 0.0
    %2863 = vmatpush1.msra.mxu0 0.0
    %2864 = vmatprep.subr.mxu0 0.0
    %2865 = vmatpush1.msra.mxu0 0.0
    %2866 = vmatprep.subr.mxu0 0.0
    %2867 = vmatpush1.msra.mxu0 0.0
    %2868 = vmatprep.subr.mxu0 0.0
    %2869 = vmatpush1.msra.mxu0 0.0
    %2870 = vmatprep.mubr.f32.mxu0 0.0
    %v2871 = vand.u32 %v2501, 4294901760
    %2872 = vmatmul.mubr.f32.gmra.mrb[0].mxu0 %v2871
    %v2873 = vpop.f32.mrb[0].mxu0
    %v2874 = vadd.f32 %v2800, %v2873
    %v2875 = vpop.f32.mrb[0].mxu0
    %2876 = vdwg.mxu0
    %2877 = vmatprep.subr.mxu0 0.0
    %v2878 = vand.u32 %v2498, 4294901760
    %2879 = vmatpush1.msra.mxu0 %v2878
    %2880 = vmatprep.subr.mxu0 0.0
    %2881 = vmatpush1.msra.mxu0 0.0
    %2882 = vmatprep.subr.mxu0 0.0
    %2883 = vmatpush1.msra.mxu0 0.0
    %2884 = vmatprep.subr.mxu0 0.0
    %2885 = vmatpush1.msra.mxu0 0.0
    %2886 = vmatprep.subr.mxu0 0.0
    %2887 = vmatpush1.msra.mxu0 0.0
    %2888 = vmatprep.subr.mxu0 0.0
    %2889 = vmatpush1.msra.mxu0 0.0
    %2890 = vmatprep.subr.mxu0 0.0
    %2891 = vmatpush1.msra.mxu0 0.0
    %2892 = vmatprep.subr.mxu0 0.0
    %2893 = vmatpush1.msra.mxu0 0.0
    %2894 = vmatprep.subr.mxu0 0.0
    %2895 = vmatpush1.msra.mxu0 0.0
    %2896 = vmatprep.subr.mxu0 0.0
    %2897 = vmatpush1.msra.mxu0 0.0
    %2898 = vmatprep.subr.mxu0 0.0
    %2899 = vmatpush1.msra.mxu0 0.0
    %2900 = vmatprep.subr.mxu0 0.0
    %2901 = vmatpush1.msra.mxu0 0.0
    %2902 = vmatprep.subr.mxu0 0.0
    %2903 = vmatpush1.msra.mxu0 0.0
    %2904 = vmatprep.subr.mxu0 0.0
    %2905 = vmatpush1.msra.mxu0 0.0
    %2906 = vmatprep.subr.mxu0 0.0
    %2907 = vmatpush1.msra.mxu0 0.0
    %2908 = vmatprep.subr.mxu0 0.0
    %2909 = vmatpush1.msra.mxu0 0.0
    %2910 = vmatprep.subr.mxu0 0.0
    %2911 = vmatpush1.msra.mxu0 0.0
    %2912 = vmatprep.subr.mxu0 0.0
    %2913 = vmatpush1.msra.mxu0 0.0
    %2914 = vmatprep.subr.mxu0 0.0
    %2915 = vmatpush1.msra.mxu0 0.0
    %2916 = vmatprep.subr.mxu0 0.0
    %2917 = vmatpush1.msra.mxu0 0.0
    %2918 = vmatprep.subr.mxu0 0.0
    %2919 = vmatpush1.msra.mxu0 0.0
    %2920 = vmatprep.subr.mxu0 0.0
    %2921 = vmatpush1.msra.mxu0 0.0
    %2922 = vmatprep.subr.mxu0 0.0
    %2923 = vmatpush1.msra.mxu0 0.0
    %2924 = vmatprep.subr.mxu0 0.0
    %2925 = vmatpush1.msra.mxu0 0.0
    %2926 = vmatprep.subr.mxu0 0.0
    %2927 = vmatpush1.msra.mxu0 0.0
    %2928 = vmatprep.subr.mxu0 0.0
    %2929 = vmatpush1.msra.mxu0 0.0
    %2930 = vmatprep.subr.mxu0 0.0
    %2931 = vmatpush1.msra.mxu0 0.0
    %2932 = vmatprep.subr.mxu0 0.0
    %2933 = vmatpush1.msra.mxu0 0.0
    %2934 = vmatprep.subr.mxu0 0.0
    %2935 = vmatpush1.msra.mxu0 0.0
    %2936 = vmatprep.subr.mxu0 0.0
    %2937 = vmatpush1.msra.mxu0 0.0
    %2938 = vmatprep.subr.mxu0 0.0
    %2939 = vmatpush1.msra.mxu0 0.0
    %2940 = vmatprep.subr.mxu0 0.0
    %2941 = vmatpush1.msra.mxu0 0.0
    %2942 = vmatprep.mubr.f32.mxu0 0.0
    %v2943 = vand.u32 %v2501, 4294901760
    %2944 = vmatmul.mubr.f32.gmra.mrb[0].mxu0 %v2943
    %v2945 = vpop.f32.mrb[0].mxu0
    %v2946 = vadd.f32 %v2874, %v2945
    %v2947 = vpop.f32.mrb[0].mxu0
    %2948 = vdwg.mxu0
    %2949 = vrot.lane.b32.xlu0 %v630, 64
    %v2950 = vpop.permute.xlu0 %2949
    %v2953 = vsel %vm2452, %v2492, 0
    %2955 = vmatprep.subr.mxu0 0.0
    %v2956 = vand.u32 %v2950, 4294901760
    %2957 = vmatpush1.msra.mxu0 %v2956
    %2958 = vmatprep.subr.mxu0 0.0
    %2959 = vmatpush1.msra.mxu0 0.0
    %2960 = vmatprep.subr.mxu0 0.0
    %2961 = vmatpush1.msra.mxu0 0.0
    %2962 = vmatprep.subr.mxu0 0.0
    %2963 = vmatpush1.msra.mxu0 0.0
    %2964 = vmatprep.subr.mxu0 0.0
    %2965 = vmatpush1.msra.mxu0 0.0
    %2966 = vmatprep.subr.mxu0 0.0
    %2967 = vmatpush1.msra.mxu0 0.0
    %2968 = vmatprep.subr.mxu0 0.0
    %2969 = vmatpush1.msra.mxu0 0.0
    %2970 = vmatprep.subr.mxu0 0.0
    %2971 = vmatpush1.msra.mxu0 0.0
    %2972 = vmatprep.subr.mxu0 0.0
    %2973 = vmatpush1.msra.mxu0 0.0
    %2974 = vmatprep.subr.mxu0 0.0
    %2975 = vmatpush1.msra.mxu0 0.0
    %2976 = vmatprep.subr.mxu0 0.0
    %2977 = vmatpush1.msra.mxu0 0.0
    %2978 = vmatprep.subr.mxu0 0.0
    %2979 = vmatpush1.msra.mxu0 0.0
    %2980 = vmatprep.subr.mxu0 0.0
    %2981 = vmatpush1.msra.mxu0 0.0
    %2982 = vmatprep.subr.mxu0 0.0
    %2983 = vmatpush1.msra.mxu0 0.0
    %2984 = vmatprep.subr.mxu0 0.0
    %2985 = vmatpush1.msra.mxu0 0.0
    %2986 = vmatprep.subr.mxu0 0.0
    %2987 = vmatpush1.msra.mxu0 0.0
    %2988 = vmatprep.subr.mxu0 0.0
    %2989 = vmatpush1.msra.mxu0 0.0
    %2990 = vmatprep.subr.mxu0 0.0
    %2991 = vmatpush1.msra.mxu0 0.0
    %2992 = vmatprep.subr.mxu0 0.0
    %2993 = vmatpush1.msra.mxu0 0.0
    %2994 = vmatprep.subr.mxu0 0.0
    %2995 = vmatpush1.msra.mxu0 0.0
    %2996 = vmatprep.subr.mxu0 0.0
    %2997 = vmatpush1.msra.mxu0 0.0
    %2998 = vmatprep.subr.mxu0 0.0
    %2999 = vmatpush1.msra.mxu0 0.0
    %3000 = vmatprep.subr.mxu0 0.0
    %3001 = vmatpush1.msra.mxu0 0.0
    %3002 = vmatprep.subr.mxu0 0.0
    %3003 = vmatpush1.msra.mxu0 0.0
    %3004 = vmatprep.subr.mxu0 0.0
    %3005 = vmatpush1.msra.mxu0 0.0
    %3006 = vmatprep.subr.mxu0 0.0
    %3007 = vmatpush1.msra.mxu0 0.0
    %3008 = vmatprep.subr.mxu0 0.0
    %3009 = vmatpush1.msra.mxu0 0.0
    %3010 = vmatprep.subr.mxu0 0.0
    %3011 = vmatpush1.msra.mxu0 0.0
    %3012 = vmatprep.subr.mxu0 0.0
    %3013 = vmatpush1.msra.mxu0 0.0
    %3014 = vmatprep.subr.mxu0 0.0
    %3015 = vmatpush1.msra.mxu0 0.0
    %3016 = vmatprep.subr.mxu0 0.0
    %3017 = vmatpush1.msra.mxu0 0.0
    %3018 = vmatprep.subr.mxu0 0.0
    %3019 = vmatpush1.msra.mxu0 0.0
    %3020 = vmatprep.mubr.f32.mxu0 0.0
    %v3021 = vand.u32 %v2953, 4294901760
    %v3022 = vsub.f32 %v2953, %v3021
    %v3023 = vand.u32 %v3022, 4294901760
    %v3024 = vsub.f32 %v3022, %v3023
    %v3025 = vand.u32 %v3024, 4294901760
    %3026 = vmatmul.mubr.f32.gmra.mrb[0].mxu0 %v3025
    %v3027 = vpop.f32.mrb[0].mxu0
    %v3028 = vadd.f32 0.0, %v3027
    %v3029 = vpop.f32.mrb[0].mxu0
    %3030 = vdwg.mxu0
    %3031 = vmatprep.subr.mxu0 0.0
    %v3032 = vand.u32 %v2950, 4294901760
    %v3033 = vsub.f32 %v2950, %v3032
    %v3034 = vand.u32 %v3033, 4294901760
    %v3035 = vsub.f32 %v3033, %v3034
    %v3036 = vand.u32 %v3035, 4294901760
    %3037 = vmatpush1.msra.mxu0 %v3036
    %3038 = vmatprep.subr.mxu0 0.0
    %3039 = vmatpush1.msra.mxu0 0.0
    %3040 = vmatprep.subr.mxu0 0.0
    %3041 = vmatpush1.msra.mxu0 0.0
    %3042 = vmatprep.subr.mxu0 0.0
    %3043 = vmatpush1.msra.mxu0 0.0
    %3044 = vmatprep.subr.mxu0 0.0
    %3045 = vmatpush1.msra.mxu0 0.0
    %3046 = vmatprep.subr.mxu0 0.0
    %3047 = vmatpush1.msra.mxu0 0.0
    %3048 = vmatprep.subr.mxu0 0.0
    %3049 = vmatpush1.msra.mxu0 0.0
    %3050 = vmatprep.subr.mxu0 0.0
    %3051 = vmatpush1.msra.mxu0 0.0
    %3052 = vmatprep.subr.mxu0 0.0
    %3053 = vmatpush1.msra.mxu0 0.0
    %3054 = vmatprep.subr.mxu0 0.0
    %3055 = vmatpush1.msra.mxu0 0.0
    %3056 = vmatprep.subr.mxu0 0.0
    %3057 = vmatpush1.msra.mxu0 0.0
    %3058 = vmatprep.subr.mxu0 0.0
    %3059 = vmatpush1.msra.mxu0 0.0
    %3060 = vmatprep.subr.mxu0 0.0
    %3061 = vmatpush1.msra.mxu0 0.0
    %3062 = vmatprep.subr.mxu0 0.0
    %3063 = vmatpush1.msra.mxu0 0.0
    %3064 = vmatprep.subr.mxu0 0.0
    %3065 = vmatpush1.msra.mxu0 0.0
    %3066 = vmatprep.subr.mxu0 0.0
    %3067 = vmatpush1.msra.mxu0 0.0
    %3068 = vmatprep.subr.mxu0 0.0
    %3069 = vmatpush1.msra.mxu0 0.0
    %3070 = vmatprep.subr.mxu0 0.0
    %3071 = vmatpush1.msra.mxu0 0.0
    %3072 = vmatprep.subr.mxu0 0.0
    %3073 = vmatpush1.msra.mxu0 0.0
    %3074 = vmatprep.subr.mxu0 0.0
    %3075 = vmatpush1.msra.mxu0 0.0
    %3076 = vmatprep.subr.mxu0 0.0
    %3077 = vmatpush1.msra.mxu0 0.0
    %3078 = vmatprep.subr.mxu0 0.0
    %3079 = vmatpush1.msra.mxu0 0.0
    %3080 = vmatprep.subr.mxu0 0.0
    %3081 = vmatpush1.msra.mxu0 0.0
    %3082 = vmatprep.subr.mxu0 0.0
    %3083 = vmatpush1.msra.mxu0 0.0
    %3084 = vmatprep.subr.mxu0 0.0
    %3085 = vmatpush1.msra.mxu0 0.0
    %3086 = vmatprep.subr.mxu0 0.0
    %3087 = vmatpush1.msra.mxu0 0.0
    %3088 = vmatprep.subr.mxu0 0.0
    %3089 = vmatpush1.msra.mxu0 0.0
    %3090 = vmatprep.subr.mxu0 0.0
    %3091 = vmatpush1.msra.mxu0 0.0
    %3092 = vmatprep.subr.mxu0 0.0
    %3093 = vmatpush1.msra.mxu0 0.0
    %3094 = vmatprep.subr.mxu0 0.0
    %3095 = vmatpush1.msra.mxu0 0.0
    %3096 = vmatprep.subr.mxu0 0.0
    %3097 = vmatpush1.msra.mxu0 0.0
    %3098 = vmatprep.subr.mxu0 0.0
    %3099 = vmatpush1.msra.mxu0 0.0
    %3100 = vmatprep.mubr.f32.mxu0 0.0
    %v3101 = vand.u32 %v2953, 4294901760
    %3102 = vmatmul.mubr.f32.gmra.mrb[0].mxu0 %v3101
    %v3103 = vpop.f32.mrb[0].mxu0
    %v3104 = vadd.f32 %v3028, %v3103
    %v3105 = vpop.f32.mrb[0].mxu0
    %3106 = vdwg.mxu0
    %3107 = vmatprep.subr.mxu0 0.0
    %v3108 = vand.u32 %v2950, 4294901760
    %v3109 = vsub.f32 %v2950, %v3108
    %3110 = vmatpush1.msra.mxu0 %v3109
    %3111 = vmatprep.subr.mxu0 0.0
    %3112 = vmatpush1.msra.mxu0 0.0
    %3113 = vmatprep.subr.mxu0 0.0
    %3114 = vmatpush1.msra.mxu0 0.0
    %3115 = vmatprep.subr.mxu0 0.0
    %3116 = vmatpush1.msra.mxu0 0.0
    %3117 = vmatprep.subr.mxu0 0.0
    %3118 = vmatpush1.msra.mxu0 0.0
    %3119 = vmatprep.subr.mxu0 0.0
    %3120 = vmatpush1.msra.mxu0 0.0
    %3121 = vmatprep.subr.mxu0 0.0
    %3122 = vmatpush1.msra.mxu0 0.0
    %3123 = vmatprep.subr.mxu0 0.0
    %3124 = vmatpush1.msra.mxu0 0.0
    %3125 = vmatprep.subr.mxu0 0.0
    %3126 = vmatpush1.msra.mxu0 0.0
    %3127 = vmatprep.subr.mxu0 0.0
    %3128 = vmatpush1.msra.mxu0 0.0
    %3129 = vmatprep.subr.mxu0 0.0
    %3130 = vmatpush1.msra.mxu0 0.0
    %3131 = vmatprep.subr.mxu0 0.0
    %3132 = vmatpush1.msra.mxu0 0.0
    %3133 = vmatprep.subr.mxu0 0.0
    %3134 = vmatpush1.msra.mxu0 0.0
    %3135 = vmatprep.subr.mxu0 0.0
    %3136 = vmatpush1.msra.mxu0 0.0
    %3137 = vmatprep.subr.mxu0 0.0
    %3138 = vmatpush1.msra.mxu0 0.0
    %3139 = vmatprep.subr.mxu0 0.0
    %3140 = vmatpush1.msra.mxu0 0.0
    %3141 = vmatprep.subr.mxu0 0.0
    %3142 = vmatpush1.msra.mxu0 0.0
    %3143 = vmatprep.subr.mxu0 0.0
    %3144 = vmatpush1.msra.mxu0 0.0
    %3145 = vmatprep.subr.mxu0 0.0
    %3146 = vmatpush1.msra.mxu0 0.0
    %3147 = vmatprep.subr.mxu0 0.0
    %3148 = vmatpush1.msra.mxu0 0.0
    %3149 = vmatprep.subr.mxu0 0.0
    %3150 = vmatpush1.msra.mxu0 0.0
    %3151 = vmatprep.subr.mxu0 0.0
    %3152 = vmatpush1.msra.mxu0 0.0
    %3153 = vmatprep.subr.mxu0 0.0
    %3154 = vmatpush1.msra.mxu0 0.0
    %3155 = vmatprep.subr.mxu0 0.0
    %3156 = vmatpush1.msra.mxu0 0.0
    %3157 = vmatprep.subr.mxu0 0.0
    %3158 = vmatpush1.msra.mxu0 0.0
    %3159 = vmatprep.subr.mxu0 0.0
    %3160 = vmatpush1.msra.mxu0 0.0
    %3161 = vmatprep.subr.mxu0 0.0
    %3162 = vmatpush1.msra.mxu0 0.0
    %3163 = vmatprep.subr.mxu0 0.0
    %3164 = vmatpush1.msra.mxu0 0.0
    %3165 = vmatprep.subr.mxu0 0.0
    %3166 = vmatpush1.msra.mxu0 0.0
    %3167 = vmatprep.subr.mxu0 0.0
    %3168 = vmatpush1.msra.mxu0 0.0
    %3169 = vmatprep.subr.mxu0 0.0
    %3170 = vmatpush1.msra.mxu0 0.0
    %3171 = vmatprep.subr.mxu0 0.0
    %3172 = vmatpush1.msra.mxu0 0.0
    %3173 = vmatprep.mubr.f32.mxu0 0.0
    %v3174 = vand.u32 %v2953, 4294901760
    %v3175 = vsub.f32 %v2953, %v3174
    %3176 = vmatmul.mubr.f32.gmra.mrb[0].mxu0 %v3175
    %v3177 = vpop.f32.mrb[0].mxu0
    %v3178 = vadd.f32 %v3104, %v3177
    %v3179 = vpop.f32.mrb[0].mxu0
    %3180 = vdwg.mxu0
    %3181 = vmatprep.subr.mxu0 0.0
    %v3182 = vand.u32 %v2950, 4294901760
    %3183 = vmatpush1.msra.mxu0 %v3182
    %3184 = vmatprep.subr.mxu0 0.0
    %3185 = vmatpush1.msra.mxu0 0.0
    %3186 = vmatprep.subr.mxu0 0.0
    %3187 = vmatpush1.msra.mxu0 0.0
    %3188 = vmatprep.subr.mxu0 0.0
    %3189 = vmatpush1.msra.mxu0 0.0
    %3190 = vmatprep.subr.mxu0 0.0
    %3191 = vmatpush1.msra.mxu0 0.0
    %3192 = vmatprep.subr.mxu0 0.0
    %3193 = vmatpush1.msra.mxu0 0.0
    %3194 = vmatprep.subr.mxu0 0.0
    %3195 = vmatpush1.msra.mxu0 0.0
    %3196 = vmatprep.subr.mxu0 0.0
    %3197 = vmatpush1.msra.mxu0 0.0
    %3198 = vmatprep.subr.mxu0 0.0
    %3199 = vmatpush1.msra.mxu0 0.0
    %3200 = vmatprep.subr.mxu0 0.0
    %3201 = vmatpush1.msra.mxu0 0.0
    %3202 = vmatprep.subr.mxu0 0.0
    %3203 = vmatpush1.msra.mxu0 0.0
    %3204 = vmatprep.subr.mxu0 0.0
    %3205 = vmatpush1.msra.mxu0 0.0
    %3206 = vmatprep.subr.mxu0 0.0
    %3207 = vmatpush1.msra.mxu0 0.0
    %3208 = vmatprep.subr.mxu0 0.0
    %3209 = vmatpush1.msra.mxu0 0.0
    %3210 = vmatprep.subr.mxu0 0.0
    %3211 = vmatpush1.msra.mxu0 0.0
    %3212 = vmatprep.subr.mxu0 0.0
    %3213 = vmatpush1.msra.mxu0 0.0
    %3214 = vmatprep.subr.mxu0 0.0
    %3215 = vmatpush1.msra.mxu0 0.0
    %3216 = vmatprep.subr.mxu0 0.0
    %3217 = vmatpush1.msra.mxu0 0.0
    %3218 = vmatprep.subr.mxu0 0.0
    %3219 = vmatpush1.msra.mxu0 0.0
    %3220 = vmatprep.subr.mxu0 0.0
    %3221 = vmatpush1.msra.mxu0 0.0
    %3222 = vmatprep.subr.mxu0 0.0
    %3223 = vmatpush1.msra.mxu0 0.0
    %3224 = vmatprep.subr.mxu0 0.0
    %3225 = vmatpush1.msra.mxu0 0.0
    %3226 = vmatprep.subr.mxu0 0.0
    %3227 = vmatpush1.msra.mxu0 0.0
    %3228 = vmatprep.subr.mxu0 0.0
    %3229 = vmatpush1.msra.mxu0 0.0
    %3230 = vmatprep.subr.mxu0 0.0
    %3231 = vmatpush1.msra.mxu0 0.0
    %3232 = vmatprep.subr.mxu0 0.0
    %3233 = vmatpush1.msra.mxu0 0.0
    %3234 = vmatprep.subr.mxu0 0.0
    %3235 = vmatpush1.msra.mxu0 0.0
    %3236 = vmatprep.subr.mxu0 0.0
    %3237 = vmatpush1.msra.mxu0 0.0
    %3238 = vmatprep.subr.mxu0 0.0
    %3239 = vmatpush1.msra.mxu0 0.0
    %3240 = vmatprep.subr.mxu0 0.0
    %3241 = vmatpush1.msra.mxu0 0.0
    %3242 = vmatprep.subr.mxu0 0.0
    %3243 = vmatpush1.msra.mxu0 0.0
    %3244 = vmatprep.subr.mxu0 0.0
    %3245 = vmatpush1.msra.mxu0 0.0
    %3246 = vmatprep.mubr.f32.mxu0 0.0
    %v3247 = vand.u32 %v2953, 4294901760
    %v3248 = vsub.f32 %v2953, %v3247
    %v3249 = vand.u32 %v3248, 4294901760
    %3250 = vmatmul.mubr.f32.gmra.mrb[0].mxu0 %v3249
    %v3251 = vpop.f32.mrb[0].mxu0
    %v3252 = vadd.f32 %v3178, %v3251
    %v3253 = vpop.f32.mrb[0].mxu0
    %3254 = vdwg.mxu0
    %3255 = vmatprep.subr.mxu0 0.0
    %v3256 = vand.u32 %v2950, 4294901760
    %v3257 = vsub.f32 %v2950, %v3256
    %v3258 = vand.u32 %v3257, 4294901760
    %3259 = vmatpush1.msra.mxu0 %v3258
    %3260 = vmatprep.subr.mxu0 0.0
    %3261 = vmatpush1.msra.mxu0 0.0
    %3262 = vmatprep.subr.mxu0 0.0
    %3263 = vmatpush1.msra.mxu0 0.0
    %3264 = vmatprep.subr.mxu0 0.0
    %3265 = vmatpush1.msra.mxu0 0.0
    %3266 = vmatprep.subr.mxu0 0.0
    %3267 = vmatpush1.msra.mxu0 0.0
    %3268 = vmatprep.subr.mxu0 0.0
    %3269 = vmatpush1.msra.mxu0 0.0
    %3270 = vmatprep.subr.mxu0 0.0
    %3271 = vmatpush1.msra.mxu0 0.0
    %3272 = vmatprep.subr.mxu0 0.0
    %3273 = vmatpush1.msra.mxu0 0.0
    %3274 = vmatprep.subr.mxu0 0.0
    %3275 = vmatpush1.msra.mxu0 0.0
    %3276 = vmatprep.subr.mxu0 0.0
    %3277 = vmatpush1.msra.mxu0 0.0
    %3278 = vmatprep.subr.mxu0 0.0
    %3279 = vmatpush1.msra.mxu0 0.0
    %3280 = vmatprep.subr.mxu0 0.0
    %3281 = vmatpush1.msra.mxu0 0.0
    %3282 = vmatprep.subr.mxu0 0.0
    %3283 = vmatpush1.msra.mxu0 0.0
    %3284 = vmatprep.subr.mxu0 0.0
    %3285 = vmatpush1.msra.mxu0 0.0
    %3286 = vmatprep.subr.mxu0 0.0
    %3287 = vmatpush1.msra.mxu0 0.0
    %3288 = vmatprep.subr.mxu0 0.0
    %3289 = vmatpush1.msra.mxu0 0.0
    %3290 = vmatprep.subr.mxu0 0.0
    %3291 = vmatpush1.msra.mxu0 0.0
    %3292 = vmatprep.subr.mxu0 0.0
    %3293 = vmatpush1.msra.mxu0 0.0
    %3294 = vmatprep.subr.mxu0 0.0
    %3295 = vmatpush1.msra.mxu0 0.0
    %3296 = vmatprep.subr.mxu0 0.0
    %3297 = vmatpush1.msra.mxu0 0.0
    %3298 = vmatprep.subr.mxu0 0.0
    %3299 = vmatpush1.msra.mxu0 0.0
    %3300 = vmatprep.subr.mxu0 0.0
    %3301 = vmatpush1.msra.mxu0 0.0
    %3302 = vmatprep.subr.mxu0 0.0
    %3303 = vmatpush1.msra.mxu0 0.0
    %3304 = vmatprep.subr.mxu0 0.0
    %3305 = vmatpush1.msra.mxu0 0.0
    %3306 = vmatprep.subr.mxu0 0.0
    %3307 = vmatpush1.msra.mxu0 0.0
    %3308 = vmatprep.subr.mxu0 0.0
    %3309 = vmatpush1.msra.mxu0 0.0
    %3310 = vmatprep.subr.mxu0 0.0
    %3311 = vmatpush1.msra.mxu0 0.0
    %3312 = vmatprep.subr.mxu0 0.0
    %3313 = vmatpush1.msra.mxu0 0.0
    %3314 = vmatprep.subr.mxu0 0.0
    %3315 = vmatpush1.msra.mxu0 0.0
    %3316 = vmatprep.subr.mxu0 0.0
    %3317 = vmatpush1.msra.mxu0 0.0
    %3318 = vmatprep.subr.mxu0 0.0
    %3319 = vmatpush1.msra.mxu0 0.0
    %3320 = vmatprep.subr.mxu0 0.0
    %3321 = vmatpush1.msra.mxu0 0.0
    %3322 = vmatprep.mubr.f32.mxu0 0.0
    %v3323 = vand.u32 %v2953, 4294901760
    %3324 = vmatmul.mubr.f32.gmra.mrb[0].mxu0 %v3323
    %v3325 = vpop.f32.mrb[0].mxu0
    %v3326 = vadd.f32 %v3252, %v3325
    %v3327 = vpop.f32.mrb[0].mxu0
    %3328 = vdwg.mxu0
    %3329 = vmatprep.subr.mxu0 0.0
    %v3330 = vand.u32 %v2950, 4294901760
    %3331 = vmatpush1.msra.mxu0 %v3330
    %3332 = vmatprep.subr.mxu0 0.0
    %3333 = vmatpush1.msra.mxu0 0.0
    %3334 = vmatprep.subr.mxu0 0.0
    %3335 = vmatpush1.msra.mxu0 0.0
    %3336 = vmatprep.subr.mxu0 0.0
    %3337 = vmatpush1.msra.mxu0 0.0
    %3338 = vmatprep.subr.mxu0 0.0
    %3339 = vmatpush1.msra.mxu0 0.0
    %3340 = vmatprep.subr.mxu0 0.0
    %3341 = vmatpush1.msra.mxu0 0.0
    %3342 = vmatprep.subr.mxu0 0.0
    %3343 = vmatpush1.msra.mxu0 0.0
    %3344 = vmatprep.subr.mxu0 0.0
    %3345 = vmatpush1.msra.mxu0 0.0
    %3346 = vmatprep.subr.mxu0 0.0
    %3347 = vmatpush1.msra.mxu0 0.0
    %3348 = vmatprep.subr.mxu0 0.0
    %3349 = vmatpush1.msra.mxu0 0.0
    %3350 = vmatprep.subr.mxu0 0.0
    %3351 = vmatpush1.msra.mxu0 0.0
    %3352 = vmatprep.subr.mxu0 0.0
    %3353 = vmatpush1.msra.mxu0 0.0
    %3354 = vmatprep.subr.mxu0 0.0
    %3355 = vmatpush1.msra.mxu0 0.0
    %3356 = vmatprep.subr.mxu0 0.0
    %3357 = vmatpush1.msra.mxu0 0.0
    %3358 = vmatprep.subr.mxu0 0.0
    %3359 = vmatpush1.msra.mxu0 0.0
    %3360 = vmatprep.subr.mxu0 0.0
    %3361 = vmatpush1.msra.mxu0 0.0
    %3362 = vmatprep.subr.mxu0 0.0
    %3363 = vmatpush1.msra.mxu0 0.0
    %3364 = vmatprep.subr.mxu0 0.0
    %3365 = vmatpush1.msra.mxu0 0.0
    %3366 = vmatprep.subr.mxu0 0.0
    %3367 = vmatpush1.msra.mxu0 0.0
    %3368 = vmatprep.subr.mxu0 0.0
    %3369 = vmatpush1.msra.mxu0 0.0
    %3370 = vmatprep.subr.mxu0 0.0
    %3371 = vmatpush1.msra.mxu0 0.0
    %3372 = vmatprep.subr.mxu0 0.0
    %3373 = vmatpush1.msra.mxu0 0.0
    %3374 = vmatprep.subr.mxu0 0.0
    %3375 = vmatpush1.msra.mxu0 0.0
    %3376 = vmatprep.subr.mxu0 0.0
    %3377 = vmatpush1.msra.mxu0 0.0
    %3378 = vmatprep.subr.mxu0 0.0
    %3379 = vmatpush1.msra.mxu0 0.0
    %3380 = vmatprep.subr.mxu0 0.0
    %3381 = vmatpush1.msra.mxu0 0.0
    %3382 = vmatprep.subr.mxu0 0.0
    %3383 = vmatpush1.msra.mxu0 0.0
    %3384 = vmatprep.subr.mxu0 0.0
    %3385 = vmatpush1.msra.mxu0 0.0
    %3386 = vmatprep.subr.mxu0 0.0
    %3387 = vmatpush1.msra.mxu0 0.0
    %3388 = vmatprep.subr.mxu0 0.0
    %3389 = vmatpush1.msra.mxu0 0.0
    %3390 = vmatprep.subr.mxu0 0.0
    %3391 = vmatpush1.msra.mxu0 0.0
    %3392 = vmatprep.subr.mxu0 0.0
    %3393 = vmatpush1.msra.mxu0 0.0
    %3394 = vmatprep.mubr.f32.mxu0 0.0
    %v3395 = vand.u32 %v2953, 4294901760
    %3396 = vmatmul.mubr.f32.gmra.mrb[0].mxu0 %v3395
    %v3397 = vpop.f32.mrb[0].mxu0
    %v3398 = vadd.f32 %v3326, %v3397
    %v3399 = vpop.f32.mrb[0].mxu0
    %3400 = vdwg.mxu0
    %3401 = vrot.lane.b32.xlu0 %v636, 64
    %v3402 = vpop.permute.xlu0 %3401
    %v3405 = vsel %vm2452, %v2494, 0
    %3407 = vmatprep.subr.mxu0 0.0
    %v3408 = vand.u32 %v3402, 4294901760
    %3409 = vmatpush1.msra.mxu0 %v3408
    %3410 = vmatprep.subr.mxu0 0.0
    %3411 = vmatpush1.msra.mxu0 0.0
    %3412 = vmatprep.subr.mxu0 0.0
    %3413 = vmatpush1.msra.mxu0 0.0
    %3414 = vmatprep.subr.mxu0 0.0
    %3415 = vmatpush1.msra.mxu0 0.0
    %3416 = vmatprep.subr.mxu0 0.0
    %3417 = vmatpush1.msra.mxu0 0.0
    %3418 = vmatprep.subr.mxu0 0.0
    %3419 = vmatpush1.msra.mxu0 0.0
    %3420 = vmatprep.subr.mxu0 0.0
    %3421 = vmatpush1.msra.mxu0 0.0
    %3422 = vmatprep.subr.mxu0 0.0
    %3423 = vmatpush1.msra.mxu0 0.0
    %3424 = vmatprep.subr.mxu0 0.0
    %3425 = vmatpush1.msra.mxu0 0.0
    %3426 = vmatprep.subr.mxu0 0.0
    %3427 = vmatpush1.msra.mxu0 0.0
    %3428 = vmatprep.subr.mxu0 0.0
    %3429 = vmatpush1.msra.mxu0 0.0
    %3430 = vmatprep.subr.mxu0 0.0
    %3431 = vmatpush1.msra.mxu0 0.0
    %3432 = vmatprep.subr.mxu0 0.0
    %3433 = vmatpush1.msra.mxu0 0.0
    %3434 = vmatprep.subr.mxu0 0.0
    %3435 = vmatpush1.msra.mxu0 0.0
    %3436 = vmatprep.subr.mxu0 0.0
    %3437 = vmatpush1.msra.mxu0 0.0
    %3438 = vmatprep.subr.mxu0 0.0
    %3439 = vmatpush1.msra.mxu0 0.0
    %3440 = vmatprep.subr.mxu0 0.0
    %3441 = vmatpush1.msra.mxu0 0.0
    %3442 = vmatprep.subr.mxu0 0.0
    %3443 = vmatpush1.msra.mxu0 0.0
    %3444 = vmatprep.subr.mxu0 0.0
    %3445 = vmatpush1.msra.mxu0 0.0
    %3446 = vmatprep.subr.mxu0 0.0
    %3447 = vmatpush1.msra.mxu0 0.0
    %3448 = vmatprep.subr.mxu0 0.0
    %3449 = vmatpush1.msra.mxu0 0.0
    %3450 = vmatprep.subr.mxu0 0.0
    %3451 = vmatpush1.msra.mxu0 0.0
    %3452 = vmatprep.subr.mxu0 0.0
    %3453 = vmatpush1.msra.mxu0 0.0
    %3454 = vmatprep.subr.mxu0 0.0
    %3455 = vmatpush1.msra.mxu0 0.0
    %3456 = vmatprep.subr.mxu0 0.0
    %3457 = vmatpush1.msra.mxu0 0.0
    %3458 = vmatprep.subr.mxu0 0.0
    %3459 = vmatpush1.msra.mxu0 0.0
    %3460 = vmatprep.subr.mxu0 0.0
    %3461 = vmatpush1.msra.mxu0 0.0
    %3462 = vmatprep.subr.mxu0 0.0
    %3463 = vmatpush1.msra.mxu0 0.0
    %3464 = vmatprep.subr.mxu0 0.0
    %3465 = vmatpush1.msra.mxu0 0.0
    %3466 = vmatprep.subr.mxu0 0.0
    %3467 = vmatpush1.msra.mxu0 0.0
    %3468 = vmatprep.subr.mxu0 0.0
    %3469 = vmatpush1.msra.mxu0 0.0
    %3470 = vmatprep.subr.mxu0 0.0
    %3471 = vmatpush1.msra.mxu0 0.0
    %3472 = vmatprep.mubr.f32.mxu0 0.0
    %v3473 = vand.u32 %v3405, 4294901760
    %v3474 = vsub.f32 %v3405, %v3473
    %v3475 = vand.u32 %v3474, 4294901760
    %v3476 = vsub.f32 %v3474, %v3475
    %v3477 = vand.u32 %v3476, 4294901760
    %3478 = vmatmul.mubr.f32.gmra.mrb[0].mxu0 %v3477
    %v3479 = vpop.f32.mrb[0].mxu0
    %v3480 = vadd.f32 0.0, %v3479
    %v3481 = vpop.f32.mrb[0].mxu0
    %3482 = vdwg.mxu0
    %3483 = vmatprep.subr.mxu0 0.0
    %v3484 = vand.u32 %v3402, 4294901760
    %v3485 = vsub.f32 %v3402, %v3484
    %v3486 = vand.u32 %v3485, 4294901760
    %v3487 = vsub.f32 %v3485, %v3486
    %v3488 = vand.u32 %v3487, 4294901760
    %3489 = vmatpush1.msra.mxu0 %v3488
    %3490 = vmatprep.subr.mxu0 0.0
    %3491 = vmatpush1.msra.mxu0 0.0
    %3492 = vmatprep.subr.mxu0 0.0
    %3493 = vmatpush1.msra.mxu0 0.0
    %3494 = vmatprep.subr.mxu0 0.0
    %3495 = vmatpush1.msra.mxu0 0.0
    %3496 = vmatprep.subr.mxu0 0.0
    %3497 = vmatpush1.msra.mxu0 0.0
    %3498 = vmatprep.subr.mxu0 0.0
    %3499 = vmatpush1.msra.mxu0 0.0
    %3500 = vmatprep.subr.mxu0 0.0
    %3501 = vmatpush1.msra.mxu0 0.0
    %3502 = vmatprep.subr.mxu0 0.0
    %3503 = vmatpush1.msra.mxu0 0.0
    %3504 = vmatprep.subr.mxu0 0.0
    %3505 = vmatpush1.msra.mxu0 0.0
    %3506 = vmatprep.subr.mxu0 0.0
    %3507 = vmatpush1.msra.mxu0 0.0
    %3508 = vmatprep.subr.mxu0 0.0
    %3509 = vmatpush1.msra.mxu0 0.0
    %3510 = vmatprep.subr.mxu0 0.0
    %3511 = vmatpush1.msra.mxu0 0.0
    %3512 = vmatprep.subr.mxu0 0.0
    %3513 = vmatpush1.msra.mxu0 0.0
    %3514 = vmatprep.subr.mxu0 0.0
    %3515 = vmatpush1.msra.mxu0 0.0
    %3516 = vmatprep.subr.mxu0 0.0
    %3517 = vmatpush1.msra.mxu0 0.0
    %3518 = vmatprep.subr.mxu0 0.0
    %3519 = vmatpush1.msra.mxu0 0.0
    %3520 = vmatprep.subr.mxu0 0.0
    %3521 = vmatpush1.msra.mxu0 0.0
    %3522 = vmatprep.subr.mxu0 0.0
    %3523 = vmatpush1.msra.mxu0 0.0
    %3524 = vmatprep.subr.mxu0 0.0
    %3525 = vmatpush1.msra.mxu0 0.0
    %3526 = vmatprep.subr.mxu0 0.0
    %3527 = vmatpush1.msra.mxu0 0.0
    %3528 = vmatprep.subr.mxu0 0.0
    %3529 = vmatpush1.msra.mxu0 0.0
    %3530 = vmatprep.subr.mxu0 0.0
    %3531 = vmatpush1.msra.mxu0 0.0
    %3532 = vmatprep.subr.mxu0 0.0
    %3533 = vmatpush1.msra.mxu0 0.0
    %3534 = vmatprep.subr.mxu0 0.0
    %3535 = vmatpush1.msra.mxu0 0.0
    %3536 = vmatprep.subr.mxu0 0.0
    %3537 = vmatpush1.msra.mxu0 0.0
    %3538 = vmatprep.subr.mxu0 0.0
    %3539 = vmatpush1.msra.mxu0 0.0
    %3540 = vmatprep.subr.mxu0 0.0
    %3541 = vmatpush1.msra.mxu0 0.0
    %3542 = vmatprep.subr.mxu0 0.0
    %3543 = vmatpush1.msra.mxu0 0.0
    %3544 = vmatprep.subr.mxu0 0.0
    %3545 = vmatpush1.msra.mxu0 0.0
    %3546 = vmatprep.subr.mxu0 0.0
    %3547 = vmatpush1.msra.mxu0 0.0
    %3548 = vmatprep.subr.mxu0 0.0
    %3549 = vmatpush1.msra.mxu0 0.0
    %3550 = vmatprep.subr.mxu0 0.0
    %3551 = vmatpush1.msra.mxu0 0.0
    %3552 = vmatprep.mubr.f32.mxu0 0.0
    %v3553 = vand.u32 %v3405, 4294901760
    %3554 = vmatmul.mubr.f32.gmra.mrb[0].mxu0 %v3553
    %v3555 = vpop.f32.mrb[0].mxu0
    %v3556 = vadd.f32 %v3480, %v3555
    %v3557 = vpop.f32.mrb[0].mxu0
    %3558 = vdwg.mxu0
    %3559 = vmatprep.subr.mxu0 0.0
    %v3560 = vand.u32 %v3402, 4294901760
    %v3561 = vsub.f32 %v3402, %v3560
    %3562 = vmatpush1.msra.mxu0 %v3561
    %3563 = vmatprep.subr.mxu0 0.0
    %3564 = vmatpush1.msra.mxu0 0.0
    %3565 = vmatprep.subr.mxu0 0.0
    %3566 = vmatpush1.msra.mxu0 0.0
    %3567 = vmatprep.subr.mxu0 0.0
    %3568 = vmatpush1.msra.mxu0 0.0
    %3569 = vmatprep.subr.mxu0 0.0
    %3570 = vmatpush1.msra.mxu0 0.0
    %3571 = vmatprep.subr.mxu0 0.0
    %3572 = vmatpush1.msra.mxu0 0.0
    %3573 = vmatprep.subr.mxu0 0.0
    %3574 = vmatpush1.msra.mxu0 0.0
    %3575 = vmatprep.subr.mxu0 0.0
    %3576 = vmatpush1.msra.mxu0 0.0
    %3577 = vmatprep.subr.mxu0 0.0
    %3578 = vmatpush1.msra.mxu0 0.0
    %3579 = vmatprep.subr.mxu0 0.0
    %3580 = vmatpush1.msra.mxu0 0.0
    %3581 = vmatprep.subr.mxu0 0.0
    %3582 = vmatpush1.msra.mxu0 0.0
    %3583 = vmatprep.subr.mxu0 0.0
    %3584 = vmatpush1.msra.mxu0 0.0
    %3585 = vmatprep.subr.mxu0 0.0
    %3586 = vmatpush1.msra.mxu0 0.0
    %3587 = vmatprep.subr.mxu0 0.0
    %3588 = vmatpush1.msra.mxu0 0.0
    %3589 = vmatprep.subr.mxu0 0.0
    %3590 = vmatpush1.msra.mxu0 0.0
    %3591 = vmatprep.subr.mxu0 0.0
    %3592 = vmatpush1.msra.mxu0 0.0
    %3593 = vmatprep.subr.mxu0 0.0
    %3594 = vmatpush1.msra.mxu0 0.0
    %3595 = vmatprep.subr.mxu0 0.0
    %3596 = vmatpush1.msra.mxu0 0.0
    %3597 = vmatprep.subr.mxu0 0.0
    %3598 = vmatpush1.msra.mxu0 0.0
    %3599 = vmatprep.subr.mxu0 0.0
    %3600 = vmatpush1.msra.mxu0 0.0
    %3601 = vmatprep.subr.mxu0 0.0
    %3602 = vmatpush1.msra.mxu0 0.0
    %3603 = vmatprep.subr.mxu0 0.0
    %3604 = vmatpush1.msra.mxu0 0.0
    %3605 = vmatprep.subr.mxu0 0.0
    %3606 = vmatpush1.msra.mxu0 0.0
    %3607 = vmatprep.subr.mxu0 0.0
    %3608 = vmatpush1.msra.mxu0 0.0
    %3609 = vmatprep.subr.mxu0 0.0
    %3610 = vmatpush1.msra.mxu0 0.0
    %3611 = vmatprep.subr.mxu0 0.0
    %3612 = vmatpush1.msra.mxu0 0.0
    %3613 = vmatprep.subr.mxu0 0.0
    %3614 = vmatpush1.msra.mxu0 0.0
    %3615 = vmatprep.subr.mxu0 0.0
    %3616 = vmatpush1.msra.mxu0 0.0
    %3617 = vmatprep.subr.mxu0 0.0
    %3618 = vmatpush1.msra.mxu0 0.0
    %3619 = vmatprep.subr.mxu0 0.0
    %3620 = vmatpush1.msra.mxu0 0.0
    %3621 = vmatprep.subr.mxu0 0.0
    %3622 = vmatpush1.msra.mxu0 0.0
    %3623 = vmatprep.subr.mxu0 0.0
    %3624 = vmatpush1.msra.mxu0 0.0
    %3625 = vmatprep.mubr.f32.mxu0 0.0
    %v3626 = vand.u32 %v3405, 4294901760
    %v3627 = vsub.f32 %v3405, %v3626
    %3628 = vmatmul.mubr.f32.gmra.mrb[0].mxu0 %v3627
    %v3629 = vpop.f32.mrb[0].mxu0
    %v3630 = vadd.f32 %v3556, %v3629
    %v3631 = vpop.f32.mrb[0].mxu0
    %3632 = vdwg.mxu0
    %3633 = vmatprep.subr.mxu0 0.0
    %v3634 = vand.u32 %v3402, 4294901760
    %3635 = vmatpush1.msra.mxu0 %v3634
    %3636 = vmatprep.subr.mxu0 0.0
    %3637 = vmatpush1.msra.mxu0 0.0
    %3638 = vmatprep.subr.mxu0 0.0
    %3639 = vmatpush1.msra.mxu0 0.0
    %3640 = vmatprep.subr.mxu0 0.0
    %3641 = vmatpush1.msra.mxu0 0.0
    %3642 = vmatprep.subr.mxu0 0.0
    %3643 = vmatpush1.msra.mxu0 0.0
    %3644 = vmatprep.subr.mxu0 0.0
    %3645 = vmatpush1.msra.mxu0 0.0
    %3646 = vmatprep.subr.mxu0 0.0
    %3647 = vmatpush1.msra.mxu0 0.0
    %3648 = vmatprep.subr.mxu0 0.0
    %3649 = vmatpush1.msra.mxu0 0.0
    %3650 = vmatprep.subr.mxu0 0.0
    %3651 = vmatpush1.msra.mxu0 0.0
    %3652 = vmatprep.subr.mxu0 0.0
    %3653 = vmatpush1.msra.mxu0 0.0
    %3654 = vmatprep.subr.mxu0 0.0
    %3655 = vmatpush1.msra.mxu0 0.0
    %3656 = vmatprep.subr.mxu0 0.0
    %3657 = vmatpush1.msra.mxu0 0.0
    %3658 = vmatprep.subr.mxu0 0.0
    %3659 = vmatpush1.msra.mxu0 0.0
    %3660 = vmatprep.subr.mxu0 0.0
    %3661 = vmatpush1.msra.mxu0 0.0
    %3662 = vmatprep.subr.mxu0 0.0
    %3663 = vmatpush1.msra.mxu0 0.0
    %3664 = vmatprep.subr.mxu0 0.0
    %3665 = vmatpush1.msra.mxu0 0.0
    %3666 = vmatprep.subr.mxu0 0.0
    %3667 = vmatpush1.msra.mxu0 0.0
    %3668 = vmatprep.subr.mxu0 0.0
    %3669 = vmatpush1.msra.mxu0 0.0
    %3670 = vmatprep.subr.mxu0 0.0
    %3671 = vmatpush1.msra.mxu0 0.0
    %3672 = vmatprep.subr.mxu0 0.0
    %3673 = vmatpush1.msra.mxu0 0.0
    %3674 = vmatprep.subr.mxu0 0.0
    %3675 = vmatpush1.msra.mxu0 0.0
    %3676 = vmatprep.subr.mxu0 0.0
    %3677 = vmatpush1.msra.mxu0 0.0
    %3678 = vmatprep.subr.mxu0 0.0
    %3679 = vmatpush1.msra.mxu0 0.0
    %3680 = vmatprep.subr.mxu0 0.0
    %3681 = vmatpush1.msra.mxu0 0.0
    %3682 = vmatprep.subr.mxu0 0.0
    %3683 = vmatpush1.msra.mxu0 0.0
    %3684 = vmatprep.subr.mxu0 0.0
    %3685 = vmatpush1.msra.mxu0 0.0
    %3686 = vmatprep.subr.mxu0 0.0
    %3687 = vmatpush1.msra.mxu0 0.0
    %3688 = vmatprep.subr.mxu0 0.0
    %3689 = vmatpush1.msra.mxu0 0.0
    %3690 = vmatprep.subr.mxu0 0.0
    %3691 = vmatpush1.msra.mxu0 0.0
    %3692 = vmatprep.subr.mxu0 0.0
    %3693 = vmatpush1.msra.mxu0 0.0
    %3694 = vmatprep.subr.mxu0 0.0
    %3695 = vmatpush1.msra.mxu0 0.0
    %3696 = vmatprep.subr.mxu0 0.0
    %3697 = vmatpush1.msra.mxu0 0.0
    %3698 = vmatprep.mubr.f32.mxu0 0.0
    %v3699 = vand.u32 %v3405, 4294901760
    %v3700 = vsub.f32 %v3405, %v3699
    %v3701 = vand.u32 %v3700, 4294901760
    %3702 = vmatmul.mubr.f32.gmra.mrb[0].mxu0 %v3701
    %v3703 = vpop.f32.mrb[0].mxu0
    %v3704 = vadd.f32 %v3630, %v3703
    %v3705 = vpop.f32.mrb[0].mxu0
    %3706 = vdwg.mxu0
    %3707 = vmatprep.subr.mxu0 0.0
    %v3708 = vand.u32 %v3402, 4294901760
    %v3709 = vsub.f32 %v3402, %v3708
    %v3710 = vand.u32 %v3709, 4294901760
    %3711 = vmatpush1.msra.mxu0 %v3710
    %3712 = vmatprep.subr.mxu0 0.0
    %3713 = vmatpush1.msra.mxu0 0.0
    %3714 = vmatprep.subr.mxu0 0.0
    %3715 = vmatpush1.msra.mxu0 0.0
    %3716 = vmatprep.subr.mxu0 0.0
    %3717 = vmatpush1.msra.mxu0 0.0
    %3718 = vmatprep.subr.mxu0 0.0
    %3719 = vmatpush1.msra.mxu0 0.0
    %3720 = vmatprep.subr.mxu0 0.0
    %3721 = vmatpush1.msra.mxu0 0.0
    %3722 = vmatprep.subr.mxu0 0.0
    %3723 = vmatpush1.msra.mxu0 0.0
    %3724 = vmatprep.subr.mxu0 0.0
    %3725 = vmatpush1.msra.mxu0 0.0
    %3726 = vmatprep.subr.mxu0 0.0
    %3727 = vmatpush1.msra.mxu0 0.0
    %3728 = vmatprep.subr.mxu0 0.0
    %3729 = vmatpush1.msra.mxu0 0.0
    %3730 = vmatprep.subr.mxu0 0.0
    %3731 = vmatpush1.msra.mxu0 0.0
    %3732 = vmatprep.subr.mxu0 0.0
    %3733 = vmatpush1.msra.mxu0 0.0
    %3734 = vmatprep.subr.mxu0 0.0
    %3735 = vmatpush1.msra.mxu0 0.0
    %3736 = vmatprep.subr.mxu0 0.0
    %3737 = vmatpush1.msra.mxu0 0.0
    %3738 = vmatprep.subr.mxu0 0.0
    %3739 = vmatpush1.msra.mxu0 0.0
    %3740 = vmatprep.subr.mxu0 0.0
    %3741 = vmatpush1.msra.mxu0 0.0
    %3742 = vmatprep.subr.mxu0 0.0
    %3743 = vmatpush1.msra.mxu0 0.0
    %3744 = vmatprep.subr.mxu0 0.0
    %3745 = vmatpush1.msra.mxu0 0.0
    %3746 = vmatprep.subr.mxu0 0.0
    %3747 = vmatpush1.msra.mxu0 0.0
    %3748 = vmatprep.subr.mxu0 0.0
    %3749 = vmatpush1.msra.mxu0 0.0
    %3750 = vmatprep.subr.mxu0 0.0
    %3751 = vmatpush1.msra.mxu0 0.0
    %3752 = vmatprep.subr.mxu0 0.0
    %3753 = vmatpush1.msra.mxu0 0.0
    %3754 = vmatprep.subr.mxu0 0.0
    %3755 = vmatpush1.msra.mxu0 0.0
    %3756 = vmatprep.subr.mxu0 0.0
    %3757 = vmatpush1.msra.mxu0 0.0
    %3758 = vmatprep.subr.mxu0 0.0
    %3759 = vmatpush1.msra.mxu0 0.0
    %3760 = vmatprep.subr.mxu0 0.0
    %3761 = vmatpush1.msra.mxu0 0.0
    %3762 = vmatprep.subr.mxu0 0.0
    %3763 = vmatpush1.msra.mxu0 0.0
    %3764 = vmatprep.subr.mxu0 0.0
    %3765 = vmatpush1.msra.mxu0 0.0
    %3766 = vmatprep.subr.mxu0 0.0
    %3767 = vmatpush1.msra.mxu0 0.0
    %3768 = vmatprep.subr.mxu0 0.0
    %3769 = vmatpush1.msra.mxu0 0.0
    %3770 = vmatprep.subr.mxu0 0.0
    %3771 = vmatpush1.msra.mxu0 0.0
    %3772 = vmatprep.subr.mxu0 0.0
    %3773 = vmatpush1.msra.mxu0 0.0
    %3774 = vmatprep.mubr.f32.mxu0 0.0
    %v3775 = vand.u32 %v3405, 4294901760
    %3776 = vmatmul.mubr.f32.gmra.mrb[0].mxu0 %v3775
    %v3777 = vpop.f32.mrb[0].mxu0
    %v3778 = vadd.f32 %v3704, %v3777
    %v3779 = vpop.f32.mrb[0].mxu0
    %3780 = vdwg.mxu0
    %3781 = vmatprep.subr.mxu0 0.0
    %v3782 = vand.u32 %v3402, 4294901760
    %3783 = vmatpush1.msra.mxu0 %v3782
    %3784 = vmatprep.subr.mxu0 0.0
    %3785 = vmatpush1.msra.mxu0 0.0
    %3786 = vmatprep.subr.mxu0 0.0
    %3787 = vmatpush1.msra.mxu0 0.0
    %3788 = vmatprep.subr.mxu0 0.0
    %3789 = vmatpush1.msra.mxu0 0.0
    %3790 = vmatprep.subr.mxu0 0.0
    %3791 = vmatpush1.msra.mxu0 0.0
    %3792 = vmatprep.subr.mxu0 0.0
    %3793 = vmatpush1.msra.mxu0 0.0
    %3794 = vmatprep.subr.mxu0 0.0
    %3795 = vmatpush1.msra.mxu0 0.0
    %3796 = vmatprep.subr.mxu0 0.0
    %3797 = vmatpush1.msra.mxu0 0.0
    %3798 = vmatprep.subr.mxu0 0.0
    %3799 = vmatpush1.msra.mxu0 0.0
    %3800 = vmatprep.subr.mxu0 0.0
    %3801 = vmatpush1.msra.mxu0 0.0
    %3802 = vmatprep.subr.mxu0 0.0
    %3803 = vmatpush1.msra.mxu0 0.0
    %3804 = vmatprep.subr.mxu0 0.0
    %3805 = vmatpush1.msra.mxu0 0.0
    %3806 = vmatprep.subr.mxu0 0.0
    %3807 = vmatpush1.msra.mxu0 0.0
    %3808 = vmatprep.subr.mxu0 0.0
    %3809 = vmatpush1.msra.mxu0 0.0
    %3810 = vmatprep.subr.mxu0 0.0
    %3811 = vmatpush1.msra.mxu0 0.0
    %3812 = vmatprep.subr.mxu0 0.0
    %3813 = vmatpush1.msra.mxu0 0.0
    %3814 = vmatprep.subr.mxu0 0.0
    %3815 = vmatpush1.msra.mxu0 0.0
    %3816 = vmatprep.subr.mxu0 0.0
    %3817 = vmatpush1.msra.mxu0 0.0
    %3818 = vmatprep.subr.mxu0 0.0
    %3819 = vmatpush1.msra.mxu0 0.0
    %3820 = vmatprep.subr.mxu0 0.0
    %3821 = vmatpush1.msra.mxu0 0.0
    %3822 = vmatprep.subr.mxu0 0.0
    %3823 = vmatpush1.msra.mxu0 0.0
    %3824 = vmatprep.subr.mxu0 0.0
    %3825 = vmatpush1.msra.mxu0 0.0
    %3826 = vmatprep.subr.mxu0 0.0
    %3827 = vmatpush1.msra.mxu0 0.0
    %3828 = vmatprep.subr.mxu0 0.0
    %3829 = vmatpush1.msra.mxu0 0.0
    %3830 = vmatprep.subr.mxu0 0.0
    %3831 = vmatpush1.msra.mxu0 0.0
    %3832 = vmatprep.subr.mxu0 0.0
    %3833 = vmatpush1.msra.mxu0 0.0
    %3834 = vmatprep.subr.mxu0 0.0
    %3835 = vmatpush1.msra.mxu0 0.0
    %3836 = vmatprep.subr.mxu0 0.0
    %3837 = vmatpush1.msra.mxu0 0.0
    %3838 = vmatprep.subr.mxu0 0.0
    %3839 = vmatpush1.msra.mxu0 0.0
    %3840 = vmatprep.subr.mxu0 0.0
    %3841 = vmatpush1.msra.mxu0 0.0
    %3842 = vmatprep.subr.mxu0 0.0
    %3843 = vmatpush1.msra.mxu0 0.0
    %3844 = vmatprep.subr.mxu0 0.0
    %3845 = vmatpush1.msra.mxu0 0.0
    %3846 = vmatprep.mubr.f32.mxu0 0.0
    %v3847 = vand.u32 %v3405, 4294901760
    %3848 = vmatmul.mubr.f32.gmra.mrb[0].mxu0 %v3847
    %v3849 = vpop.f32.mrb[0].mxu0
    %v3850 = vadd.f32 %v3778, %v3849
    %v3851 = vpop.f32.mrb[0].mxu0
    %3852 = vdwg.mxu0
    %3853 = vrot.lane.b32.xlu0 %v638, 64
    %v3854 = vpop.permute.xlu0 %3853
    %v3857 = vsel %vm2452, %v2496, 0
    %3859 = vmatprep.subr.mxu0 0.0
    %v3860 = vand.u32 %v3854, 4294901760
    %3861 = vmatpush1.msra.mxu0 %v3860
    %3862 = vmatprep.subr.mxu0 0.0
    %3863 = vmatpush1.msra.mxu0 0.0
    %3864 = vmatprep.subr.mxu0 0.0
    %3865 = vmatpush1.msra.mxu0 0.0
    %3866 = vmatprep.subr.mxu0 0.0
    %3867 = vmatpush1.msra.mxu0 0.0
    %3868 = vmatprep.subr.mxu0 0.0
    %3869 = vmatpush1.msra.mxu0 0.0
    %3870 = vmatprep.subr.mxu0 0.0
    %3871 = vmatpush1.msra.mxu0 0.0
    %3872 = vmatprep.subr.mxu0 0.0
    %3873 = vmatpush1.msra.mxu0 0.0
    %3874 = vmatprep.subr.mxu0 0.0
    %3875 = vmatpush1.msra.mxu0 0.0
    %3876 = vmatprep.subr.mxu0 0.0
    %3877 = vmatpush1.msra.mxu0 0.0
    %3878 = vmatprep.subr.mxu0 0.0
    %3879 = vmatpush1.msra.mxu0 0.0
    %3880 = vmatprep.subr.mxu0 0.0
    %3881 = vmatpush1.msra.mxu0 0.0
    %3882 = vmatprep.subr.mxu0 0.0
    %3883 = vmatpush1.msra.mxu0 0.0
    %3884 = vmatprep.subr.mxu0 0.0
    %3885 = vmatpush1.msra.mxu0 0.0
    %3886 = vmatprep.subr.mxu0 0.0
    %3887 = vmatpush1.msra.mxu0 0.0
    %3888 = vmatprep.subr.mxu0 0.0
    %3889 = vmatpush1.msra.mxu0 0.0
    %3890 = vmatprep.subr.mxu0 0.0
    %3891 = vmatpush1.msra.mxu0 0.0
    %3892 = vmatprep.subr.mxu0 0.0
    %3893 = vmatpush1.msra.mxu0 0.0
    %3894 = vmatprep.subr.mxu0 0.0
    %3895 = vmatpush1.msra.mxu0 0.0
    %3896 = vmatprep.subr.mxu0 0.0
    %3897 = vmatpush1.msra.mxu0 0.0
    %3898 = vmatprep.subr.mxu0 0.0
    %3899 = vmatpush1.msra.mxu0 0.0
    %3900 = vmatprep.subr.mxu0 0.0
    %3901 = vmatpush1.msra.mxu0 0.0
    %3902 = vmatprep.subr.mxu0 0.0
    %3903 = vmatpush1.msra.mxu0 0.0
    %3904 = vmatprep.subr.mxu0 0.0
    %3905 = vmatpush1.msra.mxu0 0.0
    %3906 = vmatprep.subr.mxu0 0.0
    %3907 = vmatpush1.msra.mxu0 0.0
    %3908 = vmatprep.subr.mxu0 0.0
    %3909 = vmatpush1.msra.mxu0 0.0
    %3910 = vmatprep.subr.mxu0 0.0
    %3911 = vmatpush1.msra.mxu0 0.0
    %3912 = vmatprep.subr.mxu0 0.0
    %3913 = vmatpush1.msra.mxu0 0.0
    %3914 = vmatprep.subr.mxu0 0.0
    %3915 = vmatpush1.msra.mxu0 0.0
    %3916 = vmatprep.subr.mxu0 0.0
    %3917 = vmatpush1.msra.mxu0 0.0
    %3918 = vmatprep.subr.mxu0 0.0
    %3919 = vmatpush1.msra.mxu0 0.0
    %3920 = vmatprep.subr.mxu0 0.0
    %3921 = vmatpush1.msra.mxu0 0.0
    %3922 = vmatprep.subr.mxu0 0.0
    %3923 = vmatpush1.msra.mxu0 0.0
    %3924 = vmatprep.mubr.f32.mxu0 0.0
    %v3925 = vand.u32 %v3857, 4294901760
    %v3926 = vsub.f32 %v3857, %v3925
    %v3927 = vand.u32 %v3926, 4294901760
    %v3928 = vsub.f32 %v3926, %v3927
    %v3929 = vand.u32 %v3928, 4294901760
    %3930 = vmatmul.mubr.f32.gmra.mrb[0].mxu0 %v3929
    %v3931 = vpop.f32.mrb[0].mxu0
    %v3932 = vadd.f32 0.0, %v3931
    %v3933 = vpop.f32.mrb[0].mxu0
    %3934 = vdwg.mxu0
    %3935 = vmatprep.subr.mxu0 0.0
    %v3936 = vand.u32 %v3854, 4294901760
    %v3937 = vsub.f32 %v3854, %v3936
    %v3938 = vand.u32 %v3937, 4294901760
    %v3939 = vsub.f32 %v3937, %v3938
    %v3940 = vand.u32 %v3939, 4294901760
    %3941 = vmatpush1.msra.mxu0 %v3940
    %3942 = vmatprep.subr.mxu0 0.0
    %3943 = vmatpush1.msra.mxu0 0.0
    %3944 = vmatprep.subr.mxu0 0.0
    %3945 = vmatpush1.msra.mxu0 0.0
    %3946 = vmatprep.subr.mxu0 0.0
    %3947 = vmatpush1.msra.mxu0 0.0
    %3948 = vmatprep.subr.mxu0 0.0
    %3949 = vmatpush1.msra.mxu0 0.0
    %3950 = vmatprep.subr.mxu0 0.0
    %3951 = vmatpush1.msra.mxu0 0.0
    %3952 = vmatprep.subr.mxu0 0.0
    %3953 = vmatpush1.msra.mxu0 0.0
    %3954 = vmatprep.subr.mxu0 0.0
    %3955 = vmatpush1.msra.mxu0 0.0
    %3956 = vmatprep.subr.mxu0 0.0
    %3957 = vmatpush1.msra.mxu0 0.0
    %3958 = vmatprep.subr.mxu0 0.0
    %3959 = vmatpush1.msra.mxu0 0.0
    %3960 = vmatprep.subr.mxu0 0.0
    %3961 = vmatpush1.msra.mxu0 0.0
    %3962 = vmatprep.subr.mxu0 0.0
    %3963 = vmatpush1.msra.mxu0 0.0
    %3964 = vmatprep.subr.mxu0 0.0
    %3965 = vmatpush1.msra.mxu0 0.0
    %3966 = vmatprep.subr.mxu0 0.0
    %3967 = vmatpush1.msra.mxu0 0.0
    %3968 = vmatprep.subr.mxu0 0.0
    %3969 = vmatpush1.msra.mxu0 0.0
    %3970 = vmatprep.subr.mxu0 0.0
    %3971 = vmatpush1.msra.mxu0 0.0
    %3972 = vmatprep.subr.mxu0 0.0
    %3973 = vmatpush1.msra.mxu0 0.0
    %3974 = vmatprep.subr.mxu0 0.0
    %3975 = vmatpush1.msra.mxu0 0.0
    %3976 = vmatprep.subr.mxu0 0.0
    %3977 = vmatpush1.msra.mxu0 0.0
    %3978 = vmatprep.subr.mxu0 0.0
    %3979 = vmatpush1.msra.mxu0 0.0
    %3980 = vmatprep.subr.mxu0 0.0
    %3981 = vmatpush1.msra.mxu0 0.0
    %3982 = vmatprep.subr.mxu0 0.0
    %3983 = vmatpush1.msra.mxu0 0.0
    %3984 = vmatprep.subr.mxu0 0.0
    %3985 = vmatpush1.msra.mxu0 0.0
    %3986 = vmatprep.subr.mxu0 0.0
    %3987 = vmatpush1.msra.mxu0 0.0
    %3988 = vmatprep.subr.mxu0 0.0
    %3989 = vmatpush1.msra.mxu0 0.0
    %3990 = vmatprep.subr.mxu0 0.0
    %3991 = vmatpush1.msra.mxu0 0.0
    %3992 = vmatprep.subr.mxu0 0.0
    %3993 = vmatpush1.msra.mxu0 0.0
    %3994 = vmatprep.subr.mxu0 0.0
    %3995 = vmatpush1.msra.mxu0 0.0
    %3996 = vmatprep.subr.mxu0 0.0
    %3997 = vmatpush1.msra.mxu0 0.0
    %3998 = vmatprep.subr.mxu0 0.0
    %3999 = vmatpush1.msra.mxu0 0.0
    %4000 = vmatprep.subr.mxu0 0.0
    %4001 = vmatpush1.msra.mxu0 0.0
    %4002 = vmatprep.subr.mxu0 0.0
    %4003 = vmatpush1.msra.mxu0 0.0
    %4004 = vmatprep.mubr.f32.mxu0 0.0
    %v4005 = vand.u32 %v3857, 4294901760
    %4006 = vmatmul.mubr.f32.gmra.mrb[0].mxu0 %v4005
    %v4007 = vpop.f32.mrb[0].mxu0
    %v4008 = vadd.f32 %v3932, %v4007
    %v4009 = vpop.f32.mrb[0].mxu0
    %4010 = vdwg.mxu0
    %4011 = vmatprep.subr.mxu0 0.0
    %v4012 = vand.u32 %v3854, 4294901760
    %v4013 = vsub.f32 %v3854, %v4012
    %4014 = vmatpush1.msra.mxu0 %v4013
    %4015 = vmatprep.subr.mxu0 0.0
    %4016 = vmatpush1.msra.mxu0 0.0
    %4017 = vmatprep.subr.mxu0 0.0
    %4018 = vmatpush1.msra.mxu0 0.0
    %4019 = vmatprep.subr.mxu0 0.0
    %4020 = vmatpush1.msra.mxu0 0.0
    %4021 = vmatprep.subr.mxu0 0.0
    %4022 = vmatpush1.msra.mxu0 0.0
    %4023 = vmatprep.subr.mxu0 0.0
    %4024 = vmatpush1.msra.mxu0 0.0
    %4025 = vmatprep.subr.mxu0 0.0
    %4026 = vmatpush1.msra.mxu0 0.0
    %4027 = vmatprep.subr.mxu0 0.0
    %4028 = vmatpush1.msra.mxu0 0.0
    %4029 = vmatprep.subr.mxu0 0.0
    %4030 = vmatpush1.msra.mxu0 0.0
    %4031 = vmatprep.subr.mxu0 0.0
    %4032 = vmatpush1.msra.mxu0 0.0
    %4033 = vmatprep.subr.mxu0 0.0
    %4034 = vmatpush1.msra.mxu0 0.0
    %4035 = vmatprep.subr.mxu0 0.0
    %4036 = vmatpush1.msra.mxu0 0.0
    %4037 = vmatprep.subr.mxu0 0.0
    %4038 = vmatpush1.msra.mxu0 0.0
    %4039 = vmatprep.subr.mxu0 0.0
    %4040 = vmatpush1.msra.mxu0 0.0
    %4041 = vmatprep.subr.mxu0 0.0
    %4042 = vmatpush1.msra.mxu0 0.0
    %4043 = vmatprep.subr.mxu0 0.0
    %4044 = vmatpush1.msra.mxu0 0.0
    %4045 = vmatprep.subr.mxu0 0.0
    %4046 = vmatpush1.msra.mxu0 0.0
    %4047 = vmatprep.subr.mxu0 0.0
    %4048 = vmatpush1.msra.mxu0 0.0
    %4049 = vmatprep.subr.mxu0 0.0
    %4050 = vmatpush1.msra.mxu0 0.0
    %4051 = vmatprep.subr.mxu0 0.0
    %4052 = vmatpush1.msra.mxu0 0.0
    %4053 = vmatprep.subr.mxu0 0.0
    %4054 = vmatpush1.msra.mxu0 0.0
    %4055 = vmatprep.subr.mxu0 0.0
    %4056 = vmatpush1.msra.mxu0 0.0
    %4057 = vmatprep.subr.mxu0 0.0
    %4058 = vmatpush1.msra.mxu0 0.0
    %4059 = vmatprep.subr.mxu0 0.0
    %4060 = vmatpush1.msra.mxu0 0.0
    %4061 = vmatprep.subr.mxu0 0.0
    %4062 = vmatpush1.msra.mxu0 0.0
    %4063 = vmatprep.subr.mxu0 0.0
    %4064 = vmatpush1.msra.mxu0 0.0
    %4065 = vmatprep.subr.mxu0 0.0
    %4066 = vmatpush1.msra.mxu0 0.0
    %4067 = vmatprep.subr.mxu0 0.0
    %4068 = vmatpush1.msra.mxu0 0.0
    %4069 = vmatprep.subr.mxu0 0.0
    %4070 = vmatpush1.msra.mxu0 0.0
    %4071 = vmatprep.subr.mxu0 0.0
    %4072 = vmatpush1.msra.mxu0 0.0
    %4073 = vmatprep.subr.mxu0 0.0
    %4074 = vmatpush1.msra.mxu0 0.0
    %4075 = vmatprep.subr.mxu0 0.0
    %4076 = vmatpush1.msra.mxu0 0.0
    %4077 = vmatprep.mubr.f32.mxu0 0.0
    %v4078 = vand.u32 %v3857, 4294901760
    %v4079 = vsub.f32 %v3857, %v4078
    %4080 = vmatmul.mubr.f32.gmra.mrb[0].mxu0 %v4079
    %v4081 = vpop.f32.mrb[0].mxu0
    %v4082 = vadd.f32 %v4008, %v4081
    %v4083 = vpop.f32.mrb[0].mxu0
    %4084 = vdwg.mxu0
    %4085 = vmatprep.subr.mxu0 0.0
    %v4086 = vand.u32 %v3854, 4294901760
    %4087 = vmatpush1.msra.mxu0 %v4086
    %4088 = vmatprep.subr.mxu0 0.0
    %4089 = vmatpush1.msra.mxu0 0.0
    %4090 = vmatprep.subr.mxu0 0.0
    %4091 = vmatpush1.msra.mxu0 0.0
    %4092 = vmatprep.subr.mxu0 0.0
    %4093 = vmatpush1.msra.mxu0 0.0
    %4094 = vmatprep.subr.mxu0 0.0
    %4095 = vmatpush1.msra.mxu0 0.0
    %4096 = vmatprep.subr.mxu0 0.0
    %4097 = vmatpush1.msra.mxu0 0.0
    %4098 = vmatprep.subr.mxu0 0.0
    %4099 = vmatpush1.msra.mxu0 0.0
    %4100 = vmatprep.subr.mxu0 0.0
    %4101 = vmatpush1.msra.mxu0 0.0
    %4102 = vmatprep.subr.mxu0 0.0
    %4103 = vmatpush1.msra.mxu0 0.0
    %4104 = vmatprep.subr.mxu0 0.0
    %4105 = vmatpush1.msra.mxu0 0.0
    %4106 = vmatprep.subr.mxu0 0.0
    %4107 = vmatpush1.msra.mxu0 0.0
    %4108 = vmatprep.subr.mxu0 0.0
    %4109 = vmatpush1.msra.mxu0 0.0
    %4110 = vmatprep.subr.mxu0 0.0
    %4111 = vmatpush1.msra.mxu0 0.0
    %4112 = vmatprep.subr.mxu0 0.0
    %4113 = vmatpush1.msra.mxu0 0.0
    %4114 = vmatprep.subr.mxu0 0.0
    %4115 = vmatpush1.msra.mxu0 0.0
    %4116 = vmatprep.subr.mxu0 0.0
    %4117 = vmatpush1.msra.mxu0 0.0
    %4118 = vmatprep.subr.mxu0 0.0
    %4119 = vmatpush1.msra.mxu0 0.0
    %4120 = vmatprep.subr.mxu0 0.0
    %4121 = vmatpush1.msra.mxu0 0.0
    %4122 = vmatprep.subr.mxu0 0.0
    %4123 = vmatpush1.msra.mxu0 0.0
    %4124 = vmatprep.subr.mxu0 0.0
    %4125 = vmatpush1.msra.mxu0 0.0
    %4126 = vmatprep.subr.mxu0 0.0
    %4127 = vmatpush1.msra.mxu0 0.0
    %4128 = vmatprep.subr.mxu0 0.0
    %4129 = vmatpush1.msra.mxu0 0.0
    %4130 = vmatprep.subr.mxu0 0.0
    %4131 = vmatpush1.msra.mxu0 0.0
    %4132 = vmatprep.subr.mxu0 0.0
    %4133 = vmatpush1.msra.mxu0 0.0
    %4134 = vmatprep.subr.mxu0 0.0
    %4135 = vmatpush1.msra.mxu0 0.0
    %4136 = vmatprep.subr.mxu0 0.0
    %4137 = vmatpush1.msra.mxu0 0.0
    %4138 = vmatprep.subr.mxu0 0.0
    %4139 = vmatpush1.msra.mxu0 0.0
    %4140 = vmatprep.subr.mxu0 0.0
    %4141 = vmatpush1.msra.mxu0 0.0
    %4142 = vmatprep.subr.mxu0 0.0
    %4143 = vmatpush1.msra.mxu0 0.0
    %4144 = vmatprep.subr.mxu0 0.0
    %4145 = vmatpush1.msra.mxu0 0.0
    %4146 = vmatprep.subr.mxu0 0.0
    %4147 = vmatpush1.msra.mxu0 0.0
    %4148 = vmatprep.subr.mxu0 0.0
    %4149 = vmatpush1.msra.mxu0 0.0
    %4150 = vmatprep.mubr.f32.mxu0 0.0
    %v4151 = vand.u32 %v3857, 4294901760
    %v4152 = vsub.f32 %v3857, %v4151
    %v4153 = vand.u32 %v4152, 4294901760
    %4154 = vmatmul.mubr.f32.gmra.mrb[0].mxu0 %v4153
    %v4155 = vpop.f32.mrb[0].mxu0
    %v4156 = vadd.f32 %v4082, %v4155
    %v4157 = vpop.f32.mrb[0].mxu0
    %4158 = vdwg.mxu0
    %4159 = vmatprep.subr.mxu0 0.0
    %v4160 = vand.u32 %v3854, 4294901760
    %v4161 = vsub.f32 %v3854, %v4160
    %v4162 = vand.u32 %v4161, 4294901760
    %4163 = vmatpush1.msra.mxu0 %v4162
    %4164 = vmatprep.subr.mxu0 0.0
    %4165 = vmatpush1.msra.mxu0 0.0
    %4166 = vmatprep.subr.mxu0 0.0
    %4167 = vmatpush1.msra.mxu0 0.0
    %4168 = vmatprep.subr.mxu0 0.0
    %4169 = vmatpush1.msra.mxu0 0.0
    %4170 = vmatprep.subr.mxu0 0.0
    %4171 = vmatpush1.msra.mxu0 0.0
    %4172 = vmatprep.subr.mxu0 0.0
    %4173 = vmatpush1.msra.mxu0 0.0
    %4174 = vmatprep.subr.mxu0 0.0
    %4175 = vmatpush1.msra.mxu0 0.0
    %4176 = vmatprep.subr.mxu0 0.0
    %4177 = vmatpush1.msra.mxu0 0.0
    %4178 = vmatprep.subr.mxu0 0.0
    %4179 = vmatpush1.msra.mxu0 0.0
    %4180 = vmatprep.subr.mxu0 0.0
    %4181 = vmatpush1.msra.mxu0 0.0
    %4182 = vmatprep.subr.mxu0 0.0
    %4183 = vmatpush1.msra.mxu0 0.0
    %4184 = vmatprep.subr.mxu0 0.0
    %4185 = vmatpush1.msra.mxu0 0.0
    %4186 = vmatprep.subr.mxu0 0.0
    %4187 = vmatpush1.msra.mxu0 0.0
    %4188 = vmatprep.subr.mxu0 0.0
    %4189 = vmatpush1.msra.mxu0 0.0
    %4190 = vmatprep.subr.mxu0 0.0
    %4191 = vmatpush1.msra.mxu0 0.0
    %4192 = vmatprep.subr.mxu0 0.0
    %4193 = vmatpush1.msra.mxu0 0.0
    %4194 = vmatprep.subr.mxu0 0.0
    %4195 = vmatpush1.msra.mxu0 0.0
    %4196 = vmatprep.subr.mxu0 0.0
    %4197 = vmatpush1.msra.mxu0 0.0
    %4198 = vmatprep.subr.mxu0 0.0
    %4199 = vmatpush1.msra.mxu0 0.0
    %4200 = vmatprep.subr.mxu0 0.0
    %4201 = vmatpush1.msra.mxu0 0.0
    %4202 = vmatprep.subr.mxu0 0.0
    %4203 = vmatpush1.msra.mxu0 0.0
    %4204 = vmatprep.subr.mxu0 0.0
    %4205 = vmatpush1.msra.mxu0 0.0
    %4206 = vmatprep.subr.mxu0 0.0
    %4207 = vmatpush1.msra.mxu0 0.0
    %4208 = vmatprep.subr.mxu0 0.0
    %4209 = vmatpush1.msra.mxu0 0.0
    %4210 = vmatprep.subr.mxu0 0.0
    %4211 = vmatpush1.msra.mxu0 0.0
    %4212 = vmatprep.subr.mxu0 0.0
    %4213 = vmatpush1.msra.mxu0 0.0
    %4214 = vmatprep.subr.mxu0 0.0
    %4215 = vmatpush1.msra.mxu0 0.0
    %4216 = vmatprep.subr.mxu0 0.0
    %4217 = vmatpush1.msra.mxu0 0.0
    %4218 = vmatprep.subr.mxu0 0.0
    %4219 = vmatpush1.msra.mxu0 0.0
    %4220 = vmatprep.subr.mxu0 0.0
    %4221 = vmatpush1.msra.mxu0 0.0
    %4222 = vmatprep.subr.mxu0 0.0
    %4223 = vmatpush1.msra.mxu0 0.0
    %4224 = vmatprep.subr.mxu0 0.0
    %4225 = vmatpush1.msra.mxu0 0.0
    %4226 = vmatprep.mubr.f32.mxu0 0.0
    %v4227 = vand.u32 %v3857, 4294901760
    %4228 = vmatmul.mubr.f32.gmra.mrb[0].mxu0 %v4227
    %v4229 = vpop.f32.mrb[0].mxu0
    %v4230 = vadd.f32 %v4156, %v4229
    %v4231 = vpop.f32.mrb[0].mxu0
    %4232 = vdwg.mxu0
    %4233 = vmatprep.subr.mxu0 0.0
    %v4234 = vand.u32 %v3854, 4294901760
    %4235 = vmatpush1.msra.mxu0 %v4234
    %4236 = vmatprep.subr.mxu0 0.0
    %4237 = vmatpush1.msra.mxu0 0.0
    %4238 = vmatprep.subr.mxu0 0.0
    %4239 = vmatpush1.msra.mxu0 0.0
    %4240 = vmatprep.subr.mxu0 0.0
    %4241 = vmatpush1.msra.mxu0 0.0
    %4242 = vmatprep.subr.mxu0 0.0
    %4243 = vmatpush1.msra.mxu0 0.0
    %4244 = vmatprep.subr.mxu0 0.0
    %4245 = vmatpush1.msra.mxu0 0.0
    %4246 = vmatprep.subr.mxu0 0.0
    %4247 = vmatpush1.msra.mxu0 0.0
    %4248 = vmatprep.subr.mxu0 0.0
    %4249 = vmatpush1.msra.mxu0 0.0
    %4250 = vmatprep.subr.mxu0 0.0
    %4251 = vmatpush1.msra.mxu0 0.0
    %4252 = vmatprep.subr.mxu0 0.0
    %4253 = vmatpush1.msra.mxu0 0.0
    %4254 = vmatprep.subr.mxu0 0.0
    %4255 = vmatpush1.msra.mxu0 0.0
    %4256 = vmatprep.subr.mxu0 0.0
    %4257 = vmatpush1.msra.mxu0 0.0
    %4258 = vmatprep.subr.mxu0 0.0
    %4259 = vmatpush1.msra.mxu0 0.0
    %4260 = vmatprep.subr.mxu0 0.0
    %4261 = vmatpush1.msra.mxu0 0.0
    %4262 = vmatprep.subr.mxu0 0.0
    %4263 = vmatpush1.msra.mxu0 0.0
    %4264 = vmatprep.subr.mxu0 0.0
    %4265 = vmatpush1.msra.mxu0 0.0
    %4266 = vmatprep.subr.mxu0 0.0
    %4267 = vmatpush1.msra.mxu0 0.0
    %4268 = vmatprep.subr.mxu0 0.0
    %4269 = vmatpush1.msra.mxu0 0.0
    %4270 = vmatprep.subr.mxu0 0.0
    %4271 = vmatpush1.msra.mxu0 0.0
    %4272 = vmatprep.subr.mxu0 0.0
    %4273 = vmatpush1.msra.mxu0 0.0
    %4274 = vmatprep.subr.mxu0 0.0
    %4275 = vmatpush1.msra.mxu0 0.0
    %4276 = vmatprep.subr.mxu0 0.0
    %4277 = vmatpush1.msra.mxu0 0.0
    %4278 = vmatprep.subr.mxu0 0.0
    %4279 = vmatpush1.msra.mxu0 0.0
    %4280 = vmatprep.subr.mxu0 0.0
    %4281 = vmatpush1.msra.mxu0 0.0
    %4282 = vmatprep.subr.mxu0 0.0
    %4283 = vmatpush1.msra.mxu0 0.0
    %4284 = vmatprep.subr.mxu0 0.0
    %4285 = vmatpush1.msra.mxu0 0.0
    %4286 = vmatprep.subr.mxu0 0.0
    %4287 = vmatpush1.msra.mxu0 0.0
    %4288 = vmatprep.subr.mxu0 0.0
    %4289 = vmatpush1.msra.mxu0 0.0
    %4290 = vmatprep.subr.mxu0 0.0
    %4291 = vmatpush1.msra.mxu0 0.0
    %4292 = vmatprep.subr.mxu0 0.0
    %4293 = vmatpush1.msra.mxu0 0.0
    %4294 = vmatprep.subr.mxu0 0.0
    %4295 = vmatpush1.msra.mxu0 0.0
    %4296 = vmatprep.subr.mxu0 0.0
    %4297 = vmatpush1.msra.mxu0 0.0
    %4298 = vmatprep.mubr.f32.mxu0 0.0
    %v4299 = vand.u32 %v3857, 4294901760
    %4300 = vmatmul.mubr.f32.gmra.mrb[0].mxu0 %v4299
    %v4301 = vpop.f32.mrb[0].mxu0
    %v4302 = vadd.f32 %v4230, %v4301
    %v4303 = vpop.f32.mrb[0].mxu0
    %4304 = vdwg.mxu0
    %4307 = vrot.lane.b32.xlu0 %v3850, 16
    %v4308 = vpop.permute.xlu0 %4307
    %4309 = vrot.lane.b32.xlu0 %v4302, 16
    %v4310 = vpop.permute.xlu0 %4309
    %v4313 = vsel %vm641, %v2946, %v4308
    %v4314 = vsel %vm641, %v3398, %v4310
    %v4315 = vadd.f32 %v40, %v4313
    %v4316 = vadd.f32 %v41, %v4314
    %v4317 = vsel %vm55, %v4315, 0.0
    %4318 = vadd.xlane.f32.xlu0 %v4317
    %v4319 = vpop.xlane.xlu0 %4318
    %v4320 = vsel %vm55, %v4316, 0.0
    %4321 = vadd.xlane.f32.xlu0 %v4320
    %v4322 = vpop.xlane.xlu0 %4321
    %v4323 = vmul.f32 %v4319, %v62
    %v4324 = vmul.f32 %v4322, %v62
    %v4325 = vsub.f32 %v4315, %v4323
    %v4326 = vsub.f32 %v4316, %v4324
    %v4327 = vmul.f32 %v4325, %v4325
    %v4328 = vmul.f32 %v4326, %v4326
    %v4329 = vsel %vm55, %v4327, 0.0
    %4330 = vadd.xlane.f32.xlu0 %v4329
    %v4331 = vpop.xlane.xlu0 %4330
    %v4332 = vsel %vm55, %v4328, 0.0
    %4333 = vadd.xlane.f32.xlu0 %v4332
    %v4334 = vpop.xlane.xlu0 %4333
    %v4335 = vmul.f32 %v4331, %v62
    %v4336 = vmul.f32 %v4334, %v62
    %v4337 = vadd.f32 %v4335, 1e-05
    %v4338 = vadd.f32 %v4336, 1e-05
    %v4339 = vrsqrt.pop %v4337
    %v4340 = vrsqrt.pop %v4338
    %v4341 = vmul.f32 %v4325, %v4339
    %v4342 = vmul.f32 %v4326, %v4340
    %v4343 = vlaneseq
    %v4344 = vshrl.u32 %v4343, 7
    %v4345 = vsub.s32 2, %v4344
    %v4346 = vrot.slane %v54, %v4345
    %v4347 = vmul.f32 %v4341, %v4346
    %v4348 = vmul.f32 %v4342, %v4346
    %v4349 = vlaneseq
    %v4350 = vshrl.u32 %v4349, 7
    %v4351 = vsub.s32 3, %v4350
    %v4352 = vrot.slane %v54, %v4351
    %v4353 = vadd.f32 %v4347, %v4352
    %v4354 = vadd.f32 %v4348, %v4352
    %v4355 = vlaneseq
    %v4356 = vshrl.u32 %v4355, 7
    %v4357 = vsub.s32 6, %v4356
    %v4358 = vrot.slane %v54, %v4357
    %v4360 = vsel %vm55, %v4353, 0
    %v4363 = vsel %vm55, %v4354, 0
    %4365 = vmatprep.subr.mxu0 0.0
    %v4366 = vand.u32 %v46, 4294901760
    %4367 = vmatpush1.msra.mxu0 %v4366
    %4368 = vmatprep.subr.mxu0 0.0
    %v4369 = vand.u32 %v47, 4294901760
    %4370 = vmatpush1.msra.mxu0 %v4369
    %4371 = vmatprep.subr.mxu0 0.0
    %v4372 = vand.u32 %v48, 4294901760
    %4373 = vmatpush1.msra.mxu0 %v4372
    %4374 = vmatprep.subr.mxu0 0.0
    %v4375 = vand.u32 %v49, 4294901760
    %4376 = vmatpush1.msra.mxu0 %v4375
    %4377 = vmatprep.subr.mxu0 0.0
    %4378 = vmatpush1.msra.mxu0 0.0
    %4379 = vmatprep.subr.mxu0 0.0
    %4380 = vmatpush1.msra.mxu0 0.0
    %4381 = vmatprep.subr.mxu0 0.0
    %4382 = vmatpush1.msra.mxu0 0.0
    %4383 = vmatprep.subr.mxu0 0.0
    %4384 = vmatpush1.msra.mxu0 0.0
    %4385 = vmatprep.subr.mxu0 0.0
    %4386 = vmatpush1.msra.mxu0 0.0
    %4387 = vmatprep.subr.mxu0 0.0
    %4388 = vmatpush1.msra.mxu0 0.0
    %4389 = vmatprep.subr.mxu0 0.0
    %4390 = vmatpush1.msra.mxu0 0.0
    %4391 = vmatprep.subr.mxu0 0.0
    %4392 = vmatpush1.msra.mxu0 0.0
    %4393 = vmatprep.subr.mxu0 0.0
    %4394 = vmatpush1.msra.mxu0 0.0
    %4395 = vmatprep.subr.mxu0 0.0
    %4396 = vmatpush1.msra.mxu0 0.0
    %4397 = vmatprep.subr.mxu0 0.0
    %4398 = vmatpush1.msra.mxu0 0.0
    %4399 = vmatprep.subr.mxu0 0.0
    %4400 = vmatpush1.msra.mxu0 0.0
    %4401 = vmatprep.subr.mxu0 0.0
    %4402 = vmatpush1.msra.mxu0 0.0
    %4403 = vmatprep.subr.mxu0 0.0
    %4404 = vmatpush1.msra.mxu0 0.0
    %4405 = vmatprep.subr.mxu0 0.0
    %4406 = vmatpush1.msra.mxu0 0.0
    %4407 = vmatprep.subr.mxu0 0.0
    %4408 = vmatpush1.msra.mxu0 0.0
    %4409 = vmatprep.subr.mxu0 0.0
    %4410 = vmatpush1.msra.mxu0 0.0
    %4411 = vmatprep.subr.mxu0 0.0
    %4412 = vmatpush1.msra.mxu0 0.0
    %4413 = vmatprep.subr.mxu0 0.0
    %4414 = vmatpush1.msra.mxu0 0.0
    %4415 = vmatprep.subr.mxu0 0.0
    %4416 = vmatpush1.msra.mxu0 0.0
    %4417 = vmatprep.subr.mxu0 0.0
    %4418 = vmatpush1.msra.mxu0 0.0
    %4419 = vmatprep.subr.mxu0 0.0
    %4420 = vmatpush1.msra.mxu0 0.0
    %4421 = vmatprep.subr.mxu0 0.0
    %4422 = vmatpush1.msra.mxu0 0.0
    %4423 = vmatprep.subr.mxu0 0.0
    %4424 = vmatpush1.msra.mxu0 0.0
    %4425 = vmatprep.subr.mxu0 0.0
    %4426 = vmatpush1.msra.mxu0 0.0
    %4427 = vmatprep.subr.mxu0 0.0
    %4428 = vmatpush1.msra.mxu0 0.0
    %4429 = vmatprep.subr.mxu0 0.0
    %4430 = vmatpush1.msra.mxu0 0.0
    %4431 = vmatprep.subr.mxu0 0.0
    %4432 = vmatpush1.msra.mxu0 0.0
    %4433 = vmatprep.mubr.f32.mxu0 0.0
    %v4434 = vand.u32 %v4360, 4294901760
    %v4435 = vsub.f32 %v4360, %v4434
    %v4436 = vand.u32 %v4435, 4294901760
    %v4437 = vsub.f32 %v4435, %v4436
    %v4438 = vand.u32 %v4437, 4294901760
    %4439 = vmatmul.mubr.f32.gmra.mrb[0].mxu0 %v4438
    %v4440 = vpop.f32.mrb[0].mxu0
    %v4441 = vadd.f32 %v4358, %v4440
    %v4442 = vpop.f32.mrb[0].mxu0
    %4443 = vmatprep.mubr.f32.mxu0 0.0
    %v4444 = vand.u32 %v4363, 4294901760
    %v4445 = vsub.f32 %v4363, %v4444
    %v4446 = vand.u32 %v4445, 4294901760
    %v4447 = vsub.f32 %v4445, %v4446
    %v4448 = vand.u32 %v4447, 4294901760
    %4449 = vmatmul.mubr.f32.gmra.mrb[0].mxu0 %v4448
    %v4450 = vpop.f32.mrb[0].mxu0
    %v4451 = vadd.f32 %v4358, %v4450
    %v4452 = vpop.f32.mrb[0].mxu0
    %4453 = vdwg.mxu0
    %4454 = vmatprep.subr.mxu0 0.0
    %v4455 = vand.u32 %v46, 4294901760
    %v4456 = vsub.f32 %v46, %v4455
    %v4457 = vand.u32 %v4456, 4294901760
    %v4458 = vsub.f32 %v4456, %v4457
    %v4459 = vand.u32 %v4458, 4294901760
    %4460 = vmatpush1.msra.mxu0 %v4459
    %4461 = vmatprep.subr.mxu0 0.0
    %v4462 = vand.u32 %v47, 4294901760
    %v4463 = vsub.f32 %v47, %v4462
    %v4464 = vand.u32 %v4463, 4294901760
    %v4465 = vsub.f32 %v4463, %v4464
    %v4466 = vand.u32 %v4465, 4294901760
    %4467 = vmatpush1.msra.mxu0 %v4466
    %4468 = vmatprep.subr.mxu0 0.0
    %v4469 = vand.u32 %v48, 4294901760
    %v4470 = vsub.f32 %v48, %v4469
    %v4471 = vand.u32 %v4470, 4294901760
    %v4472 = vsub.f32 %v4470, %v4471
    %v4473 = vand.u32 %v4472, 4294901760
    %4474 = vmatpush1.msra.mxu0 %v4473
    %4475 = vmatprep.subr.mxu0 0.0
    %v4476 = vand.u32 %v49, 4294901760
    %v4477 = vsub.f32 %v49, %v4476
    %v4478 = vand.u32 %v4477, 4294901760
    %v4479 = vsub.f32 %v4477, %v4478
    %v4480 = vand.u32 %v4479, 4294901760
    %4481 = vmatpush1.msra.mxu0 %v4480
    %4482 = vmatprep.subr.mxu0 0.0
    %4483 = vmatpush1.msra.mxu0 0.0
    %4484 = vmatprep.subr.mxu0 0.0
    %4485 = vmatpush1.msra.mxu0 0.0
    %4486 = vmatprep.subr.mxu0 0.0
    %4487 = vmatpush1.msra.mxu0 0.0
    %4488 = vmatprep.subr.mxu0 0.0
    %4489 = vmatpush1.msra.mxu0 0.0
    %4490 = vmatprep.subr.mxu0 0.0
    %4491 = vmatpush1.msra.mxu0 0.0
    %4492 = vmatprep.subr.mxu0 0.0
    %4493 = vmatpush1.msra.mxu0 0.0
    %4494 = vmatprep.subr.mxu0 0.0
    %4495 = vmatpush1.msra.mxu0 0.0
    %4496 = vmatprep.subr.mxu0 0.0
    %4497 = vmatpush1.msra.mxu0 0.0
    %4498 = vmatprep.subr.mxu0 0.0
    %4499 = vmatpush1.msra.mxu0 0.0
    %4500 = vmatprep.subr.mxu0 0.0
    %4501 = vmatpush1.msra.mxu0 0.0
    %4502 = vmatprep.subr.mxu0 0.0
    %4503 = vmatpush1.msra.mxu0 0.0
    %4504 = vmatprep.subr.mxu0 0.0
    %4505 = vmatpush1.msra.mxu0 0.0
    %4506 = vmatprep.subr.mxu0 0.0
    %4507 = vmatpush1.msra.mxu0 0.0
    %4508 = vmatprep.subr.mxu0 0.0
    %4509 = vmatpush1.msra.mxu0 0.0
    %4510 = vmatprep.subr.mxu0 0.0
    %4511 = vmatpush1.msra.mxu0 0.0
    %4512 = vmatprep.subr.mxu0 0.0
    %4513 = vmatpush1.msra.mxu0 0.0
    %4514 = vmatprep.subr.mxu0 0.0
    %4515 = vmatpush1.msra.mxu0 0.0
    %4516 = vmatprep.subr.mxu0 0.0
    %4517 = vmatpush1.msra.mxu0 0.0
    %4518 = vmatprep.subr.mxu0 0.0
    %4519 = vmatpush1.msra.mxu0 0.0
    %4520 = vmatprep.subr.mxu0 0.0
    %4521 = vmatpush1.msra.mxu0 0.0
    %4522 = vmatprep.subr.mxu0 0.0
    %4523 = vmatpush1.msra.mxu0 0.0
    %4524 = vmatprep.subr.mxu0 0.0
    %4525 = vmatpush1.msra.mxu0 0.0
    %4526 = vmatprep.subr.mxu0 0.0
    %4527 = vmatpush1.msra.mxu0 0.0
    %4528 = vmatprep.subr.mxu0 0.0
    %4529 = vmatpush1.msra.mxu0 0.0
    %4530 = vmatprep.subr.mxu0 0.0
    %4531 = vmatpush1.msra.mxu0 0.0
    %4532 = vmatprep.subr.mxu0 0.0
    %4533 = vmatpush1.msra.mxu0 0.0
    %4534 = vmatprep.subr.mxu0 0.0
    %4535 = vmatpush1.msra.mxu0 0.0
    %4536 = vmatprep.subr.mxu0 0.0
    %4537 = vmatpush1.msra.mxu0 0.0
    %4538 = vmatprep.mubr.f32.mxu0 0.0
    %v4539 = vand.u32 %v4360, 4294901760
    %4540 = vmatmul.mubr.f32.gmra.mrb[0].mxu0 %v4539
    %v4541 = vpop.f32.mrb[0].mxu0
    %v4542 = vadd.f32 %v4441, %v4541
    %v4543 = vpop.f32.mrb[0].mxu0
    %4544 = vmatprep.mubr.f32.mxu0 0.0
    %v4545 = vand.u32 %v4363, 4294901760
    %4546 = vmatmul.mubr.f32.gmra.mrb[0].mxu0 %v4545
    %v4547 = vpop.f32.mrb[0].mxu0
    %v4548 = vadd.f32 %v4451, %v4547
    %v4549 = vpop.f32.mrb[0].mxu0
    %4550 = vdwg.mxu0
    %4551 = vmatprep.subr.mxu0 0.0
    %v4552 = vand.u32 %v46, 4294901760
    %v4553 = vsub.f32 %v46, %v4552
    %4554 = vmatpush1.msra.mxu0 %v4553
    %4555 = vmatprep.subr.mxu0 0.0
    %v4556 = vand.u32 %v47, 4294901760
    %v4557 = vsub.f32 %v47, %v4556
    %4558 = vmatpush1.msra.mxu0 %v4557
    %4559 = vmatprep.subr.mxu0 0.0
    %v4560 = vand.u32 %v48, 4294901760
    %v4561 = vsub.f32 %v48, %v4560
    %4562 = vmatpush1.msra.mxu0 %v4561
    %4563 = vmatprep.subr.mxu0 0.0
    %v4564 = vand.u32 %v49, 4294901760
    %v4565 = vsub.f32 %v49, %v4564
    %4566 = vmatpush1.msra.mxu0 %v4565
    %4567 = vmatprep.subr.mxu0 0.0
    %4568 = vmatpush1.msra.mxu0 0.0
    %4569 = vmatprep.subr.mxu0 0.0
    %4570 = vmatpush1.msra.mxu0 0.0
    %4571 = vmatprep.subr.mxu0 0.0
    %4572 = vmatpush1.msra.mxu0 0.0
    %4573 = vmatprep.subr.mxu0 0.0
    %4574 = vmatpush1.msra.mxu0 0.0
    %4575 = vmatprep.subr.mxu0 0.0
    %4576 = vmatpush1.msra.mxu0 0.0
    %4577 = vmatprep.subr.mxu0 0.0
    %4578 = vmatpush1.msra.mxu0 0.0
    %4579 = vmatprep.subr.mxu0 0.0
    %4580 = vmatpush1.msra.mxu0 0.0
    %4581 = vmatprep.subr.mxu0 0.0
    %4582 = vmatpush1.msra.mxu0 0.0
    %4583 = vmatprep.subr.mxu0 0.0
    %4584 = vmatpush1.msra.mxu0 0.0
    %4585 = vmatprep.subr.mxu0 0.0
    %4586 = vmatpush1.msra.mxu0 0.0
    %4587 = vmatprep.subr.mxu0 0.0
    %4588 = vmatpush1.msra.mxu0 0.0
    %4589 = vmatprep.subr.mxu0 0.0
    %4590 = vmatpush1.msra.mxu0 0.0
    %4591 = vmatprep.subr.mxu0 0.0
    %4592 = vmatpush1.msra.mxu0 0.0
    %4593 = vmatprep.subr.mxu0 0.0
    %4594 = vmatpush1.msra.mxu0 0.0
    %4595 = vmatprep.subr.mxu0 0.0
    %4596 = vmatpush1.msra.mxu0 0.0
    %4597 = vmatprep.subr.mxu0 0.0
    %4598 = vmatpush1.msra.mxu0 0.0
    %4599 = vmatprep.subr.mxu0 0.0
    %4600 = vmatpush1.msra.mxu0 0.0
    %4601 = vmatprep.subr.mxu0 0.0
    %4602 = vmatpush1.msra.mxu0 0.0
    %4603 = vmatprep.subr.mxu0 0.0
    %4604 = vmatpush1.msra.mxu0 0.0
    %4605 = vmatprep.subr.mxu0 0.0
    %4606 = vmatpush1.msra.mxu0 0.0
    %4607 = vmatprep.subr.mxu0 0.0
    %4608 = vmatpush1.msra.mxu0 0.0
    %4609 = vmatprep.subr.mxu0 0.0
    %4610 = vmatpush1.msra.mxu0 0.0
    %4611 = vmatprep.subr.mxu0 0.0
    %4612 = vmatpush1.msra.mxu0 0.0
    %4613 = vmatprep.subr.mxu0 0.0
    %4614 = vmatpush1.msra.mxu0 0.0
    %4615 = vmatprep.subr.mxu0 0.0
    %4616 = vmatpush1.msra.mxu0 0.0
    %4617 = vmatprep.subr.mxu0 0.0
    %4618 = vmatpush1.msra.mxu0 0.0
    %4619 = vmatprep.subr.mxu0 0.0
    %4620 = vmatpush1.msra.mxu0 0.0
    %4621 = vmatprep.subr.mxu0 0.0
    %4622 = vmatpush1.msra.mxu0 0.0
    %4623 = vmatprep.mubr.f32.mxu0 0.0
    %v4624 = vand.u32 %v4360, 4294901760
    %v4625 = vsub.f32 %v4360, %v4624
    %4626 = vmatmul.mubr.f32.gmra.mrb[0].mxu0 %v4625
    %v4627 = vpop.f32.mrb[0].mxu0
    %v4628 = vadd.f32 %v4542, %v4627
    %v4629 = vpop.f32.mrb[0].mxu0
    %4630 = vmatprep.mubr.f32.mxu0 0.0
    %v4631 = vand.u32 %v4363, 4294901760
    %v4632 = vsub.f32 %v4363, %v4631
    %4633 = vmatmul.mubr.f32.gmra.mrb[0].mxu0 %v4632
    %v4634 = vpop.f32.mrb[0].mxu0
    %v4635 = vadd.f32 %v4548, %v4634
    %v4636 = vpop.f32.mrb[0].mxu0
    %4637 = vdwg.mxu0
    %4638 = vmatprep.subr.mxu0 0.0
    %v4639 = vand.u32 %v46, 4294901760
    %4640 = vmatpush1.msra.mxu0 %v4639
    %4641 = vmatprep.subr.mxu0 0.0
    %v4642 = vand.u32 %v47, 4294901760
    %4643 = vmatpush1.msra.mxu0 %v4642
    %4644 = vmatprep.subr.mxu0 0.0
    %v4645 = vand.u32 %v48, 4294901760
    %4646 = vmatpush1.msra.mxu0 %v4645
    %4647 = vmatprep.subr.mxu0 0.0
    %v4648 = vand.u32 %v49, 4294901760
    %4649 = vmatpush1.msra.mxu0 %v4648
    %4650 = vmatprep.subr.mxu0 0.0
    %4651 = vmatpush1.msra.mxu0 0.0
    %4652 = vmatprep.subr.mxu0 0.0
    %4653 = vmatpush1.msra.mxu0 0.0
    %4654 = vmatprep.subr.mxu0 0.0
    %4655 = vmatpush1.msra.mxu0 0.0
    %4656 = vmatprep.subr.mxu0 0.0
    %4657 = vmatpush1.msra.mxu0 0.0
    %4658 = vmatprep.subr.mxu0 0.0
    %4659 = vmatpush1.msra.mxu0 0.0
    %4660 = vmatprep.subr.mxu0 0.0
    %4661 = vmatpush1.msra.mxu0 0.0
    %4662 = vmatprep.subr.mxu0 0.0
    %4663 = vmatpush1.msra.mxu0 0.0
    %4664 = vmatprep.subr.mxu0 0.0
    %4665 = vmatpush1.msra.mxu0 0.0
    %4666 = vmatprep.subr.mxu0 0.0
    %4667 = vmatpush1.msra.mxu0 0.0
    %4668 = vmatprep.subr.mxu0 0.0
    %4669 = vmatpush1.msra.mxu0 0.0
    %4670 = vmatprep.subr.mxu0 0.0
    %4671 = vmatpush1.msra.mxu0 0.0
    %4672 = vmatprep.subr.mxu0 0.0
    %4673 = vmatpush1.msra.mxu0 0.0
    %4674 = vmatprep.subr.mxu0 0.0
    %4675 = vmatpush1.msra.mxu0 0.0
    %4676 = vmatprep.subr.mxu0 0.0
    %4677 = vmatpush1.msra.mxu0 0.0
    %4678 = vmatprep.subr.mxu0 0.0
    %4679 = vmatpush1.msra.mxu0 0.0
    %4680 = vmatprep.subr.mxu0 0.0
    %4681 = vmatpush1.msra.mxu0 0.0
    %4682 = vmatprep.subr.mxu0 0.0
    %4683 = vmatpush1.msra.mxu0 0.0
    %4684 = vmatprep.subr.mxu0 0.0
    %4685 = vmatpush1.msra.mxu0 0.0
    %4686 = vmatprep.subr.mxu0 0.0
    %4687 = vmatpush1.msra.mxu0 0.0
    %4688 = vmatprep.subr.mxu0 0.0
    %4689 = vmatpush1.msra.mxu0 0.0
    %4690 = vmatprep.subr.mxu0 0.0
    %4691 = vmatpush1.msra.mxu0 0.0
    %4692 = vmatprep.subr.mxu0 0.0
    %4693 = vmatpush1.msra.mxu0 0.0
    %4694 = vmatprep.subr.mxu0 0.0
    %4695 = vmatpush1.msra.mxu0 0.0
    %4696 = vmatprep.subr.mxu0 0.0
    %4697 = vmatpush1.msra.mxu0 0.0
    %4698 = vmatprep.subr.mxu0 0.0
    %4699 = vmatpush1.msra.mxu0 0.0
    %4700 = vmatprep.subr.mxu0 0.0
    %4701 = vmatpush1.msra.mxu0 0.0
    %4702 = vmatprep.subr.mxu0 0.0
    %4703 = vmatpush1.msra.mxu0 0.0
    %4704 = vmatprep.subr.mxu0 0.0
    %4705 = vmatpush1.msra.mxu0 0.0
    %4706 = vmatprep.mubr.f32.mxu0 0.0
    %v4707 = vand.u32 %v4360, 4294901760
    %v4708 = vsub.f32 %v4360, %v4707
    %v4709 = vand.u32 %v4708, 4294901760
    %4710 = vmatmul.mubr.f32.gmra.mrb[0].mxu0 %v4709
    %v4711 = vpop.f32.mrb[0].mxu0
    %v4712 = vadd.f32 %v4628, %v4711
    %v4713 = vpop.f32.mrb[0].mxu0
    %4714 = vmatprep.mubr.f32.mxu0 0.0
    %v4715 = vand.u32 %v4363, 4294901760
    %v4716 = vsub.f32 %v4363, %v4715
    %v4717 = vand.u32 %v4716, 4294901760
    %4718 = vmatmul.mubr.f32.gmra.mrb[0].mxu0 %v4717
    %v4719 = vpop.f32.mrb[0].mxu0
    %v4720 = vadd.f32 %v4635, %v4719
    %v4721 = vpop.f32.mrb[0].mxu0
    %4722 = vdwg.mxu0
    %4723 = vmatprep.subr.mxu0 0.0
    %v4724 = vand.u32 %v46, 4294901760
    %v4725 = vsub.f32 %v46, %v4724
    %v4726 = vand.u32 %v4725, 4294901760
    %4727 = vmatpush1.msra.mxu0 %v4726
    %4728 = vmatprep.subr.mxu0 0.0
    %v4729 = vand.u32 %v47, 4294901760
    %v4730 = vsub.f32 %v47, %v4729
    %v4731 = vand.u32 %v4730, 4294901760
    %4732 = vmatpush1.msra.mxu0 %v4731
    %4733 = vmatprep.subr.mxu0 0.0
    %v4734 = vand.u32 %v48, 4294901760
    %v4735 = vsub.f32 %v48, %v4734
    %v4736 = vand.u32 %v4735, 4294901760
    %4737 = vmatpush1.msra.mxu0 %v4736
    %4738 = vmatprep.subr.mxu0 0.0
    %v4739 = vand.u32 %v49, 4294901760
    %v4740 = vsub.f32 %v49, %v4739
    %v4741 = vand.u32 %v4740, 4294901760
    %4742 = vmatpush1.msra.mxu0 %v4741
    %4743 = vmatprep.subr.mxu0 0.0
    %4744 = vmatpush1.msra.mxu0 0.0
    %4745 = vmatprep.subr.mxu0 0.0
    %4746 = vmatpush1.msra.mxu0 0.0
    %4747 = vmatprep.subr.mxu0 0.0
    %4748 = vmatpush1.msra.mxu0 0.0
    %4749 = vmatprep.subr.mxu0 0.0
    %4750 = vmatpush1.msra.mxu0 0.0
    %4751 = vmatprep.subr.mxu0 0.0
    %4752 = vmatpush1.msra.mxu0 0.0
    %4753 = vmatprep.subr.mxu0 0.0
    %4754 = vmatpush1.msra.mxu0 0.0
    %4755 = vmatprep.subr.mxu0 0.0
    %4756 = vmatpush1.msra.mxu0 0.0
    %4757 = vmatprep.subr.mxu0 0.0
    %4758 = vmatpush1.msra.mxu0 0.0
    %4759 = vmatprep.subr.mxu0 0.0
    %4760 = vmatpush1.msra.mxu0 0.0
    %4761 = vmatprep.subr.mxu0 0.0
    %4762 = vmatpush1.msra.mxu0 0.0
    %4763 = vmatprep.subr.mxu0 0.0
    %4764 = vmatpush1.msra.mxu0 0.0
    %4765 = vmatprep.subr.mxu0 0.0
    %4766 = vmatpush1.msra.mxu0 0.0
    %4767 = vmatprep.subr.mxu0 0.0
    %4768 = vmatpush1.msra.mxu0 0.0
    %4769 = vmatprep.subr.mxu0 0.0
    %4770 = vmatpush1.msra.mxu0 0.0
    %4771 = vmatprep.subr.mxu0 0.0
    %4772 = vmatpush1.msra.mxu0 0.0
    %4773 = vmatprep.subr.mxu0 0.0
    %4774 = vmatpush1.msra.mxu0 0.0
    %4775 = vmatprep.subr.mxu0 0.0
    %4776 = vmatpush1.msra.mxu0 0.0
    %4777 = vmatprep.subr.mxu0 0.0
    %4778 = vmatpush1.msra.mxu0 0.0
    %4779 = vmatprep.subr.mxu0 0.0
    %4780 = vmatpush1.msra.mxu0 0.0
    %4781 = vmatprep.subr.mxu0 0.0
    %4782 = vmatpush1.msra.mxu0 0.0
    %4783 = vmatprep.subr.mxu0 0.0
    %4784 = vmatpush1.msra.mxu0 0.0
    %4785 = vmatprep.subr.mxu0 0.0
    %4786 = vmatpush1.msra.mxu0 0.0
    %4787 = vmatprep.subr.mxu0 0.0
    %4788 = vmatpush1.msra.mxu0 0.0
    %4789 = vmatprep.subr.mxu0 0.0
    %4790 = vmatpush1.msra.mxu0 0.0
    %4791 = vmatprep.subr.mxu0 0.0
    %4792 = vmatpush1.msra.mxu0 0.0
    %4793 = vmatprep.subr.mxu0 0.0
    %4794 = vmatpush1.msra.mxu0 0.0
    %4795 = vmatprep.subr.mxu0 0.0
    %4796 = vmatpush1.msra.mxu0 0.0
    %4797 = vmatprep.subr.mxu0 0.0
    %4798 = vmatpush1.msra.mxu0 0.0
    %4799 = vmatprep.mubr.f32.mxu0 0.0
    %v4800 = vand.u32 %v4360, 4294901760
    %4801 = vmatmul.mubr.f32.gmra.mrb[0].mxu0 %v4800
    %v4802 = vpop.f32.mrb[0].mxu0
    %v4803 = vadd.f32 %v4712, %v4802
    %v4804 = vpop.f32.mrb[0].mxu0
    %4805 = vmatprep.mubr.f32.mxu0 0.0
    %v4806 = vand.u32 %v4363, 4294901760
    %4807 = vmatmul.mubr.f32.gmra.mrb[0].mxu0 %v4806
    %v4808 = vpop.f32.mrb[0].mxu0
    %v4809 = vadd.f32 %v4720, %v4808
    %v4810 = vpop.f32.mrb[0].mxu0
    %4811 = vdwg.mxu0
    %4812 = vmatprep.subr.mxu0 0.0
    %v4813 = vand.u32 %v46, 4294901760
    %4814 = vmatpush1.msra.mxu0 %v4813
    %4815 = vmatprep.subr.mxu0 0.0
    %v4816 = vand.u32 %v47, 4294901760
    %4817 = vmatpush1.msra.mxu0 %v4816
    %4818 = vmatprep.subr.mxu0 0.0
    %v4819 = vand.u32 %v48, 4294901760
    %4820 = vmatpush1.msra.mxu0 %v4819
    %4821 = vmatprep.subr.mxu0 0.0
    %v4822 = vand.u32 %v49, 4294901760
    %4823 = vmatpush1.msra.mxu0 %v4822
    %4824 = vmatprep.subr.mxu0 0.0
    %4825 = vmatpush1.msra.mxu0 0.0
    %4826 = vmatprep.subr.mxu0 0.0
    %4827 = vmatpush1.msra.mxu0 0.0
    %4828 = vmatprep.subr.mxu0 0.0
    %4829 = vmatpush1.msra.mxu0 0.0
    %4830 = vmatprep.subr.mxu0 0.0
    %4831 = vmatpush1.msra.mxu0 0.0
    %4832 = vmatprep.subr.mxu0 0.0
    %4833 = vmatpush1.msra.mxu0 0.0
    %4834 = vmatprep.subr.mxu0 0.0
    %4835 = vmatpush1.msra.mxu0 0.0
    %4836 = vmatprep.subr.mxu0 0.0
    %4837 = vmatpush1.msra.mxu0 0.0
    %4838 = vmatprep.subr.mxu0 0.0
    %4839 = vmatpush1.msra.mxu0 0.0
    %4840 = vmatprep.subr.mxu0 0.0
    %4841 = vmatpush1.msra.mxu0 0.0
    %4842 = vmatprep.subr.mxu0 0.0
    %4843 = vmatpush1.msra.mxu0 0.0
    %4844 = vmatprep.subr.mxu0 0.0
    %4845 = vmatpush1.msra.mxu0 0.0
    %4846 = vmatprep.subr.mxu0 0.0
    %4847 = vmatpush1.msra.mxu0 0.0
    %4848 = vmatprep.subr.mxu0 0.0
    %4849 = vmatpush1.msra.mxu0 0.0
    %4850 = vmatprep.subr.mxu0 0.0
    %4851 = vmatpush1.msra.mxu0 0.0
    %4852 = vmatprep.subr.mxu0 0.0
    %4853 = vmatpush1.msra.mxu0 0.0
    %4854 = vmatprep.subr.mxu0 0.0
    %4855 = vmatpush1.msra.mxu0 0.0
    %4856 = vmatprep.subr.mxu0 0.0
    %4857 = vmatpush1.msra.mxu0 0.0
    %4858 = vmatprep.subr.mxu0 0.0
    %4859 = vmatpush1.msra.mxu0 0.0
    %4860 = vmatprep.subr.mxu0 0.0
    %4861 = vmatpush1.msra.mxu0 0.0
    %4862 = vmatprep.subr.mxu0 0.0
    %4863 = vmatpush1.msra.mxu0 0.0
    %4864 = vmatprep.subr.mxu0 0.0
    %4865 = vmatpush1.msra.mxu0 0.0
    %4866 = vmatprep.subr.mxu0 0.0
    %4867 = vmatpush1.msra.mxu0 0.0
    %4868 = vmatprep.subr.mxu0 0.0
    %4869 = vmatpush1.msra.mxu0 0.0
    %4870 = vmatprep.subr.mxu0 0.0
    %4871 = vmatpush1.msra.mxu0 0.0
    %4872 = vmatprep.subr.mxu0 0.0
    %4873 = vmatpush1.msra.mxu0 0.0
    %4874 = vmatprep.subr.mxu0 0.0
    %4875 = vmatpush1.msra.mxu0 0.0
    %4876 = vmatprep.subr.mxu0 0.0
    %4877 = vmatpush1.msra.mxu0 0.0
    %4878 = vmatprep.subr.mxu0 0.0
    %4879 = vmatpush1.msra.mxu0 0.0
    %4880 = vmatprep.mubr.f32.mxu0 0.0
    %v4881 = vand.u32 %v4360, 4294901760
    %4882 = vmatmul.mubr.f32.gmra.mrb[0].mxu0 %v4881
    %v4883 = vpop.f32.mrb[0].mxu0
    %v4884 = vadd.f32 %v4803, %v4883
    %v4885 = vpop.f32.mrb[0].mxu0
    %4886 = vmatprep.mubr.f32.mxu0 0.0
    %v4887 = vand.u32 %v4363, 4294901760
    %4888 = vmatmul.mubr.f32.gmra.mrb[0].mxu0 %v4887
    %v4889 = vpop.f32.mrb[0].mxu0
    %v4890 = vadd.f32 %v4809, %v4889
    %v4891 = vpop.f32.mrb[0].mxu0
    %4892 = vdwg.mxu0
    %v4893 = vmul.f32 %v4884, 0.5
    %v4894 = vmul.f32 %v4890, 0.5
    %v4895 = vmul.f32 %v4884, 0.70710677
    %v4896 = vmul.f32 %v4890, 0.70710677
    %v4897 = verf.f32.pop %v4895
    %v4898 = verf.f32.pop %v4896
    %v4899 = vadd.f32 %v4897, 1.0
    %v4900 = vadd.f32 %v4898, 1.0
    %v4901 = vmul.f32 %v4893, %v4899
    %v4902 = vmul.f32 %v4894, %v4900
    %v4903 = vlaneseq
    %v4904 = vshrl.u32 %v4903, 7
    %v4905 = vsub.s32 5, %v4904
    %v4906 = vrot.slane %v54, %v4905
    %4907 = vmatprep.subr.mxu0 0.0
    %v4908 = vand.u32 %v50, 4294901760
    %4909 = vmatpush1.xpose.msra.mxu0 %v4908
    %4910 = vmatprep.subr.mxu0 0.0
    %v4911 = vand.u32 %v51, 4294901760
    %4912 = vmatpush1.xpose.msra.mxu0 %v4911
    %4913 = vmatprep.subr.mxu0 0.0
    %v4914 = vand.u32 %v52, 4294901760
    %4915 = vmatpush1.xpose.msra.mxu0 %v4914
    %4916 = vmatprep.subr.mxu0 0.0
    %v4917 = vand.u32 %v53, 4294901760
    %4918 = vmatpush1.xpose.msra.mxu0 %v4917
    %4919 = vmatprep.subr.mxu0 0.0
    %4920 = vmatpush1.xpose.msra.mxu0 0.0
    %4921 = vmatprep.subr.mxu0 0.0
    %4922 = vmatpush1.xpose.msra.mxu0 0.0
    %4923 = vmatprep.subr.mxu0 0.0
    %4924 = vmatpush1.xpose.msra.mxu0 0.0
    %4925 = vmatprep.subr.mxu0 0.0
    %4926 = vmatpush1.xpose.msra.mxu0 0.0
    %4927 = vmatprep.subr.mxu0 0.0
    %4928 = vmatpush1.xpose.msra.mxu0 0.0
    %4929 = vmatprep.subr.mxu0 0.0
    %4930 = vmatpush1.xpose.msra.mxu0 0.0
    %4931 = vmatprep.subr.mxu0 0.0
    %4932 = vmatpush1.xpose.msra.mxu0 0.0
    %4933 = vmatprep.subr.mxu0 0.0
    %4934 = vmatpush1.xpose.msra.mxu0 0.0
    %4935 = vmatprep.subr.mxu0 0.0
    %4936 = vmatpush1.xpose.msra.mxu0 0.0
    %4937 = vmatprep.subr.mxu0 0.0
    %4938 = vmatpush1.xpose.msra.mxu0 0.0
    %4939 = vmatprep.subr.mxu0 0.0
    %4940 = vmatpush1.xpose.msra.mxu0 0.0
    %4941 = vmatprep.subr.mxu0 0.0
    %4942 = vmatpush1.xpose.msra.mxu0 0.0
    %4943 = vmatprep.subr.mxu0 0.0
    %4944 = vmatpush1.xpose.msra.mxu0 0.0
    %4945 = vmatprep.subr.mxu0 0.0
    %4946 = vmatpush1.xpose.msra.mxu0 0.0
    %4947 = vmatprep.subr.mxu0 0.0
    %4948 = vmatpush1.xpose.msra.mxu0 0.0
    %4949 = vmatprep.subr.mxu0 0.0
    %4950 = vmatpush1.xpose.msra.mxu0 0.0
    %4951 = vmatprep.subr.mxu0 0.0
    %4952 = vmatpush1.xpose.msra.mxu0 0.0
    %4953 = vmatprep.subr.mxu0 0.0
    %4954 = vmatpush1.xpose.msra.mxu0 0.0
    %4955 = vmatprep.subr.mxu0 0.0
    %4956 = vmatpush1.xpose.msra.mxu0 0.0
    %4957 = vmatprep.subr.mxu0 0.0
    %4958 = vmatpush1.xpose.msra.mxu0 0.0
    %4959 = vmatprep.subr.mxu0 0.0
    %4960 = vmatpush1.xpose.msra.mxu0 0.0
    %4961 = vmatprep.subr.mxu0 0.0
    %4962 = vmatpush1.xpose.msra.mxu0 0.0
    %4963 = vmatprep.subr.mxu0 0.0
    %4964 = vmatpush1.xpose.msra.mxu0 0.0
    %4965 = vmatprep.subr.mxu0 0.0
    %4966 = vmatpush1.xpose.msra.mxu0 0.0
    %4967 = vmatprep.subr.mxu0 0.0
    %4968 = vmatpush1.xpose.msra.mxu0 0.0
    %4969 = vmatprep.subr.mxu0 0.0
    %4970 = vmatpush1.xpose.msra.mxu0 0.0
    %4971 = vmatprep.subr.mxu0 0.0
    %4972 = vmatpush1.xpose.msra.mxu0 0.0
    %4973 = vmatprep.subr.mxu0 0.0
    %4974 = vmatpush1.xpose.msra.mxu0 0.0
    %4975 = vmatprep.mubr.f32.mxu0 0.0
    %v4976 = vand.u32 %v4901, 4294901760
    %v4977 = vsub.f32 %v4901, %v4976
    %v4978 = vand.u32 %v4977, 4294901760
    %v4979 = vsub.f32 %v4977, %v4978
    %v4980 = vand.u32 %v4979, 4294901760
    %4981 = vmatmul.mubr.f32.gmra.mrb[0].mxu0 %v4980
    %v4982 = vpop.f32.mrb[0].mxu0
    %v4983 = vadd.f32 %v4906, %v4982
    %v4984 = vpop.f32.mrb[0].mxu0
    %4985 = vmatprep.mubr.f32.mxu0 0.0
    %v4986 = vand.u32 %v4902, 4294901760
    %v4987 = vsub.f32 %v4902, %v4986
    %v4988 = vand.u32 %v4987, 4294901760
    %v4989 = vsub.f32 %v4987, %v4988
    %v4990 = vand.u32 %v4989, 4294901760
    %4991 = vmatmul.mubr.f32.gmra.mrb[0].mxu0 %v4990
    %v4992 = vpop.f32.mrb[0].mxu0
    %v4993 = vadd.f32 %v4906, %v4992
    %v4994 = vpop.f32.mrb[0].mxu0
    %4995 = vdwg.mxu0
    %4996 = vmatprep.subr.mxu0 0.0
    %v4997 = vand.u32 %v50, 4294901760
    %v4998 = vsub.f32 %v50, %v4997
    %v4999 = vand.u32 %v4998, 4294901760
    %v5000 = vsub.f32 %v4998, %v4999
    %v5001 = vand.u32 %v5000, 4294901760
    %5002 = vmatpush1.xpose.msra.mxu0 %v5001
    %5003 = vmatprep.subr.mxu0 0.0
    %v5004 = vand.u32 %v51, 4294901760
    %v5005 = vsub.f32 %v51, %v5004
    %v5006 = vand.u32 %v5005, 4294901760
    %v5007 = vsub.f32 %v5005, %v5006
    %v5008 = vand.u32 %v5007, 4294901760
    %5009 = vmatpush1.xpose.msra.mxu0 %v5008
    %5010 = vmatprep.subr.mxu0 0.0
    %v5011 = vand.u32 %v52, 4294901760
    %v5012 = vsub.f32 %v52, %v5011
    %v5013 = vand.u32 %v5012, 4294901760
    %v5014 = vsub.f32 %v5012, %v5013
    %v5015 = vand.u32 %v5014, 4294901760
    %5016 = vmatpush1.xpose.msra.mxu0 %v5015
    %5017 = vmatprep.subr.mxu0 0.0
    %v5018 = vand.u32 %v53, 4294901760
    %v5019 = vsub.f32 %v53, %v5018
    %v5020 = vand.u32 %v5019, 4294901760
    %v5021 = vsub.f32 %v5019, %v5020
    %v5022 = vand.u32 %v5021, 4294901760
    %5023 = vmatpush1.xpose.msra.mxu0 %v5022
    %5024 = vmatprep.subr.mxu0 0.0
    %5025 = vmatpush1.xpose.msra.mxu0 0.0
    %5026 = vmatprep.subr.mxu0 0.0
    %5027 = vmatpush1.xpose.msra.mxu0 0.0
    %5028 = vmatprep.subr.mxu0 0.0
    %5029 = vmatpush1.xpose.msra.mxu0 0.0
    %5030 = vmatprep.subr.mxu0 0.0
    %5031 = vmatpush1.xpose.msra.mxu0 0.0
    %5032 = vmatprep.subr.mxu0 0.0
    %5033 = vmatpush1.xpose.msra.mxu0 0.0
    %5034 = vmatprep.subr.mxu0 0.0
    %5035 = vmatpush1.xpose.msra.mxu0 0.0
    %5036 = vmatprep.subr.mxu0 0.0
    %5037 = vmatpush1.xpose.msra.mxu0 0.0
    %5038 = vmatprep.subr.mxu0 0.0
    %5039 = vmatpush1.xpose.msra.mxu0 0.0
    %5040 = vmatprep.subr.mxu0 0.0
    %5041 = vmatpush1.xpose.msra.mxu0 0.0
    %5042 = vmatprep.subr.mxu0 0.0
    %5043 = vmatpush1.xpose.msra.mxu0 0.0
    %5044 = vmatprep.subr.mxu0 0.0
    %5045 = vmatpush1.xpose.msra.mxu0 0.0
    %5046 = vmatprep.subr.mxu0 0.0
    %5047 = vmatpush1.xpose.msra.mxu0 0.0
    %5048 = vmatprep.subr.mxu0 0.0
    %5049 = vmatpush1.xpose.msra.mxu0 0.0
    %5050 = vmatprep.subr.mxu0 0.0
    %5051 = vmatpush1.xpose.msra.mxu0 0.0
    %5052 = vmatprep.subr.mxu0 0.0
    %5053 = vmatpush1.xpose.msra.mxu0 0.0
    %5054 = vmatprep.subr.mxu0 0.0
    %5055 = vmatpush1.xpose.msra.mxu0 0.0
    %5056 = vmatprep.subr.mxu0 0.0
    %5057 = vmatpush1.xpose.msra.mxu0 0.0
    %5058 = vmatprep.subr.mxu0 0.0
    %5059 = vmatpush1.xpose.msra.mxu0 0.0
    %5060 = vmatprep.subr.mxu0 0.0
    %5061 = vmatpush1.xpose.msra.mxu0 0.0
    %5062 = vmatprep.subr.mxu0 0.0
    %5063 = vmatpush1.xpose.msra.mxu0 0.0
    %5064 = vmatprep.subr.mxu0 0.0
    %5065 = vmatpush1.xpose.msra.mxu0 0.0
    %5066 = vmatprep.subr.mxu0 0.0
    %5067 = vmatpush1.xpose.msra.mxu0 0.0
    %5068 = vmatprep.subr.mxu0 0.0
    %5069 = vmatpush1.xpose.msra.mxu0 0.0
    %5070 = vmatprep.subr.mxu0 0.0
    %5071 = vmatpush1.xpose.msra.mxu0 0.0
    %5072 = vmatprep.subr.mxu0 0.0
    %5073 = vmatpush1.xpose.msra.mxu0 0.0
    %5074 = vmatprep.subr.mxu0 0.0
    %5075 = vmatpush1.xpose.msra.mxu0 0.0
    %5076 = vmatprep.subr.mxu0 0.0
    %5077 = vmatpush1.xpose.msra.mxu0 0.0
    %5078 = vmatprep.subr.mxu0 0.0
    %5079 = vmatpush1.xpose.msra.mxu0 0.0
    %5080 = vmatprep.mubr.f32.mxu0 0.0
    %v5081 = vand.u32 %v4901, 4294901760
    %5082 = vmatmul.mubr.f32.gmra.mrb[0].mxu0 %v5081
    %v5083 = vpop.f32.mrb[0].mxu0
    %v5084 = vadd.f32 %v4983, %v5083
    %v5085 = vpop.f32.mrb[0].mxu0
    %5086 = vmatprep.mubr.f32.mxu0 0.0
    %v5087 = vand.u32 %v4902, 4294901760
    %5088 = vmatmul.mubr.f32.gmra.mrb[0].mxu0 %v5087
    %v5089 = vpop.f32.mrb[0].mxu0
    %v5090 = vadd.f32 %v4993, %v5089
    %v5091 = vpop.f32.mrb[0].mxu0
    %5092 = vdwg.mxu0
    %5093 = vmatprep.subr.mxu0 0.0
    %v5094 = vand.u32 %v50, 4294901760
    %v5095 = vsub.f32 %v50, %v5094
    %5096 = vmatpush1.xpose.msra.mxu0 %v5095
    %5097 = vmatprep.subr.mxu0 0.0
    %v5098 = vand.u32 %v51, 4294901760
    %v5099 = vsub.f32 %v51, %v5098
    %5100 = vmatpush1.xpose.msra.mxu0 %v5099
    %5101 = vmatprep.subr.mxu0 0.0
    %v5102 = vand.u32 %v52, 4294901760
    %v5103 = vsub.f32 %v52, %v5102
    %5104 = vmatpush1.xpose.msra.mxu0 %v5103
    %5105 = vmatprep.subr.mxu0 0.0
    %v5106 = vand.u32 %v53, 4294901760
    %v5107 = vsub.f32 %v53, %v5106
    %5108 = vmatpush1.xpose.msra.mxu0 %v5107
    %5109 = vmatprep.subr.mxu0 0.0
    %5110 = vmatpush1.xpose.msra.mxu0 0.0
    %5111 = vmatprep.subr.mxu0 0.0
    %5112 = vmatpush1.xpose.msra.mxu0 0.0
    %5113 = vmatprep.subr.mxu0 0.0
    %5114 = vmatpush1.xpose.msra.mxu0 0.0
    %5115 = vmatprep.subr.mxu0 0.0
    %5116 = vmatpush1.xpose.msra.mxu0 0.0
    %5117 = vmatprep.subr.mxu0 0.0
    %5118 = vmatpush1.xpose.msra.mxu0 0.0
    %5119 = vmatprep.subr.mxu0 0.0
    %5120 = vmatpush1.xpose.msra.mxu0 0.0
    %5121 = vmatprep.subr.mxu0 0.0
    %5122 = vmatpush1.xpose.msra.mxu0 0.0
    %5123 = vmatprep.subr.mxu0 0.0
    %5124 = vmatpush1.xpose.msra.mxu0 0.0
    %5125 = vmatprep.subr.mxu0 0.0
    %5126 = vmatpush1.xpose.msra.mxu0 0.0
    %5127 = vmatprep.subr.mxu0 0.0
    %5128 = vmatpush1.xpose.msra.mxu0 0.0
    %5129 = vmatprep.subr.mxu0 0.0
    %5130 = vmatpush1.xpose.msra.mxu0 0.0
    %5131 = vmatprep.subr.mxu0 0.0
    %5132 = vmatpush1.xpose.msra.mxu0 0.0
    %5133 = vmatprep.subr.mxu0 0.0
    %5134 = vmatpush1.xpose.msra.mxu0 0.0
    %5135 = vmatprep.subr.mxu0 0.0
    %5136 = vmatpush1.xpose.msra.mxu0 0.0
    %5137 = vmatprep.subr.mxu0 0.0
    %5138 = vmatpush1.xpose.msra.mxu0 0.0
    %5139 = vmatprep.subr.mxu0 0.0
    %5140 = vmatpush1.xpose.msra.mxu0 0.0
    %5141 = vmatprep.subr.mxu0 0.0
    %5142 = vmatpush1.xpose.msra.mxu0 0.0
    %5143 = vmatprep.subr.mxu0 0.0
    %5144 = vmatpush1.xpose.msra.mxu0 0.0
    %5145 = vmatprep.subr.mxu0 0.0
    %5146 = vmatpush1.xpose.msra.mxu0 0.0
    %5147 = vmatprep.subr.mxu0 0.0
    %5148 = vmatpush1.xpose.msra.mxu0 0.0
    %5149 = vmatprep.subr.mxu0 0.0
    %5150 = vmatpush1.xpose.msra.mxu0 0.0
    %5151 = vmatprep.subr.mxu0 0.0
    %5152 = vmatpush1.xpose.msra.mxu0 0.0
    %5153 = vmatprep.subr.mxu0 0.0
    %5154 = vmatpush1.xpose.msra.mxu0 0.0
    %5155 = vmatprep.subr.mxu0 0.0
    %5156 = vmatpush1.xpose.msra.mxu0 0.0
    %5157 = vmatprep.subr.mxu0 0.0
    %5158 = vmatpush1.xpose.msra.mxu0 0.0
    %5159 = vmatprep.subr.mxu0 0.0
    %5160 = vmatpush1.xpose.msra.mxu0 0.0
    %5161 = vmatprep.subr.mxu0 0.0
    %5162 = vmatpush1.xpose.msra.mxu0 0.0
    %5163 = vmatprep.subr.mxu0 0.0
    %5164 = vmatpush1.xpose.msra.mxu0 0.0
    %5165 = vmatprep.mubr.f32.mxu0 0.0
    %v5166 = vand.u32 %v4901, 4294901760
    %v5167 = vsub.f32 %v4901, %v5166
    %5168 = vmatmul.mubr.f32.gmra.mrb[0].mxu0 %v5167
    %v5169 = vpop.f32.mrb[0].mxu0
    %v5170 = vadd.f32 %v5084, %v5169
    %v5171 = vpop.f32.mrb[0].mxu0
    %5172 = vmatprep.mubr.f32.mxu0 0.0
    %v5173 = vand.u32 %v4902, 4294901760
    %v5174 = vsub.f32 %v4902, %v5173
    %5175 = vmatmul.mubr.f32.gmra.mrb[0].mxu0 %v5174
    %v5176 = vpop.f32.mrb[0].mxu0
    %v5177 = vadd.f32 %v5090, %v5176
    %v5178 = vpop.f32.mrb[0].mxu0
    %5179 = vdwg.mxu0
    %5180 = vmatprep.subr.mxu0 0.0
    %v5181 = vand.u32 %v50, 4294901760
    %5182 = vmatpush1.xpose.msra.mxu0 %v5181
    %5183 = vmatprep.subr.mxu0 0.0
    %v5184 = vand.u32 %v51, 4294901760
    %5185 = vmatpush1.xpose.msra.mxu0 %v5184
    %5186 = vmatprep.subr.mxu0 0.0
    %v5187 = vand.u32 %v52, 4294901760
    %5188 = vmatpush1.xpose.msra.mxu0 %v5187
    %5189 = vmatprep.subr.mxu0 0.0
    %v5190 = vand.u32 %v53, 4294901760
    %5191 = vmatpush1.xpose.msra.mxu0 %v5190
    %5192 = vmatprep.subr.mxu0 0.0
    %5193 = vmatpush1.xpose.msra.mxu0 0.0
    %5194 = vmatprep.subr.mxu0 0.0
    %5195 = vmatpush1.xpose.msra.mxu0 0.0
    %5196 = vmatprep.subr.mxu0 0.0
    %5197 = vmatpush1.xpose.msra.mxu0 0.0
    %5198 = vmatprep.subr.mxu0 0.0
    %5199 = vmatpush1.xpose.msra.mxu0 0.0
    %5200 = vmatprep.subr.mxu0 0.0
    %5201 = vmatpush1.xpose.msra.mxu0 0.0
    %5202 = vmatprep.subr.mxu0 0.0
    %5203 = vmatpush1.xpose.msra.mxu0 0.0
    %5204 = vmatprep.subr.mxu0 0.0
    %5205 = vmatpush1.xpose.msra.mxu0 0.0
    %5206 = vmatprep.subr.mxu0 0.0
    %5207 = vmatpush1.xpose.msra.mxu0 0.0
    %5208 = vmatprep.subr.mxu0 0.0
    %5209 = vmatpush1.xpose.msra.mxu0 0.0
    %5210 = vmatprep.subr.mxu0 0.0
    %5211 = vmatpush1.xpose.msra.mxu0 0.0
    %5212 = vmatprep.subr.mxu0 0.0
    %5213 = vmatpush1.xpose.msra.mxu0 0.0
    %5214 = vmatprep.subr.mxu0 0.0
    %5215 = vmatpush1.xpose.msra.mxu0 0.0
    %5216 = vmatprep.subr.mxu0 0.0
    %5217 = vmatpush1.xpose.msra.mxu0 0.0
    %5218 = vmatprep.subr.mxu0 0.0
    %5219 = vmatpush1.xpose.msra.mxu0 0.0
    %5220 = vmatprep.subr.mxu0 0.0
    %5221 = vmatpush1.xpose.msra.mxu0 0.0
    %5222 = vmatprep.subr.mxu0 0.0
    %5223 = vmatpush1.xpose.msra.mxu0 0.0
    %5224 = vmatprep.subr.mxu0 0.0
    %5225 = vmatpush1.xpose.msra.mxu0 0.0
    %5226 = vmatprep.subr.mxu0 0.0
    %5227 = vmatpush1.xpose.msra.mxu0 0.0
    %5228 = vmatprep.subr.mxu0 0.0
    %5229 = vmatpush1.xpose.msra.mxu0 0.0
    %5230 = vmatprep.subr.mxu0 0.0
    %5231 = vmatpush1.xpose.msra.mxu0 0.0
    %5232 = vmatprep.subr.mxu0 0.0
    %5233 = vmatpush1.xpose.msra.mxu0 0.0
    %5234 = vmatprep.subr.mxu0 0.0
    %5235 = vmatpush1.xpose.msra.mxu0 0.0
    %5236 = vmatprep.subr.mxu0 0.0
    %5237 = vmatpush1.xpose.msra.mxu0 0.0
    %5238 = vmatprep.subr.mxu0 0.0
    %5239 = vmatpush1.xpose.msra.mxu0 0.0
    %5240 = vmatprep.subr.mxu0 0.0
    %5241 = vmatpush1.xpose.msra.mxu0 0.0
    %5242 = vmatprep.subr.mxu0 0.0
    %5243 = vmatpush1.xpose.msra.mxu0 0.0
    %5244 = vmatprep.subr.mxu0 0.0
    %5245 = vmatpush1.xpose.msra.mxu0 0.0
    %5246 = vmatprep.subr.mxu0 0.0
    %5247 = vmatpush1.xpose.msra.mxu0 0.0
    %5248 = vmatprep.mubr.f32.mxu0 0.0
    %v5249 = vand.u32 %v4901, 4294901760
    %v5250 = vsub.f32 %v4901, %v5249
    %v5251 = vand.u32 %v5250, 4294901760
    %5252 = vmatmul.mubr.f32.gmra.mrb[0].mxu0 %v5251
    %v5253 = vpop.f32.mrb[0].mxu0
    %v5254 = vadd.f32 %v5170, %v5253
    %v5255 = vpop.f32.mrb[0].mxu0
    %5256 = vmatprep.mubr.f32.mxu0 0.0
    %v5257 = vand.u32 %v4902, 4294901760
    %v5258 = vsub.f32 %v4902, %v5257
    %v5259 = vand.u32 %v5258, 4294901760
    %5260 = vmatmul.mubr.f32.gmra.mrb[0].mxu0 %v5259
    %v5261 = vpop.f32.mrb[0].mxu0
    %v5262 = vadd.f32 %v5177, %v5261
    %v5263 = vpop.f32.mrb[0].mxu0
    %5264 = vdwg.mxu0
    %5265 = vmatprep.subr.mxu0 0.0
    %v5266 = vand.u32 %v50, 4294901760
    %v5267 = vsub.f32 %v50, %v5266
    %v5268 = vand.u32 %v5267, 4294901760
    %5269 = vmatpush1.xpose.msra.mxu0 %v5268
    %5270 = vmatprep.subr.mxu0 0.0
    %v5271 = vand.u32 %v51, 4294901760
    %v5272 = vsub.f32 %v51, %v5271
    %v5273 = vand.u32 %v5272, 4294901760
    %5274 = vmatpush1.xpose.msra.mxu0 %v5273
    %5275 = vmatprep.subr.mxu0 0.0
    %v5276 = vand.u32 %v52, 4294901760
    %v5277 = vsub.f32 %v52, %v5276
    %v5278 = vand.u32 %v5277, 4294901760
    %5279 = vmatpush1.xpose.msra.mxu0 %v5278
    %5280 = vmatprep.subr.mxu0 0.0
    %v5281 = vand.u32 %v53, 4294901760
    %v5282 = vsub.f32 %v53, %v5281
    %v5283 = vand.u32 %v5282, 4294901760
    %5284 = vmatpush1.xpose.msra.mxu0 %v5283
    %5285 = vmatprep.subr.mxu0 0.0
    %5286 = vmatpush1.xpose.msra.mxu0 0.0
    %5287 = vmatprep.subr.mxu0 0.0
    %5288 = vmatpush1.xpose.msra.mxu0 0.0
    %5289 = vmatprep.subr.mxu0 0.0
    %5290 = vmatpush1.xpose.msra.mxu0 0.0
    %5291 = vmatprep.subr.mxu0 0.0
    %5292 = vmatpush1.xpose.msra.mxu0 0.0
    %5293 = vmatprep.subr.mxu0 0.0
    %5294 = vmatpush1.xpose.msra.mxu0 0.0
    %5295 = vmatprep.subr.mxu0 0.0
    %5296 = vmatpush1.xpose.msra.mxu0 0.0
    %5297 = vmatprep.subr.mxu0 0.0
    %5298 = vmatpush1.xpose.msra.mxu0 0.0
    %5299 = vmatprep.subr.mxu0 0.0
    %5300 = vmatpush1.xpose.msra.mxu0 0.0
    %5301 = vmatprep.subr.mxu0 0.0
    %5302 = vmatpush1.xpose.msra.mxu0 0.0
    %5303 = vmatprep.subr.mxu0 0.0
    %5304 = vmatpush1.xpose.msra.mxu0 0.0
    %5305 = vmatprep.subr.mxu0 0.0
    %5306 = vmatpush1.xpose.msra.mxu0 0.0
    %5307 = vmatprep.subr.mxu0 0.0
    %5308 = vmatpush1.xpose.msra.mxu0 0.0
    %5309 = vmatprep.subr.mxu0 0.0
    %5310 = vmatpush1.xpose.msra.mxu0 0.0
    %5311 = vmatprep.subr.mxu0 0.0
    %5312 = vmatpush1.xpose.msra.mxu0 0.0
    %5313 = vmatprep.subr.mxu0 0.0
    %5314 = vmatpush1.xpose.msra.mxu0 0.0
    %5315 = vmatprep.subr.mxu0 0.0
    %5316 = vmatpush1.xpose.msra.mxu0 0.0
    %5317 = vmatprep.subr.mxu0 0.0
    %5318 = vmatpush1.xpose.msra.mxu0 0.0
    %5319 = vmatprep.subr.mxu0 0.0
    %5320 = vmatpush1.xpose.msra.mxu0 0.0
    %5321 = vmatprep.subr.mxu0 0.0
    %5322 = vmatpush1.xpose.msra.mxu0 0.0
    %5323 = vmatprep.subr.mxu0 0.0
    %5324 = vmatpush1.xpose.msra.mxu0 0.0
    %5325 = vmatprep.subr.mxu0 0.0
    %5326 = vmatpush1.xpose.msra.mxu0 0.0
    %5327 = vmatprep.subr.mxu0 0.0
    %5328 = vmatpush1.xpose.msra.mxu0 0.0
    %5329 = vmatprep.subr.mxu0 0.0
    %5330 = vmatpush1.xpose.msra.mxu0 0.0
    %5331 = vmatprep.subr.mxu0 0.0
    %5332 = vmatpush1.xpose.msra.mxu0 0.0
    %5333 = vmatprep.subr.mxu0 0.0
    %5334 = vmatpush1.xpose.msra.mxu0 0.0
    %5335 = vmatprep.subr.mxu0 0.0
    %5336 = vmatpush1.xpose.msra.mxu0 0.0
    %5337 = vmatprep.subr.mxu0 0.0
    %5338 = vmatpush1.xpose.msra.mxu0 0.0
    %5339 = vmatprep.subr.mxu0 0.0
    %5340 = vmatpush1.xpose.msra.mxu0 0.0
    %5341 = vmatprep.mubr.f32.mxu0 0.0
    %v5342 = vand.u32 %v4901, 4294901760
    %5343 = vmatmul.mubr.f32.gmra.mrb[0].mxu0 %v5342
    %v5344 = vpop.f32.mrb[0].mxu0
    %v5345 = vadd.f32 %v5254, %v5344
    %v5346 = vpop.f32.mrb[0].mxu0
    %5347 = vmatprep.mubr.f32.mxu0 0.0
    %v5348 = vand.u32 %v4902, 4294901760
    %5349 = vmatmul.mubr.f32.gmra.mrb[0].mxu0 %v5348
    %v5350 = vpop.f32.mrb[0].mxu0
    %v5351 = vadd.f32 %v5262, %v5350
    %v5352 = vpop.f32.mrb[0].mxu0
    %5353 = vdwg.mxu0
    %5354 = vmatprep.subr.mxu0 0.0
    %v5355 = vand.u32 %v50, 4294901760
    %5356 = vmatpush1.xpose.msra.mxu0 %v5355
    %5357 = vmatprep.subr.mxu0 0.0
    %v5358 = vand.u32 %v51, 4294901760
    %5359 = vmatpush1.xpose.msra.mxu0 %v5358
    %5360 = vmatprep.subr.mxu0 0.0
    %v5361 = vand.u32 %v52, 4294901760
    %5362 = vmatpush1.xpose.msra.mxu0 %v5361
    %5363 = vmatprep.subr.mxu0 0.0
    %v5364 = vand.u32 %v53, 4294901760
    %5365 = vmatpush1.xpose.msra.mxu0 %v5364
    %5366 = vmatprep.subr.mxu0 0.0
    %5367 = vmatpush1.xpose.msra.mxu0 0.0
    %5368 = vmatprep.subr.mxu0 0.0
    %5369 = vmatpush1.xpose.msra.mxu0 0.0
    %5370 = vmatprep.subr.mxu0 0.0
    %5371 = vmatpush1.xpose.msra.mxu0 0.0
    %5372 = vmatprep.subr.mxu0 0.0
    %5373 = vmatpush1.xpose.msra.mxu0 0.0
    %5374 = vmatprep.subr.mxu0 0.0
    %5375 = vmatpush1.xpose.msra.mxu0 0.0
    %5376 = vmatprep.subr.mxu0 0.0
    %5377 = vmatpush1.xpose.msra.mxu0 0.0
    %5378 = vmatprep.subr.mxu0 0.0
    %5379 = vmatpush1.xpose.msra.mxu0 0.0
    %5380 = vmatprep.subr.mxu0 0.0
    %5381 = vmatpush1.xpose.msra.mxu0 0.0
    %5382 = vmatprep.subr.mxu0 0.0
    %5383 = vmatpush1.xpose.msra.mxu0 0.0
    %5384 = vmatprep.subr.mxu0 0.0
    %5385 = vmatpush1.xpose.msra.mxu0 0.0
    %5386 = vmatprep.subr.mxu0 0.0
    %5387 = vmatpush1.xpose.msra.mxu0 0.0
    %5388 = vmatprep.subr.mxu0 0.0
    %5389 = vmatpush1.xpose.msra.mxu0 0.0
    %5390 = vmatprep.subr.mxu0 0.0
    %5391 = vmatpush1.xpose.msra.mxu0 0.0
    %5392 = vmatprep.subr.mxu0 0.0
    %5393 = vmatpush1.xpose.msra.mxu0 0.0
    %5394 = vmatprep.subr.mxu0 0.0
    %5395 = vmatpush1.xpose.msra.mxu0 0.0
    %5396 = vmatprep.subr.mxu0 0.0
    %5397 = vmatpush1.xpose.msra.mxu0 0.0
    %5398 = vmatprep.subr.mxu0 0.0
    %5399 = vmatpush1.xpose.msra.mxu0 0.0
    %5400 = vmatprep.subr.mxu0 0.0
    %5401 = vmatpush1.xpose.msra.mxu0 0.0
    %5402 = vmatprep.subr.mxu0 0.0
    %5403 = vmatpush1.xpose.msra.mxu0 0.0
    %5404 = vmatprep.subr.mxu0 0.0
    %5405 = vmatpush1.xpose.msra.mxu0 0.0
    %5406 = vmatprep.subr.mxu0 0.0
    %5407 = vmatpush1.xpose.msra.mxu0 0.0
    %5408 = vmatprep.subr.mxu0 0.0
    %5409 = vmatpush1.xpose.msra.mxu0 0.0
    %5410 = vmatprep.subr.mxu0 0.0
    %5411 = vmatpush1.xpose.msra.mxu0 0.0
    %5412 = vmatprep.subr.mxu0 0.0
    %5413 = vmatpush1.xpose.msra.mxu0 0.0
    %5414 = vmatprep.subr.mxu0 0.0
    %5415 = vmatpush1.xpose.msra.mxu0 0.0
    %5416 = vmatprep.subr.mxu0 0.0
    %5417 = vmatpush1.xpose.msra.mxu0 0.0
    %5418 = vmatprep.subr.mxu0 0.0
    %5419 = vmatpush1.xpose.msra.mxu0 0.0
    %5420 = vmatprep.subr.mxu0 0.0
    %5421 = vmatpush1.xpose.msra.mxu0 0.0
    %5422 = vmatprep.mubr.f32.mxu0 0.0
    %v5423 = vand.u32 %v4901, 4294901760
    %5424 = vmatmul.mubr.f32.gmra.mrb[0].mxu0 %v5423
    %v5425 = vpop.f32.mrb[0].mxu0
    %v5426 = vadd.f32 %v5345, %v5425
    %v5427 = vpop.f32.mrb[0].mxu0
    %5428 = vmatprep.mubr.f32.mxu0 0.0
    %v5429 = vand.u32 %v4902, 4294901760
    %5430 = vmatmul.mubr.f32.gmra.mrb[0].mxu0 %v5429
    %v5431 = vpop.f32.mrb[0].mxu0
    %v5432 = vadd.f32 %v5351, %v5431
    %v5433 = vpop.f32.mrb[0].mxu0
    %5434 = vdwg.mxu0
    %v5435 = vadd.f32 %v4315, %v5426
    %v5436 = vadd.f32 %v4316, %v5432
    %5437 = vst.msk [vmem:[#allocation7] sm:$0xff] %vm55, %v5435
    %5438 = vst.msk [vmem:[#allocation7 + $0x8] sm:$0xff] %vm55, %v5436
    // Predicated region
    $region18: #{tpu_custom_call.1} parent=1 // pred_check
      _
    $region19: #{tpu_custom_call.1} parent=1 // pred_check_branch
      %5440 = sbr.rel (0) target = $region21
    $region20: #{tpu_custom_call.1} parent=1 // pred_region
      %s5442 = ssub.s32 256, 256
      %5443 = vsyncadd [#allocation4], %s5442
      %s5444 = sshll.u32 [#allocation7], 4
      %s5445 = int_to_ptr.vmem [resolvable:$true] %s5444
      %5450 = dma.vmem_to_hbm [thread:$0]  %s5445, 256, %s2, [#allocation4], 128, 128, 8
    $region21: #{tpu_custom_call.1} parent=1 // pred_fallthru
      _
    // Predicated region
    $region22: #{tpu_custom_call.1} parent=1 // pred_check
      _
    $region23: #{tpu_custom_call.1} parent=1 // pred_check_branch
      %5452 = sbr.rel (0) target = $region25
    $region24: #{tpu_custom_call.1} parent=1 // pred_region
      %5453 = dma.done [#allocation4], 256
    $region25: #{tpu_custom_call.1} parent=1 // pred_fallthru
      _
    %5454 = vsyncpa [#allocation3], 1
    %5455 = vsyncpa [#allocation6], 1
    %5456 = vsyncpa [#allocation4], 1

</llo_original>
